<compile_context>
chip_gen: v7x
topology: tpu7x:2x2x1
jax: 0.10.0
libtpu: 0.0.40
codegen_flags: <defaults>
</compile_context>

<pallas_src>
import math

import jax
import jax.numpy as jnp
from jax import lax
from jax.experimental import pallas as pl
from jax.experimental.pallas import tpu as pltpu

VMEM_SPEC = pl.BlockSpec(memory_space=pltpu.MemorySpace.VMEM)

_BN_EPS_SCALE = 1.0 / math.sqrt(1.0 + 1e-5)   # eval-mode BN with var=1


# -----------------------------------------------------------------------------
# Fused Decoder kernel factory
# -----------------------------------------------------------------------------
def _make_decoder_kernel(n_att, with_attention):
    def kernel(*refs):
        (a_ref, b_ref, d_ref, e_ref,
         gamma_ref, beta_ref,
         w1_ref, b1_ref, w2_ref, b2_ref,
         wih_ref, whh_ref, bih_ref, bhh_ref,
         wout_ref, bout_ref, h0x_ref, h0y_ref) = refs[:18]
        pos = 18
        att_refs = refs[pos:pos + 2 * n_att]
        pos += 2 * n_att
        catw_ref, catb_ref = refs[pos], refs[pos + 1]
        pos += 2
        if with_attention:
            xs_ref, ys_ref = refs[pos], refs[pos + 1]
            pos += 2
        scores_ref, xh_ref, yh_ref = refs[pos], refs[pos + 1], refs[pos + 2]

        NX, F = a_ref.shape
        NY = d_ref.shape[0]
        C1 = w1_ref.shape[0]
        C2, H = h0x_ref.shape
        L1 = F - 1                      # after Conv1d(1, C1, 3) on width F+1
        L2 = F - 3                      # after Conv1d(C1, C2, 3)
        NT = NX + NY

        # ------------------ preProc (BN eval + per-sequence min-max) ---------
        bn_scale = gamma_ref[...] * _BN_EPS_SCALE            # (1, F)
        beta = beta_ref[...]

        def preproc(mat, vec):
            m = mat * bn_scale + beta                         # (n, F)
            vmin = jnp.min(vec, axis=0, keepdims=True)
            vmax = jnp.max(vec, axis=0, keepdims=True)
            v = (vec - vmin) / (vmax - vmin)                  # (n, 1)
            return jnp.concatenate([m, v], axis=1)            # (n, F+1)

        # Both sequences processed as one batch of NT "time steps" (hoisted).
        xc = jnp.concatenate([preproc(a_ref[...], b_ref[...]),
                              preproc(d_ref[...], e_ref[...])], axis=0)   # (NT, F+1)

        # ------------------ Conv1d(1 -> C1, k=3) + ReLU, channel-first -------
        w1 = w1_ref[...]                                      # (C1, 3)
        b1 = b1_ref[...]                                      # (C1, 1)
        h1 = (w1[:, 0:1][None, :, :] * xc[:, None, 0:L1]
              + w1[:, 1:2][None, :, :] * xc[:, None, 1:1 + L1]
              + w1[:, 2:3][None, :, :] * xc[:, None, 2:2 + L1]
              + b1[None, :, :])                               # (NT, C1, L1)
        h1 = jnp.maximum(h1, 0.0)

        # ------------------ Conv1d(C1 -> C2, k=3) + ReLU (broadcast FMA) -----
        w2 = w2_ref[...]                                      # (C2, 3*C1), k-major cols
        b2 = b2_ref[...]                                      # (C2, 1)
        acc = None
        for k in range(3):
            for c1 in range(C1):
                col = w2[:, k * C1 + c1:k * C1 + c1 + 1]      # (C2, 1)
                term = col[None, :, :] * h1[:, c1:c1 + 1, k:k + L2]   # (NT, C2, L2)
                acc = term if acc is None else acc + term
        h2 = jnp.maximum(acc + b2[None, :, :], 0.0)           # (NT, C2, L2)

        # ------------------ GRU input projection for ALL steps: one matmul ---
        gi2d = (jnp.dot(h2.reshape(NT * C2, L2), wih_ref[...],
                        preferred_element_type=jnp.float32)
                + bih_ref[...])                               # (NT*C2, 3H)

        # ------------------ GRU recurrence (X & Y stacked, fully unrolled) ---
        whh = whh_ref[...]                                    # (H, 3H)
        bhh = bhh_ref[...]                                    # (1, 3H)

        def gru_cell(h, gi):
            gh = jnp.dot(h, whh, preferred_element_type=jnp.float32) + bhh
            r = jax.nn.sigmoid(gi[:, 0:H] + gh[:, 0:H])
            z = jax.nn.sigmoid(gi[:, H:2 * H] + gh[:, H:2 * H])
            n = jnp.tanh(gi[:, 2 * H:3 * H] + r * gh[:, 2 * H:3 * H])
            return (1.0 - z) * n + z * h

        def gi_x(t):
            return gi2d[t * C2:(t + 1) * C2, :]

        def gi_y(t):
            return gi2d[(NX + t) * C2:(NX + t + 1) * C2, :]

        xs_rows, ys_rows = [], []
        h = jnp.concatenate([h0x_ref[...], h0y_ref[...]], axis=0)   # (2*C2, H)
        Tmin = min(NX, NY)
        for t in range(Tmin):                                 # shared steps: one matmul
            h = gru_cell(h, jnp.concatenate([gi_x(t), gi_y(t)], axis=0))
            xs_rows.append(h[0:C2, :])
            ys_rows.append(h[C2:2 * C2, :])
        h_x, h_y = h[0:C2, :], h[C2:2 * C2, :]
        for t in range(Tmin, NX):                             # tail (X longer)
            h_x = gru_cell(h_x, gi_x(t))
            xs_rows.append(h_x)
        for t in range(Tmin, NY):                             # tail (Y longer)
            h_y = gru_cell(h_y, gi_y(t))
            ys_rows.append(h_y)
        xh_ref[...] = h_x
        yh_ref[...] = h_y

        # ------------------ out Linear(H, 1) + ReLU, once after the loop -----
        wout = wout_ref[...]                                  # (1, H)
        bout = bout_ref[...]                                  # (1, 1)

        def project(rows):
            stack = jnp.concatenate([r[None, :, :] for r in rows], axis=0)  # (n, C2, H)
            return jnp.maximum(jnp.sum(stack * wout[None, :, :], axis=-1) + bout, 0.0)

        X_core = project(xs_rows)                             # (NX, C2)
        Y_core = project(ys_rows)                             # (NY, C2)

        # ------------------ Attention (shared layers, stacked rows) ----------
        if with_attention:
            def attention(x0, x1):
                n0 = x0.shape[0]
                st = jnp.concatenate([x0, x1], axis=0)
                for i in range(n_att):
                    w = att_refs[2 * i][...]                  # (din, dout) = W^T
                    bb = att_refs[2 * i + 1][...]             # (1, dout)
                    st = jnp.maximum(
                        jnp.dot(st, w, preferred_element_type=jnp.float32) + bb, 0.0)
                x0p, x1p = st[0:n0, :], st[n0:, :]
                # tanh(mean(x0p @ x1p.T, axis=1)) == tanh(x0p @ mean(x1p, axis=0))
                x1m = jnp.mean(x1p, axis=0, keepdims=True)    # (1, C2)
                m = jnp.tanh(lax.dot_general(
                    x0p, x1m, (((1,), (1,)), ((), ())),
                    preferred_element_type=jnp.float32))      # (n0, 1)
                # F.normalize(p=2, dim=1) on (n0, 1) rows
                return m / jnp.maximum(jnp.abs(m), 1e-12)

            X_aw = attention(X_core, xs_ref[...])
            Y_aw = attention(Y_core, ys_ref[...])
        else:
            X_aw = jnp.zeros((NX, 1), jnp.float32)
            Y_aw = jnp.zeros((NY, 1), jnp.float32)

        # ------------------ cat Linear + ReLU, score via mean trick ----------
        catw = catw_ref[...]                                  # (C2+1, 64) = W^T
        catb = catb_ref[...]                                  # (1, 64)
        wc = catw[0:C2, :]
        wa = catw[C2:C2 + 1, :]
        X_cat = jnp.maximum(
            jnp.dot(X_core, wc, preferred_element_type=jnp.float32)
            + X_aw * wa + catb, 0.0)                          # (NX, 64)
        Y_cat = jnp.maximum(
            jnp.dot(Y_core, wc, preferred_element_type=jnp.float32)
            + Y_aw * wa + catb, 0.0)                          # (NY, 64)
        # mean(X_cat @ Y_cat.T, axis=0) == mean(X_cat, axis=0) @ Y_cat.T
        xmean = jnp.mean(X_cat, axis=0, keepdims=True)        # (1, 64)
        scores_ref[...] = lax.dot_general(
            xmean, Y_cat, (((1,), (1,)), ((), ())),
            preferred_element_type=jnp.float32)               # (1, NY)

    return kernel


# -----------------------------------------------------------------------------
# Wrapper: single pallas_call for the whole Decoder.forward
# -----------------------------------------------------------------------------
def decoder_forward(params, s, XYs, hidden):
    a, b, c, d, e = s                      # c is unused by Decoder.forward compute path
    Xs, Ys = XYs
    xh, yh = hidden                        # each (1, C2, H)
    with_attention = not (Xs is None and Ys is None)

    NX = a.shape[0]
    NY = d.shape[0]
    C2, H = xh.shape[1], xh.shape[2]

    args = [jnp.asarray(a, jnp.float32),
            jnp.asarray(b, jnp.float32).reshape(NX, 1),
            jnp.asarray(d, jnp.float32),
            jnp.asarray(e, jnp.float32).reshape(NY, 1),
            params['bn_gamma'], params['bn_beta'],
            params['conv1_w'], params['conv1_b'],
            params['conv2_w'], params['conv2_b'],
            params['gru_wih_t'], params['gru_whh_t'],
            params['gru_bih'], params['gru_bhh'],
            params['out_w'], params['out_b'],
            jnp.squeeze(xh, axis=0), jnp.squeeze(yh, axis=0)]
    for w_t, bb in params['att']:
        args.extend([w_t, bb])
    args.extend([params['cat_w_t'], params['cat_b']])
    if with_attention:
        args.extend([jnp.asarray(Xs, jnp.float32), jnp.asarray(Ys, jnp.float32)])

    kernel = _make_decoder_kernel(len(params['att']), with_attention)
    out_shape = (jax.ShapeDtypeStruct((1, NY), jnp.float32),
                 jax.ShapeDtypeStruct((C2, H), jnp.float32),
                 jax.ShapeDtypeStruct((C2, H), jnp.float32))
    scores, xh_new, yh_new = pl.pallas_call(
        kernel,
        out_shape=out_shape,
        in_specs=[VMEM_SPEC] * len(args),
        out_specs=(VMEM_SPEC, VMEM_SPEC, VMEM_SPEC),
    )(*args)
    return scores[0], xh_new[None, :, :], yh_new[None, :, :]


# -----------------------------------------------------------------------------
# Deterministic parameter initialization (shapes follow the PyTorch __init__)
# -----------------------------------------------------------------------------
def init_params(key, num_inputs, cnn_dims, rnn_hidden):
    assert len(cnn_dims) == 2, "core kernel is written for two Conv1d layers"
    F = num_inputs
    C1, C2 = cnn_dims
    H = rnn_hidden
    L2 = F + 1 - 2 * len(cnn_dims)          # GRU input size

    def nrm(k, shape, scale=0.2):
        return scale * jax.random.normal(k, shape, dtype=jnp.float32)

    ks = jax.random.split(key, 16)
    p = {}
    # preProc: BatchNorm1d(num_inputs), eval mode (running mean=0, var=1)
    p['bn_gamma'] = jnp.ones((1, F), jnp.float32)
    p['bn_beta'] = jnp.zeros((1, F), jnp.float32)
    # coreAlgo: Conv1d(1, C1, 3), Conv1d(C1, C2, 3)
    p['conv1_w'] = nrm(ks[0], (C1, 1, 3)).reshape(C1, 3)
    p['conv1_b'] = nrm(ks[1], (C1, 1))
    conv2_w = nrm(ks[2], (C2, C1, 3))
    # flatten (k-major, c1-minor) to match the kernel's accumulation order
    p['conv2_w'] = jnp.transpose(conv2_w, (0, 2, 1)).reshape(C2, 3 * C1)
    p['conv2_b'] = nrm(ks[3], (C2, 1))
    # GRU(L2, H), PyTorch gate order [r, z, n]
    p['gru_wih_t'] = nrm(ks[4], (3 * H, L2)).T          # (L2, 3H)
    p['gru_whh_t'] = nrm(ks[5], (3 * H, H)).T           # (H, 3H)
    p['gru_bih'] = nrm(ks[6], (1, 3 * H))
    p['gru_bhh'] = nrm(ks[7], (1, 3 * H))
    # out: Linear(H, 1)
    p['out_w'] = nrm(ks[8], (1, H))
    p['out_b'] = nrm(ks[9], (1, 1))
    # Attention fcs: linears = [C2] + cnn_dims
    linears = [C2] + list(cnn_dims)
    akeys = jax.random.split(ks[10], 2 * len(cnn_dims))
    att = []
    for i, (din, dout) in enumerate(zip(linears[:-1], linears[1:])):
        att.append((nrm(akeys[2 * i], (dout, din)).T,    # (din, dout)
                    nrm(akeys[2 * i + 1], (1, dout))))
    p['att'] = att
    # cat: Linear(C2 + 1, 64)
    p['cat_w_t'] = nrm(ks[11], (64, C2 + 1)).T           # (C2+1, 64)
    p['cat_b'] = nrm(ks[12], (1, 64))
    return p


if __name__ == "__main__":
    num_inputs, cnn_dims, rnn_hidden, dropout = 8, [4, 8], 16, 0.1
    C2, H = cnn_dims[-1], rnn_hidden

    key = jax.random.PRNGKey(0)
    kp, ka, kb, kd, ke, kxs, kys, kxh, kyh = jax.random.split(key, 9)
    params = init_params(kp, num_inputs, cnn_dims, rnn_hidden)

    NX, NY = 8, 6
    a = jax.random.normal(ka, (NX, num_inputs), dtype=jnp.float32)
    b = jax.random.uniform(kb, (NX,), dtype=jnp.float32)
    c = jnp.arange(NX, dtype=jnp.int32)
    d = jax.random.normal(kd, (NY, num_inputs), dtype=jnp.float32)
    e = jax.random.uniform(ke, (NY,), dtype=jnp.float32)
    s = (a, b, c, d, e)

    Xs = jax.random.normal(kxs, (5, C2), dtype=jnp.float32)
    Ys = jax.random.normal(kys, (7, C2), dtype=jnp.float32)
    xh = 0.1 * jax.random.normal(kxh, (1, C2, H), dtype=jnp.float32)
    yh = 0.1 * jax.random.normal(kyh, (1, C2, H), dtype=jnp.float32)

    action_scores, xh_new, yh_new = decoder_forward(params, s, (Xs, Ys), (xh, yh))
    jax.block_until_ready((action_scores, xh_new, yh_new))

    assert action_scores.shape == (NY,)
    assert xh_new.shape == (1, C2, H) and yh_new.shape == (1, C2, H)
    assert bool(jnp.all(jnp.isfinite(action_scores)))
    print("KERNEL_OK")
</pallas_src>

<mosaic_0001>
module attributes {stable_mosaic.version = 11 : i64} {
  func.func @kernel(%arg0: memref<8x8xf32, #tpu.memory_space<vmem>>, %arg1: memref<8x1xf32, #tpu.memory_space<vmem>>, %arg2: memref<6x8xf32, #tpu.memory_space<vmem>>, %arg3: memref<6x1xf32, #tpu.memory_space<vmem>>, %arg4: memref<1x8xf32, #tpu.memory_space<vmem>>, %arg5: memref<1x8xf32, #tpu.memory_space<vmem>>, %arg6: memref<4x3xf32, #tpu.memory_space<vmem>>, %arg7: memref<4x1xf32, #tpu.memory_space<vmem>>, %arg8: memref<8x12xf32, #tpu.memory_space<vmem>>, %arg9: memref<8x1xf32, #tpu.memory_space<vmem>>, %arg10: memref<5x48xf32, #tpu.memory_space<vmem>>, %arg11: memref<16x48xf32, #tpu.memory_space<vmem>>, %arg12: memref<1x48xf32, #tpu.memory_space<vmem>>, %arg13: memref<1x48xf32, #tpu.memory_space<vmem>>, %arg14: memref<1x16xf32, #tpu.memory_space<vmem>>, %arg15: memref<1x1xf32, #tpu.memory_space<vmem>>, %arg16: memref<8x16xf32, #tpu.memory_space<vmem>>, %arg17: memref<8x16xf32, #tpu.memory_space<vmem>>, %arg18: memref<8x4xf32, #tpu.memory_space<vmem>>, %arg19: memref<1x4xf32, #tpu.memory_space<vmem>>, %arg20: memref<4x8xf32, #tpu.memory_space<vmem>>, %arg21: memref<1x8xf32, #tpu.memory_space<vmem>>, %arg22: memref<9x64xf32, #tpu.memory_space<vmem>>, %arg23: memref<1x64xf32, #tpu.memory_space<vmem>>, %arg24: memref<5x8xf32, #tpu.memory_space<vmem>>, %arg25: memref<7x8xf32, #tpu.memory_space<vmem>>, %arg26: memref<1x6xf32, #tpu.memory_space<vmem>>, %arg27: memref<8x16xf32, #tpu.memory_space<vmem>>, %arg28: memref<8x16xf32, #tpu.memory_space<vmem>>) attributes {dimension_semantics = [], scalar_prefetch = 0 : i64, scratch_operands = 0 : i64, tpu.core_type = #tpu.core_type<tc>} {
    %c0 = arith.constant 0 : index
    %c0_0 = arith.constant 0 : index
    %0 = vector.load %arg4[%c0, %c0_0] : memref<1x8xf32, #tpu.memory_space<vmem>>, vector<1x8xf32>
    %cst = arith.constant 0.999994993 : f32
    %1 = vector.broadcast %cst : f32 to vector<1x8xf32>
    %2 = arith.mulf %0, %1 : vector<1x8xf32>
    %c0_1 = arith.constant 0 : index
    %c0_2 = arith.constant 0 : index
    %3 = vector.load %arg5[%c0_1, %c0_2] : memref<1x8xf32, #tpu.memory_space<vmem>>, vector<1x8xf32>
    %c0_3 = arith.constant 0 : index
    %c0_4 = arith.constant 0 : index
    %4 = vector.load %arg0[%c0_3, %c0_4] : memref<8x8xf32, #tpu.memory_space<vmem>>, vector<8x8xf32>
    %c0_5 = arith.constant 0 : index
    %c0_6 = arith.constant 0 : index
    %5 = vector.load %arg1[%c0_5, %c0_6] : memref<8x1xf32, #tpu.memory_space<vmem>>, vector<8x1xf32>
    %6 = vector.broadcast %2 : vector<1x8xf32> to vector<8x8xf32>
    %7 = arith.mulf %4, %6 : vector<8x8xf32>
    %8 = vector.broadcast %3 : vector<1x8xf32> to vector<8x8xf32>
    %9 = arith.addf %7, %8 : vector<8x8xf32>
    %cst_7 = arith.constant dense<0x7F800000> : vector<1xf32>
    %10 = vector.multi_reduction <minimumf>, %5, %cst_7 [0] : vector<8x1xf32> to vector<1xf32>
    %11 = vector.shape_cast %10 : vector<1xf32> to vector<1x1xf32>
    %cst_8 = arith.constant dense<0xFF800000> : vector<1xf32>
    %12 = vector.multi_reduction <maximumf>, %5, %cst_8 [0] : vector<8x1xf32> to vector<1xf32>
    %13 = vector.shape_cast %12 : vector<1xf32> to vector<1x1xf32>
    %14 = vector.broadcast %11 : vector<1x1xf32> to vector<8x1xf32>
    %15 = arith.subf %5, %14 : vector<8x1xf32>
    %16 = arith.subf %13, %11 : vector<1x1xf32>
    %17 = vector.broadcast %16 : vector<1x1xf32> to vector<8x1xf32>
    %18 = arith.divf %15, %17 : vector<8x1xf32>
    %19 = tpu.concatenate %9, %18 in 1 : vector<8x8xf32>, vector<8x1xf32> -> vector<8x9xf32>
    %c0_9 = arith.constant 0 : index
    %c0_10 = arith.constant 0 : index
    %20 = vector.load %arg2[%c0_9, %c0_10] : memref<6x8xf32, #tpu.memory_space<vmem>>, vector<6x8xf32>
    %c0_11 = arith.constant 0 : index
    %c0_12 = arith.constant 0 : index
    %21 = vector.load %arg3[%c0_11, %c0_12] : memref<6x1xf32, #tpu.memory_space<vmem>>, vector<6x1xf32>
    %22 = vector.broadcast %2 : vector<1x8xf32> to vector<6x8xf32>
    %23 = arith.mulf %20, %22 : vector<6x8xf32>
    %24 = vector.broadcast %3 : vector<1x8xf32> to vector<6x8xf32>
    %25 = arith.addf %23, %24 : vector<6x8xf32>
    %cst_13 = arith.constant dense<0x7F800000> : vector<1xf32>
    %26 = vector.multi_reduction <minimumf>, %21, %cst_13 [0] : vector<6x1xf32> to vector<1xf32>
    %27 = vector.shape_cast %26 : vector<1xf32> to vector<1x1xf32>
    %cst_14 = arith.constant dense<0xFF800000> : vector<1xf32>
    %28 = vector.multi_reduction <maximumf>, %21, %cst_14 [0] : vector<6x1xf32> to vector<1xf32>
    %29 = vector.shape_cast %28 : vector<1xf32> to vector<1x1xf32>
    %30 = vector.broadcast %27 : vector<1x1xf32> to vector<6x1xf32>
    %31 = arith.subf %21, %30 : vector<6x1xf32>
    %32 = arith.subf %29, %27 : vector<1x1xf32>
    %33 = vector.broadcast %32 : vector<1x1xf32> to vector<6x1xf32>
    %34 = arith.divf %31, %33 : vector<6x1xf32>
    %35 = tpu.concatenate %25, %34 in 1 : vector<6x8xf32>, vector<6x1xf32> -> vector<6x9xf32>
    %36 = tpu.concatenate %19, %35 in 0 : vector<8x9xf32>, vector<6x9xf32> -> vector<14x9xf32>
    %c0_15 = arith.constant 0 : index
    %c0_16 = arith.constant 0 : index
    %37 = vector.load %arg6[%c0_15, %c0_16] : memref<4x3xf32, #tpu.memory_space<vmem>>, vector<4x3xf32>
    %c0_17 = arith.constant 0 : index
    %c0_18 = arith.constant 0 : index
    %38 = vector.load %arg7[%c0_17, %c0_18] : memref<4x1xf32, #tpu.memory_space<vmem>>, vector<4x1xf32>
    %39 = vector.extract_strided_slice %37 {offsets = [0, 0], sizes = [4, 1], strides = [1, 1]} : vector<4x3xf32> to vector<4x1xf32>
    %40 = vector.shape_cast %39 : vector<4x1xf32> to vector<1x4x1xf32>
    %41 = vector.extract_strided_slice %36 {offsets = [0, 0], sizes = [14, 7], strides = [1, 1]} : vector<14x9xf32> to vector<14x7xf32>
    %42 = vector.shape_cast %41 : vector<14x7xf32> to vector<14x1x7xf32>
    %43 = vector.broadcast %40 : vector<1x4x1xf32> to vector<14x4x7xf32>
    %44 = vector.broadcast %42 : vector<14x1x7xf32> to vector<14x4x7xf32>
    %45 = arith.mulf %43, %44 : vector<14x4x7xf32>
    %46 = vector.extract_strided_slice %37 {offsets = [0, 1], sizes = [4, 1], strides = [1, 1]} : vector<4x3xf32> to vector<4x1xf32>
    %47 = vector.shape_cast %46 : vector<4x1xf32> to vector<1x4x1xf32>
    %48 = vector.extract_strided_slice %36 {offsets = [0, 1], sizes = [14, 7], strides = [1, 1]} : vector<14x9xf32> to vector<14x7xf32>
    %49 = vector.shape_cast %48 : vector<14x7xf32> to vector<14x1x7xf32>
    %50 = vector.broadcast %47 : vector<1x4x1xf32> to vector<14x4x7xf32>
    %51 = vector.broadcast %49 : vector<14x1x7xf32> to vector<14x4x7xf32>
    %52 = arith.mulf %50, %51 : vector<14x4x7xf32>
    %53 = arith.addf %45, %52 : vector<14x4x7xf32>
    %54 = vector.extract_strided_slice %37 {offsets = [0, 2], sizes = [4, 1], strides = [1, 1]} : vector<4x3xf32> to vector<4x1xf32>
    %55 = vector.shape_cast %54 : vector<4x1xf32> to vector<1x4x1xf32>
    %56 = vector.extract_strided_slice %36 {offsets = [0, 2], sizes = [14, 7], strides = [1, 1]} : vector<14x9xf32> to vector<14x7xf32>
    %57 = vector.shape_cast %56 : vector<14x7xf32> to vector<14x1x7xf32>
    %58 = vector.broadcast %55 : vector<1x4x1xf32> to vector<14x4x7xf32>
    %59 = vector.broadcast %57 : vector<14x1x7xf32> to vector<14x4x7xf32>
    %60 = arith.mulf %58, %59 : vector<14x4x7xf32>
    %61 = arith.addf %53, %60 : vector<14x4x7xf32>
    %62 = vector.shape_cast %38 : vector<4x1xf32> to vector<1x4x1xf32>
    %63 = vector.broadcast %62 : vector<1x4x1xf32> to vector<14x4x7xf32>
    %64 = arith.addf %61, %63 : vector<14x4x7xf32>
    %cst_19 = arith.constant 0.000000e+00 : f32
    %65 = vector.broadcast %cst_19 : f32 to vector<14x4x7xf32>
    %66 = arith.maximumf %64, %65 : vector<14x4x7xf32>
    %c0_20 = arith.constant 0 : index
    %c0_21 = arith.constant 0 : index
    %67 = vector.load %arg8[%c0_20, %c0_21] : memref<8x12xf32, #tpu.memory_space<vmem>>, vector<8x12xf32>
    %c0_22 = arith.constant 0 : index
    %c0_23 = arith.constant 0 : index
    %68 = vector.load %arg9[%c0_22, %c0_23] : memref<8x1xf32, #tpu.memory_space<vmem>>, vector<8x1xf32>
    %69 = vector.extract_strided_slice %67 {offsets = [0, 0], sizes = [8, 1], strides = [1, 1]} : vector<8x12xf32> to vector<8x1xf32>
    %70 = vector.shape_cast %69 : vector<8x1xf32> to vector<1x8x1xf32>
    %71 = vector.extract_strided_slice %66 {offsets = [0, 0, 0], sizes = [14, 1, 5], strides = [1, 1, 1]} : vector<14x4x7xf32> to vector<14x1x5xf32>
    %72 = vector.broadcast %70 : vector<1x8x1xf32> to vector<14x8x5xf32>
    %73 = vector.broadcast %71 : vector<14x1x5xf32> to vector<14x8x5xf32>
    %74 = arith.mulf %72, %73 : vector<14x8x5xf32>
    %75 = vector.extract_strided_slice %67 {offsets = [0, 1], sizes = [8, 1], strides = [1, 1]} : vector<8x12xf32> to vector<8x1xf32>
    %76 = vector.shape_cast %75 : vector<8x1xf32> to vector<1x8x1xf32>
    %77 = vector.extract_strided_slice %66 {offsets = [0, 1, 0], sizes = [14, 1, 5], strides = [1, 1, 1]} : vector<14x4x7xf32> to vector<14x1x5xf32>
    %78 = vector.broadcast %76 : vector<1x8x1xf32> to vector<14x8x5xf32>
    %79 = vector.broadcast %77 : vector<14x1x5xf32> to vector<14x8x5xf32>
    %80 = arith.mulf %78, %79 : vector<14x8x5xf32>
    %81 = arith.addf %74, %80 : vector<14x8x5xf32>
    %82 = vector.extract_strided_slice %67 {offsets = [0, 2], sizes = [8, 1], strides = [1, 1]} : vector<8x12xf32> to vector<8x1xf32>
    %83 = vector.shape_cast %82 : vector<8x1xf32> to vector<1x8x1xf32>
    %84 = vector.extract_strided_slice %66 {offsets = [0, 2, 0], sizes = [14, 1, 5], strides = [1, 1, 1]} : vector<14x4x7xf32> to vector<14x1x5xf32>
    %85 = vector.broadcast %83 : vector<1x8x1xf32> to vector<14x8x5xf32>
    %86 = vector.broadcast %84 : vector<14x1x5xf32> to vector<14x8x5xf32>
    %87 = arith.mulf %85, %86 : vector<14x8x5xf32>
    %88 = arith.addf %81, %87 : vector<14x8x5xf32>
    %89 = vector.extract_strided_slice %67 {offsets = [0, 3], sizes = [8, 1], strides = [1, 1]} : vector<8x12xf32> to vector<8x1xf32>
    %90 = vector.shape_cast %89 : vector<8x1xf32> to vector<1x8x1xf32>
    %91 = vector.extract_strided_slice %66 {offsets = [0, 3, 0], sizes = [14, 1, 5], strides = [1, 1, 1]} : vector<14x4x7xf32> to vector<14x1x5xf32>
    %92 = vector.broadcast %90 : vector<1x8x1xf32> to vector<14x8x5xf32>
    %93 = vector.broadcast %91 : vector<14x1x5xf32> to vector<14x8x5xf32>
    %94 = arith.mulf %92, %93 : vector<14x8x5xf32>
    %95 = arith.addf %88, %94 : vector<14x8x5xf32>
    %96 = vector.extract_strided_slice %67 {offsets = [0, 4], sizes = [8, 1], strides = [1, 1]} : vector<8x12xf32> to vector<8x1xf32>
    %97 = vector.shape_cast %96 : vector<8x1xf32> to vector<1x8x1xf32>
    %98 = vector.extract_strided_slice %66 {offsets = [0, 0, 1], sizes = [14, 1, 5], strides = [1, 1, 1]} : vector<14x4x7xf32> to vector<14x1x5xf32>
    %99 = vector.broadcast %97 : vector<1x8x1xf32> to vector<14x8x5xf32>
    %100 = vector.broadcast %98 : vector<14x1x5xf32> to vector<14x8x5xf32>
    %101 = arith.mulf %99, %100 : vector<14x8x5xf32>
    %102 = arith.addf %95, %101 : vector<14x8x5xf32>
    %103 = vector.extract_strided_slice %67 {offsets = [0, 5], sizes = [8, 1], strides = [1, 1]} : vector<8x12xf32> to vector<8x1xf32>
    %104 = vector.shape_cast %103 : vector<8x1xf32> to vector<1x8x1xf32>
    %105 = vector.extract_strided_slice %66 {offsets = [0, 1, 1], sizes = [14, 1, 5], strides = [1, 1, 1]} : vector<14x4x7xf32> to vector<14x1x5xf32>
    %106 = vector.broadcast %104 : vector<1x8x1xf32> to vector<14x8x5xf32>
    %107 = vector.broadcast %105 : vector<14x1x5xf32> to vector<14x8x5xf32>
    %108 = arith.mulf %106, %107 : vector<14x8x5xf32>
    %109 = arith.addf %102, %108 : vector<14x8x5xf32>
    %110 = vector.extract_strided_slice %67 {offsets = [0, 6], sizes = [8, 1], strides = [1, 1]} : vector<8x12xf32> to vector<8x1xf32>
    %111 = vector.shape_cast %110 : vector<8x1xf32> to vector<1x8x1xf32>
    %112 = vector.extract_strided_slice %66 {offsets = [0, 2, 1], sizes = [14, 1, 5], strides = [1, 1, 1]} : vector<14x4x7xf32> to vector<14x1x5xf32>
    %113 = vector.broadcast %111 : vector<1x8x1xf32> to vector<14x8x5xf32>
    %114 = vector.broadcast %112 : vector<14x1x5xf32> to vector<14x8x5xf32>
    %115 = arith.mulf %113, %114 : vector<14x8x5xf32>
    %116 = arith.addf %109, %115 : vector<14x8x5xf32>
    %117 = vector.extract_strided_slice %67 {offsets = [0, 7], sizes = [8, 1], strides = [1, 1]} : vector<8x12xf32> to vector<8x1xf32>
    %118 = vector.shape_cast %117 : vector<8x1xf32> to vector<1x8x1xf32>
    %119 = vector.extract_strided_slice %66 {offsets = [0, 3, 1], sizes = [14, 1, 5], strides = [1, 1, 1]} : vector<14x4x7xf32> to vector<14x1x5xf32>
    %120 = vector.broadcast %118 : vector<1x8x1xf32> to vector<14x8x5xf32>
    %121 = vector.broadcast %119 : vector<14x1x5xf32> to vector<14x8x5xf32>
    %122 = arith.mulf %120, %121 : vector<14x8x5xf32>
    %123 = arith.addf %116, %122 : vector<14x8x5xf32>
    %124 = vector.extract_strided_slice %67 {offsets = [0, 8], sizes = [8, 1], strides = [1, 1]} : vector<8x12xf32> to vector<8x1xf32>
    %125 = vector.shape_cast %124 : vector<8x1xf32> to vector<1x8x1xf32>
    %126 = vector.extract_strided_slice %66 {offsets = [0, 0, 2], sizes = [14, 1, 5], strides = [1, 1, 1]} : vector<14x4x7xf32> to vector<14x1x5xf32>
    %127 = vector.broadcast %125 : vector<1x8x1xf32> to vector<14x8x5xf32>
    %128 = vector.broadcast %126 : vector<14x1x5xf32> to vector<14x8x5xf32>
    %129 = arith.mulf %127, %128 : vector<14x8x5xf32>
    %130 = arith.addf %123, %129 : vector<14x8x5xf32>
    %131 = vector.extract_strided_slice %67 {offsets = [0, 9], sizes = [8, 1], strides = [1, 1]} : vector<8x12xf32> to vector<8x1xf32>
    %132 = vector.shape_cast %131 : vector<8x1xf32> to vector<1x8x1xf32>
    %133 = vector.extract_strided_slice %66 {offsets = [0, 1, 2], sizes = [14, 1, 5], strides = [1, 1, 1]} : vector<14x4x7xf32> to vector<14x1x5xf32>
    %134 = vector.broadcast %132 : vector<1x8x1xf32> to vector<14x8x5xf32>
    %135 = vector.broadcast %133 : vector<14x1x5xf32> to vector<14x8x5xf32>
    %136 = arith.mulf %134, %135 : vector<14x8x5xf32>
    %137 = arith.addf %130, %136 : vector<14x8x5xf32>
    %138 = vector.extract_strided_slice %67 {offsets = [0, 10], sizes = [8, 1], strides = [1, 1]} : vector<8x12xf32> to vector<8x1xf32>
    %139 = vector.shape_cast %138 : vector<8x1xf32> to vector<1x8x1xf32>
    %140 = vector.extract_strided_slice %66 {offsets = [0, 2, 2], sizes = [14, 1, 5], strides = [1, 1, 1]} : vector<14x4x7xf32> to vector<14x1x5xf32>
    %141 = vector.broadcast %139 : vector<1x8x1xf32> to vector<14x8x5xf32>
    %142 = vector.broadcast %140 : vector<14x1x5xf32> to vector<14x8x5xf32>
    %143 = arith.mulf %141, %142 : vector<14x8x5xf32>
    %144 = arith.addf %137, %143 : vector<14x8x5xf32>
    %145 = vector.extract_strided_slice %67 {offsets = [0, 11], sizes = [8, 1], strides = [1, 1]} : vector<8x12xf32> to vector<8x1xf32>
    %146 = vector.shape_cast %145 : vector<8x1xf32> to vector<1x8x1xf32>
    %147 = vector.extract_strided_slice %66 {offsets = [0, 3, 2], sizes = [14, 1, 5], strides = [1, 1, 1]} : vector<14x4x7xf32> to vector<14x1x5xf32>
    %148 = vector.broadcast %146 : vector<1x8x1xf32> to vector<14x8x5xf32>
    %149 = vector.broadcast %147 : vector<14x1x5xf32> to vector<14x8x5xf32>
    %150 = arith.mulf %148, %149 : vector<14x8x5xf32>
    %151 = arith.addf %144, %150 : vector<14x8x5xf32>
    %152 = vector.shape_cast %68 : vector<8x1xf32> to vector<1x8x1xf32>
    %153 = vector.broadcast %152 : vector<1x8x1xf32> to vector<14x8x5xf32>
    %154 = arith.addf %151, %153 : vector<14x8x5xf32>
    %cst_24 = arith.constant 0.000000e+00 : f32
    %155 = vector.broadcast %cst_24 : f32 to vector<14x8x5xf32>
    %156 = arith.maximumf %154, %155 : vector<14x8x5xf32>
    %157 = vector.shape_cast %156 : vector<14x8x5xf32> to vector<112x5xf32>
    %c0_25 = arith.constant 0 : index
    %c0_26 = arith.constant 0 : index
    %158 = vector.load %arg10[%c0_25, %c0_26] : memref<5x48xf32, #tpu.memory_space<vmem>>, vector<5x48xf32>
    %cst_27 = arith.constant dense<0.000000e+00> : vector<112x48xf32>
    %159 = tpu.matmul %157, %158, %cst_27 {dimension_numbers = #tpu.dot_dimension_numbers<[1], [0], [0], [1], [0, 0, 1, 1], [], []>} : vector<112x5xf32>, vector<5x48xf32>, vector<112x48xf32> -> vector<112x48xf32>
    %c0_28 = arith.constant 0 : index
    %c0_29 = arith.constant 0 : index
    %160 = vector.load %arg12[%c0_28, %c0_29] : memref<1x48xf32, #tpu.memory_space<vmem>>, vector<1x48xf32>
    %161 = vector.broadcast %160 : vector<1x48xf32> to vector<112x48xf32>
    %162 = arith.addf %159, %161 : vector<112x48xf32>
    %c0_30 = arith.constant 0 : index
    %c0_31 = arith.constant 0 : index
    %163 = vector.load %arg11[%c0_30, %c0_31] : memref<16x48xf32, #tpu.memory_space<vmem>>, vector<16x48xf32>
    %c0_32 = arith.constant 0 : index
    %c0_33 = arith.constant 0 : index
    %164 = vector.load %arg13[%c0_32, %c0_33] : memref<1x48xf32, #tpu.memory_space<vmem>>, vector<1x48xf32>
    %c0_34 = arith.constant 0 : index
    %c0_35 = arith.constant 0 : index
    %165 = vector.load %arg16[%c0_34, %c0_35] : memref<8x16xf32, #tpu.memory_space<vmem>>, vector<8x16xf32>
    %c0_36 = arith.constant 0 : index
    %c0_37 = arith.constant 0 : index
    %166 = vector.load %arg17[%c0_36, %c0_37] : memref<8x16xf32, #tpu.memory_space<vmem>>, vector<8x16xf32>
    %167 = tpu.concatenate %165, %166 in 0 : vector<8x16xf32>, vector<8x16xf32> -> vector<16x16xf32>
    %168 = vector.extract_strided_slice %162 {offsets = [0, 0], sizes = [8, 48], strides = [1, 1]} : vector<112x48xf32> to vector<8x48xf32>
    %169 = vector.extract_strided_slice %162 {offsets = [64, 0], sizes = [8, 48], strides = [1, 1]} : vector<112x48xf32> to vector<8x48xf32>
    %170 = tpu.concatenate %168, %169 in 0 : vector<8x48xf32>, vector<8x48xf32> -> vector<16x48xf32>
    %cst_38 = arith.constant dense<0.000000e+00> : vector<16x48xf32>
    %171 = tpu.matmul %167, %163, %cst_38 {dimension_numbers = #tpu.dot_dimension_numbers<[1], [0], [0], [1], [0, 0, 1, 1], [], []>} : vector<16x16xf32>, vector<16x48xf32>, vector<16x48xf32> -> vector<16x48xf32>
    %172 = vector.broadcast %164 : vector<1x48xf32> to vector<16x48xf32>
    %173 = arith.addf %171, %172 : vector<16x48xf32>
    %174 = vector.extract_strided_slice %170 {offsets = [0, 0], sizes = [16, 16], strides = [1, 1]} : vector<16x48xf32> to vector<16x16xf32>
    %175 = vector.extract_strided_slice %173 {offsets = [0, 0], sizes = [16, 16], strides = [1, 1]} : vector<16x48xf32> to vector<16x16xf32>
    %176 = arith.addf %174, %175 : vector<16x16xf32>
    %177 = arith.negf %176 : vector<16x16xf32>
    %178 = math.exp %177 : vector<16x16xf32>
    %cst_39 = arith.constant 1.000000e+00 : f32
    %179 = vector.broadcast %cst_39 : f32 to vector<16x16xf32>
    %180 = arith.addf %179, %178 : vector<16x16xf32>
    %181 = arith.divf %179, %180 : vector<16x16xf32>
    %182 = vector.extract_strided_slice %170 {offsets = [0, 16], sizes = [16, 16], strides = [1, 1]} : vector<16x48xf32> to vector<16x16xf32>
    %183 = vector.extract_strided_slice %173 {offsets = [0, 16], sizes = [16, 16], strides = [1, 1]} : vector<16x48xf32> to vector<16x16xf32>
    %184 = arith.addf %182, %183 : vector<16x16xf32>
    %185 = arith.negf %184 : vector<16x16xf32>
    %186 = math.exp %185 : vector<16x16xf32>
    %cst_40 = arith.constant 1.000000e+00 : f32
    %187 = vector.broadcast %cst_40 : f32 to vector<16x16xf32>
    %188 = arith.addf %187, %186 : vector<16x16xf32>
    %189 = arith.divf %187, %188 : vector<16x16xf32>
    %190 = vector.extract_strided_slice %170 {offsets = [0, 32], sizes = [16, 16], strides = [1, 1]} : vector<16x48xf32> to vector<16x16xf32>
    %191 = vector.extract_strided_slice %173 {offsets = [0, 32], sizes = [16, 16], strides = [1, 1]} : vector<16x48xf32> to vector<16x16xf32>
    %192 = arith.mulf %181, %191 : vector<16x16xf32>
    %193 = arith.addf %190, %192 : vector<16x16xf32>
    %194 = math.tanh %193 : vector<16x16xf32>
    %cst_41 = arith.constant 1.000000e+00 : f32
    %195 = vector.broadcast %cst_41 : f32 to vector<16x16xf32>
    %196 = arith.subf %195, %189 : vector<16x16xf32>
    %197 = arith.mulf %196, %194 : vector<16x16xf32>
    %198 = arith.mulf %189, %167 : vector<16x16xf32>
    %199 = arith.addf %197, %198 : vector<16x16xf32>
    %200 = vector.extract_strided_slice %199 {offsets = [0, 0], sizes = [8, 16], strides = [1, 1]} : vector<16x16xf32> to vector<8x16xf32>
    %201 = vector.extract_strided_slice %199 {offsets = [8, 0], sizes = [8, 16], strides = [1, 1]} : vector<16x16xf32> to vector<8x16xf32>
    %202 = vector.extract_strided_slice %162 {offsets = [8, 0], sizes = [8, 48], strides = [1, 1]} : vector<112x48xf32> to vector<8x48xf32>
    %203 = vector.extract_strided_slice %162 {offsets = [72, 0], sizes = [8, 48], strides = [1, 1]} : vector<112x48xf32> to vector<8x48xf32>
    %204 = tpu.concatenate %202, %203 in 0 : vector<8x48xf32>, vector<8x48xf32> -> vector<16x48xf32>
    %cst_42 = arith.constant dense<0.000000e+00> : vector<16x48xf32>
    %205 = tpu.matmul %199, %163, %cst_42 {dimension_numbers = #tpu.dot_dimension_numbers<[1], [0], [0], [1], [0, 0, 1, 1], [], []>} : vector<16x16xf32>, vector<16x48xf32>, vector<16x48xf32> -> vector<16x48xf32>
    %206 = vector.broadcast %164 : vector<1x48xf32> to vector<16x48xf32>
    %207 = arith.addf %205, %206 : vector<16x48xf32>
    %208 = vector.extract_strided_slice %204 {offsets = [0, 0], sizes = [16, 16], strides = [1, 1]} : vector<16x48xf32> to vector<16x16xf32>
    %209 = vector.extract_strided_slice %207 {offsets = [0, 0], sizes = [16, 16], strides = [1, 1]} : vector<16x48xf32> to vector<16x16xf32>
    %210 = arith.addf %208, %209 : vector<16x16xf32>
    %211 = arith.negf %210 : vector<16x16xf32>
    %212 = math.exp %211 : vector<16x16xf32>
    %cst_43 = arith.constant 1.000000e+00 : f32
    %213 = vector.broadcast %cst_43 : f32 to vector<16x16xf32>
    %214 = arith.addf %213, %212 : vector<16x16xf32>
    %215 = arith.divf %213, %214 : vector<16x16xf32>
    %216 = vector.extract_strided_slice %204 {offsets = [0, 16], sizes = [16, 16], strides = [1, 1]} : vector<16x48xf32> to vector<16x16xf32>
    %217 = vector.extract_strided_slice %207 {offsets = [0, 16], sizes = [16, 16], strides = [1, 1]} : vector<16x48xf32> to vector<16x16xf32>
    %218 = arith.addf %216, %217 : vector<16x16xf32>
    %219 = arith.negf %218 : vector<16x16xf32>
    %220 = math.exp %219 : vector<16x16xf32>
    %cst_44 = arith.constant 1.000000e+00 : f32
    %221 = vector.broadcast %cst_44 : f32 to vector<16x16xf32>
    %222 = arith.addf %221, %220 : vector<16x16xf32>
    %223 = arith.divf %221, %222 : vector<16x16xf32>
    %224 = vector.extract_strided_slice %204 {offsets = [0, 32], sizes = [16, 16], strides = [1, 1]} : vector<16x48xf32> to vector<16x16xf32>
    %225 = vector.extract_strided_slice %207 {offsets = [0, 32], sizes = [16, 16], strides = [1, 1]} : vector<16x48xf32> to vector<16x16xf32>
    %226 = arith.mulf %215, %225 : vector<16x16xf32>
    %227 = arith.addf %224, %226 : vector<16x16xf32>
    %228 = math.tanh %227 : vector<16x16xf32>
    %cst_45 = arith.constant 1.000000e+00 : f32
    %229 = vector.broadcast %cst_45 : f32 to vector<16x16xf32>
    %230 = arith.subf %229, %223 : vector<16x16xf32>
    %231 = arith.mulf %230, %228 : vector<16x16xf32>
    %232 = arith.mulf %223, %199 : vector<16x16xf32>
    %233 = arith.addf %231, %232 : vector<16x16xf32>
    %234 = vector.extract_strided_slice %233 {offsets = [0, 0], sizes = [8, 16], strides = [1, 1]} : vector<16x16xf32> to vector<8x16xf32>
    %235 = vector.extract_strided_slice %233 {offsets = [8, 0], sizes = [8, 16], strides = [1, 1]} : vector<16x16xf32> to vector<8x16xf32>
    %236 = vector.extract_strided_slice %162 {offsets = [16, 0], sizes = [8, 48], strides = [1, 1]} : vector<112x48xf32> to vector<8x48xf32>
    %237 = vector.extract_strided_slice %162 {offsets = [80, 0], sizes = [8, 48], strides = [1, 1]} : vector<112x48xf32> to vector<8x48xf32>
    %238 = tpu.concatenate %236, %237 in 0 : vector<8x48xf32>, vector<8x48xf32> -> vector<16x48xf32>
    %cst_46 = arith.constant dense<0.000000e+00> : vector<16x48xf32>
    %239 = tpu.matmul %233, %163, %cst_46 {dimension_numbers = #tpu.dot_dimension_numbers<[1], [0], [0], [1], [0, 0, 1, 1], [], []>} : vector<16x16xf32>, vector<16x48xf32>, vector<16x48xf32> -> vector<16x48xf32>
    %240 = vector.broadcast %164 : vector<1x48xf32> to vector<16x48xf32>
    %241 = arith.addf %239, %240 : vector<16x48xf32>
    %242 = vector.extract_strided_slice %238 {offsets = [0, 0], sizes = [16, 16], strides = [1, 1]} : vector<16x48xf32> to vector<16x16xf32>
    %243 = vector.extract_strided_slice %241 {offsets = [0, 0], sizes = [16, 16], strides = [1, 1]} : vector<16x48xf32> to vector<16x16xf32>
    %244 = arith.addf %242, %243 : vector<16x16xf32>
    %245 = arith.negf %244 : vector<16x16xf32>
    %246 = math.exp %245 : vector<16x16xf32>
    %cst_47 = arith.constant 1.000000e+00 : f32
    %247 = vector.broadcast %cst_47 : f32 to vector<16x16xf32>
    %248 = arith.addf %247, %246 : vector<16x16xf32>
    %249 = arith.divf %247, %248 : vector<16x16xf32>
    %250 = vector.extract_strided_slice %238 {offsets = [0, 16], sizes = [16, 16], strides = [1, 1]} : vector<16x48xf32> to vector<16x16xf32>
    %251 = vector.extract_strided_slice %241 {offsets = [0, 16], sizes = [16, 16], strides = [1, 1]} : vector<16x48xf32> to vector<16x16xf32>
    %252 = arith.addf %250, %251 : vector<16x16xf32>
    %253 = arith.negf %252 : vector<16x16xf32>
    %254 = math.exp %253 : vector<16x16xf32>
    %cst_48 = arith.constant 1.000000e+00 : f32
    %255 = vector.broadcast %cst_48 : f32 to vector<16x16xf32>
    %256 = arith.addf %255, %254 : vector<16x16xf32>
    %257 = arith.divf %255, %256 : vector<16x16xf32>
    %258 = vector.extract_strided_slice %238 {offsets = [0, 32], sizes = [16, 16], strides = [1, 1]} : vector<16x48xf32> to vector<16x16xf32>
    %259 = vector.extract_strided_slice %241 {offsets = [0, 32], sizes = [16, 16], strides = [1, 1]} : vector<16x48xf32> to vector<16x16xf32>
    %260 = arith.mulf %249, %259 : vector<16x16xf32>
    %261 = arith.addf %258, %260 : vector<16x16xf32>
    %262 = math.tanh %261 : vector<16x16xf32>
    %cst_49 = arith.constant 1.000000e+00 : f32
    %263 = vector.broadcast %cst_49 : f32 to vector<16x16xf32>
    %264 = arith.subf %263, %257 : vector<16x16xf32>
    %265 = arith.mulf %264, %262 : vector<16x16xf32>
    %266 = arith.mulf %257, %233 : vector<16x16xf32>
    %267 = arith.addf %265, %266 : vector<16x16xf32>
    %268 = vector.extract_strided_slice %267 {offsets = [0, 0], sizes = [8, 16], strides = [1, 1]} : vector<16x16xf32> to vector<8x16xf32>
    %269 = vector.extract_strided_slice %267 {offsets = [8, 0], sizes = [8, 16], strides = [1, 1]} : vector<16x16xf32> to vector<8x16xf32>
    %270 = vector.extract_strided_slice %162 {offsets = [24, 0], sizes = [8, 48], strides = [1, 1]} : vector<112x48xf32> to vector<8x48xf32>
    %271 = vector.extract_strided_slice %162 {offsets = [88, 0], sizes = [8, 48], strides = [1, 1]} : vector<112x48xf32> to vector<8x48xf32>
    %272 = tpu.concatenate %270, %271 in 0 : vector<8x48xf32>, vector<8x48xf32> -> vector<16x48xf32>
    %cst_50 = arith.constant dense<0.000000e+00> : vector<16x48xf32>
    %273 = tpu.matmul %267, %163, %cst_50 {dimension_numbers = #tpu.dot_dimension_numbers<[1], [0], [0], [1], [0, 0, 1, 1], [], []>} : vector<16x16xf32>, vector<16x48xf32>, vector<16x48xf32> -> vector<16x48xf32>
    %274 = vector.broadcast %164 : vector<1x48xf32> to vector<16x48xf32>
    %275 = arith.addf %273, %274 : vector<16x48xf32>
    %276 = vector.extract_strided_slice %272 {offsets = [0, 0], sizes = [16, 16], strides = [1, 1]} : vector<16x48xf32> to vector<16x16xf32>
    %277 = vector.extract_strided_slice %275 {offsets = [0, 0], sizes = [16, 16], strides = [1, 1]} : vector<16x48xf32> to vector<16x16xf32>
    %278 = arith.addf %276, %277 : vector<16x16xf32>
    %279 = arith.negf %278 : vector<16x16xf32>
    %280 = math.exp %279 : vector<16x16xf32>
    %cst_51 = arith.constant 1.000000e+00 : f32
    %281 = vector.broadcast %cst_51 : f32 to vector<16x16xf32>
    %282 = arith.addf %281, %280 : vector<16x16xf32>
    %283 = arith.divf %281, %282 : vector<16x16xf32>
    %284 = vector.extract_strided_slice %272 {offsets = [0, 16], sizes = [16, 16], strides = [1, 1]} : vector<16x48xf32> to vector<16x16xf32>
    %285 = vector.extract_strided_slice %275 {offsets = [0, 16], sizes = [16, 16], strides = [1, 1]} : vector<16x48xf32> to vector<16x16xf32>
    %286 = arith.addf %284, %285 : vector<16x16xf32>
    %287 = arith.negf %286 : vector<16x16xf32>
    %288 = math.exp %287 : vector<16x16xf32>
    %cst_52 = arith.constant 1.000000e+00 : f32
    %289 = vector.broadcast %cst_52 : f32 to vector<16x16xf32>
    %290 = arith.addf %289, %288 : vector<16x16xf32>
    %291 = arith.divf %289, %290 : vector<16x16xf32>
    %292 = vector.extract_strided_slice %272 {offsets = [0, 32], sizes = [16, 16], strides = [1, 1]} : vector<16x48xf32> to vector<16x16xf32>
    %293 = vector.extract_strided_slice %275 {offsets = [0, 32], sizes = [16, 16], strides = [1, 1]} : vector<16x48xf32> to vector<16x16xf32>
    %294 = arith.mulf %283, %293 : vector<16x16xf32>
    %295 = arith.addf %292, %294 : vector<16x16xf32>
    %296 = math.tanh %295 : vector<16x16xf32>
    %cst_53 = arith.constant 1.000000e+00 : f32
    %297 = vector.broadcast %cst_53 : f32 to vector<16x16xf32>
    %298 = arith.subf %297, %291 : vector<16x16xf32>
    %299 = arith.mulf %298, %296 : vector<16x16xf32>
    %300 = arith.mulf %291, %267 : vector<16x16xf32>
    %301 = arith.addf %299, %300 : vector<16x16xf32>
    %302 = vector.extract_strided_slice %301 {offsets = [0, 0], sizes = [8, 16], strides = [1, 1]} : vector<16x16xf32> to vector<8x16xf32>
    %303 = vector.extract_strided_slice %301 {offsets = [8, 0], sizes = [8, 16], strides = [1, 1]} : vector<16x16xf32> to vector<8x16xf32>
    %304 = vector.extract_strided_slice %162 {offsets = [32, 0], sizes = [8, 48], strides = [1, 1]} : vector<112x48xf32> to vector<8x48xf32>
    %305 = vector.extract_strided_slice %162 {offsets = [96, 0], sizes = [8, 48], strides = [1, 1]} : vector<112x48xf32> to vector<8x48xf32>
    %306 = tpu.concatenate %304, %305 in 0 : vector<8x48xf32>, vector<8x48xf32> -> vector<16x48xf32>
    %cst_54 = arith.constant dense<0.000000e+00> : vector<16x48xf32>
    %307 = tpu.matmul %301, %163, %cst_54 {dimension_numbers = #tpu.dot_dimension_numbers<[1], [0], [0], [1], [0, 0, 1, 1], [], []>} : vector<16x16xf32>, vector<16x48xf32>, vector<16x48xf32> -> vector<16x48xf32>
    %308 = vector.broadcast %164 : vector<1x48xf32> to vector<16x48xf32>
    %309 = arith.addf %307, %308 : vector<16x48xf32>
    %310 = vector.extract_strided_slice %306 {offsets = [0, 0], sizes = [16, 16], strides = [1, 1]} : vector<16x48xf32> to vector<16x16xf32>
    %311 = vector.extract_strided_slice %309 {offsets = [0, 0], sizes = [16, 16], strides = [1, 1]} : vector<16x48xf32> to vector<16x16xf32>
    %312 = arith.addf %310, %311 : vector<16x16xf32>
    %313 = arith.negf %312 : vector<16x16xf32>
    %314 = math.exp %313 : vector<16x16xf32>
    %cst_55 = arith.constant 1.000000e+00 : f32
    %315 = vector.broadcast %cst_55 : f32 to vector<16x16xf32>
    %316 = arith.addf %315, %314 : vector<16x16xf32>
    %317 = arith.divf %315, %316 : vector<16x16xf32>
    %318 = vector.extract_strided_slice %306 {offsets = [0, 16], sizes = [16, 16], strides = [1, 1]} : vector<16x48xf32> to vector<16x16xf32>
    %319 = vector.extract_strided_slice %309 {offsets = [0, 16], sizes = [16, 16], strides = [1, 1]} : vector<16x48xf32> to vector<16x16xf32>
    %320 = arith.addf %318, %319 : vector<16x16xf32>
    %321 = arith.negf %320 : vector<16x16xf32>
    %322 = math.exp %321 : vector<16x16xf32>
    %cst_56 = arith.constant 1.000000e+00 : f32
    %323 = vector.broadcast %cst_56 : f32 to vector<16x16xf32>
    %324 = arith.addf %323, %322 : vector<16x16xf32>
    %325 = arith.divf %323, %324 : vector<16x16xf32>
    %326 = vector.extract_strided_slice %306 {offsets = [0, 32], sizes = [16, 16], strides = [1, 1]} : vector<16x48xf32> to vector<16x16xf32>
    %327 = vector.extract_strided_slice %309 {offsets = [0, 32], sizes = [16, 16], strides = [1, 1]} : vector<16x48xf32> to vector<16x16xf32>
    %328 = arith.mulf %317, %327 : vector<16x16xf32>
    %329 = arith.addf %326, %328 : vector<16x16xf32>
    %330 = math.tanh %329 : vector<16x16xf32>
    %cst_57 = arith.constant 1.000000e+00 : f32
    %331 = vector.broadcast %cst_57 : f32 to vector<16x16xf32>
    %332 = arith.subf %331, %325 : vector<16x16xf32>
    %333 = arith.mulf %332, %330 : vector<16x16xf32>
    %334 = arith.mulf %325, %301 : vector<16x16xf32>
    %335 = arith.addf %333, %334 : vector<16x16xf32>
    %336 = vector.extract_strided_slice %335 {offsets = [0, 0], sizes = [8, 16], strides = [1, 1]} : vector<16x16xf32> to vector<8x16xf32>
    %337 = vector.extract_strided_slice %335 {offsets = [8, 0], sizes = [8, 16], strides = [1, 1]} : vector<16x16xf32> to vector<8x16xf32>
    %338 = vector.extract_strided_slice %162 {offsets = [40, 0], sizes = [8, 48], strides = [1, 1]} : vector<112x48xf32> to vector<8x48xf32>
    %339 = vector.extract_strided_slice %162 {offsets = [104, 0], sizes = [8, 48], strides = [1, 1]} : vector<112x48xf32> to vector<8x48xf32>
    %340 = tpu.concatenate %338, %339 in 0 : vector<8x48xf32>, vector<8x48xf32> -> vector<16x48xf32>
    %cst_58 = arith.constant dense<0.000000e+00> : vector<16x48xf32>
    %341 = tpu.matmul %335, %163, %cst_58 {dimension_numbers = #tpu.dot_dimension_numbers<[1], [0], [0], [1], [0, 0, 1, 1], [], []>} : vector<16x16xf32>, vector<16x48xf32>, vector<16x48xf32> -> vector<16x48xf32>
    %342 = vector.broadcast %164 : vector<1x48xf32> to vector<16x48xf32>
    %343 = arith.addf %341, %342 : vector<16x48xf32>
    %344 = vector.extract_strided_slice %340 {offsets = [0, 0], sizes = [16, 16], strides = [1, 1]} : vector<16x48xf32> to vector<16x16xf32>
    %345 = vector.extract_strided_slice %343 {offsets = [0, 0], sizes = [16, 16], strides = [1, 1]} : vector<16x48xf32> to vector<16x16xf32>
    %346 = arith.addf %344, %345 : vector<16x16xf32>
    %347 = arith.negf %346 : vector<16x16xf32>
    %348 = math.exp %347 : vector<16x16xf32>
    %cst_59 = arith.constant 1.000000e+00 : f32
    %349 = vector.broadcast %cst_59 : f32 to vector<16x16xf32>
    %350 = arith.addf %349, %348 : vector<16x16xf32>
    %351 = arith.divf %349, %350 : vector<16x16xf32>
    %352 = vector.extract_strided_slice %340 {offsets = [0, 16], sizes = [16, 16], strides = [1, 1]} : vector<16x48xf32> to vector<16x16xf32>
    %353 = vector.extract_strided_slice %343 {offsets = [0, 16], sizes = [16, 16], strides = [1, 1]} : vector<16x48xf32> to vector<16x16xf32>
    %354 = arith.addf %352, %353 : vector<16x16xf32>
    %355 = arith.negf %354 : vector<16x16xf32>
    %356 = math.exp %355 : vector<16x16xf32>
    %cst_60 = arith.constant 1.000000e+00 : f32
    %357 = vector.broadcast %cst_60 : f32 to vector<16x16xf32>
    %358 = arith.addf %357, %356 : vector<16x16xf32>
    %359 = arith.divf %357, %358 : vector<16x16xf32>
    %360 = vector.extract_strided_slice %340 {offsets = [0, 32], sizes = [16, 16], strides = [1, 1]} : vector<16x48xf32> to vector<16x16xf32>
    %361 = vector.extract_strided_slice %343 {offsets = [0, 32], sizes = [16, 16], strides = [1, 1]} : vector<16x48xf32> to vector<16x16xf32>
    %362 = arith.mulf %351, %361 : vector<16x16xf32>
    %363 = arith.addf %360, %362 : vector<16x16xf32>
    %364 = math.tanh %363 : vector<16x16xf32>
    %cst_61 = arith.constant 1.000000e+00 : f32
    %365 = vector.broadcast %cst_61 : f32 to vector<16x16xf32>
    %366 = arith.subf %365, %359 : vector<16x16xf32>
    %367 = arith.mulf %366, %364 : vector<16x16xf32>
    %368 = arith.mulf %359, %335 : vector<16x16xf32>
    %369 = arith.addf %367, %368 : vector<16x16xf32>
    %370 = vector.extract_strided_slice %369 {offsets = [0, 0], sizes = [8, 16], strides = [1, 1]} : vector<16x16xf32> to vector<8x16xf32>
    %371 = vector.extract_strided_slice %369 {offsets = [8, 0], sizes = [8, 16], strides = [1, 1]} : vector<16x16xf32> to vector<8x16xf32>
    %372 = vector.extract_strided_slice %369 {offsets = [0, 0], sizes = [8, 16], strides = [1, 1]} : vector<16x16xf32> to vector<8x16xf32>
    %373 = vector.extract_strided_slice %369 {offsets = [8, 0], sizes = [8, 16], strides = [1, 1]} : vector<16x16xf32> to vector<8x16xf32>
    %374 = vector.extract_strided_slice %162 {offsets = [48, 0], sizes = [8, 48], strides = [1, 1]} : vector<112x48xf32> to vector<8x48xf32>
    %cst_62 = arith.constant dense<0.000000e+00> : vector<8x48xf32>
    %375 = tpu.matmul %372, %163, %cst_62 {dimension_numbers = #tpu.dot_dimension_numbers<[1], [0], [0], [1], [0, 0, 1, 1], [], []>} : vector<8x16xf32>, vector<16x48xf32>, vector<8x48xf32> -> vector<8x48xf32>
    %376 = vector.broadcast %164 : vector<1x48xf32> to vector<8x48xf32>
    %377 = arith.addf %375, %376 : vector<8x48xf32>
    %378 = vector.extract_strided_slice %374 {offsets = [0, 0], sizes = [8, 16], strides = [1, 1]} : vector<8x48xf32> to vector<8x16xf32>
    %379 = vector.extract_strided_slice %377 {offsets = [0, 0], sizes = [8, 16], strides = [1, 1]} : vector<8x48xf32> to vector<8x16xf32>
    %380 = arith.addf %378, %379 : vector<8x16xf32>
    %381 = arith.negf %380 : vector<8x16xf32>
    %382 = math.exp %381 : vector<8x16xf32>
    %cst_63 = arith.constant 1.000000e+00 : f32
    %383 = vector.broadcast %cst_63 : f32 to vector<8x16xf32>
    %384 = arith.addf %383, %382 : vector<8x16xf32>
    %385 = arith.divf %383, %384 : vector<8x16xf32>
    %386 = vector.extract_strided_slice %374 {offsets = [0, 16], sizes = [8, 16], strides = [1, 1]} : vector<8x48xf32> to vector<8x16xf32>
    %387 = vector.extract_strided_slice %377 {offsets = [0, 16], sizes = [8, 16], strides = [1, 1]} : vector<8x48xf32> to vector<8x16xf32>
    %388 = arith.addf %386, %387 : vector<8x16xf32>
    %389 = arith.negf %388 : vector<8x16xf32>
    %390 = math.exp %389 : vector<8x16xf32>
    %cst_64 = arith.constant 1.000000e+00 : f32
    %391 = vector.broadcast %cst_64 : f32 to vector<8x16xf32>
    %392 = arith.addf %391, %390 : vector<8x16xf32>
    %393 = arith.divf %391, %392 : vector<8x16xf32>
    %394 = vector.extract_strided_slice %374 {offsets = [0, 32], sizes = [8, 16], strides = [1, 1]} : vector<8x48xf32> to vector<8x16xf32>
    %395 = vector.extract_strided_slice %377 {offsets = [0, 32], sizes = [8, 16], strides = [1, 1]} : vector<8x48xf32> to vector<8x16xf32>
    %396 = arith.mulf %385, %395 : vector<8x16xf32>
    %397 = arith.addf %394, %396 : vector<8x16xf32>
    %398 = math.tanh %397 : vector<8x16xf32>
    %cst_65 = arith.constant 1.000000e+00 : f32
    %399 = vector.broadcast %cst_65 : f32 to vector<8x16xf32>
    %400 = arith.subf %399, %393 : vector<8x16xf32>
    %401 = arith.mulf %400, %398 : vector<8x16xf32>
    %402 = arith.mulf %393, %372 : vector<8x16xf32>
    %403 = arith.addf %401, %402 : vector<8x16xf32>
    %404 = vector.extract_strided_slice %162 {offsets = [56, 0], sizes = [8, 48], strides = [1, 1]} : vector<112x48xf32> to vector<8x48xf32>
    %cst_66 = arith.constant dense<0.000000e+00> : vector<8x48xf32>
    %405 = tpu.matmul %403, %163, %cst_66 {dimension_numbers = #tpu.dot_dimension_numbers<[1], [0], [0], [1], [0, 0, 1, 1], [], []>} : vector<8x16xf32>, vector<16x48xf32>, vector<8x48xf32> -> vector<8x48xf32>
    %406 = vector.broadcast %164 : vector<1x48xf32> to vector<8x48xf32>
    %407 = arith.addf %405, %406 : vector<8x48xf32>
    %408 = vector.extract_strided_slice %404 {offsets = [0, 0], sizes = [8, 16], strides = [1, 1]} : vector<8x48xf32> to vector<8x16xf32>
    %409 = vector.extract_strided_slice %407 {offsets = [0, 0], sizes = [8, 16], strides = [1, 1]} : vector<8x48xf32> to vector<8x16xf32>
    %410 = arith.addf %408, %409 : vector<8x16xf32>
    %411 = arith.negf %410 : vector<8x16xf32>
    %412 = math.exp %411 : vector<8x16xf32>
    %cst_67 = arith.constant 1.000000e+00 : f32
    %413 = vector.broadcast %cst_67 : f32 to vector<8x16xf32>
    %414 = arith.addf %413, %412 : vector<8x16xf32>
    %415 = arith.divf %413, %414 : vector<8x16xf32>
    %416 = vector.extract_strided_slice %404 {offsets = [0, 16], sizes = [8, 16], strides = [1, 1]} : vector<8x48xf32> to vector<8x16xf32>
    %417 = vector.extract_strided_slice %407 {offsets = [0, 16], sizes = [8, 16], strides = [1, 1]} : vector<8x48xf32> to vector<8x16xf32>
    %418 = arith.addf %416, %417 : vector<8x16xf32>
    %419 = arith.negf %418 : vector<8x16xf32>
    %420 = math.exp %419 : vector<8x16xf32>
    %cst_68 = arith.constant 1.000000e+00 : f32
    %421 = vector.broadcast %cst_68 : f32 to vector<8x16xf32>
    %422 = arith.addf %421, %420 : vector<8x16xf32>
    %423 = arith.divf %421, %422 : vector<8x16xf32>
    %424 = vector.extract_strided_slice %404 {offsets = [0, 32], sizes = [8, 16], strides = [1, 1]} : vector<8x48xf32> to vector<8x16xf32>
    %425 = vector.extract_strided_slice %407 {offsets = [0, 32], sizes = [8, 16], strides = [1, 1]} : vector<8x48xf32> to vector<8x16xf32>
    %426 = arith.mulf %415, %425 : vector<8x16xf32>
    %427 = arith.addf %424, %426 : vector<8x16xf32>
    %428 = math.tanh %427 : vector<8x16xf32>
    %cst_69 = arith.constant 1.000000e+00 : f32
    %429 = vector.broadcast %cst_69 : f32 to vector<8x16xf32>
    %430 = arith.subf %429, %423 : vector<8x16xf32>
    %431 = arith.mulf %430, %428 : vector<8x16xf32>
    %432 = arith.mulf %423, %403 : vector<8x16xf32>
    %433 = arith.addf %431, %432 : vector<8x16xf32>
    %c0_70 = arith.constant 0 : index
    %c0_71 = arith.constant 0 : index
    %434 = vector.load %arg27[%c0_70, %c0_71] : memref<8x16xf32, #tpu.memory_space<vmem>>, vector<8x16xf32>
    tpu.vector_store %arg27[%c0_70, %c0_71], %433 {strides = array<i32>} : memref<8x16xf32, #tpu.memory_space<vmem>>, vector<8x16xf32>,
    %c0_72 = arith.constant 0 : index
    %c0_73 = arith.constant 0 : index
    %435 = vector.load %arg28[%c0_72, %c0_73] : memref<8x16xf32, #tpu.memory_space<vmem>>, vector<8x16xf32>
    tpu.vector_store %arg28[%c0_72, %c0_73], %373 {strides = array<i32>} : memref<8x16xf32, #tpu.memory_space<vmem>>, vector<8x16xf32>,
    %c0_74 = arith.constant 0 : index
    %c0_75 = arith.constant 0 : index
    %436 = vector.load %arg14[%c0_74, %c0_75] : memref<1x16xf32, #tpu.memory_space<vmem>>, vector<1x16xf32>
    %c0_76 = arith.constant 0 : index
    %c0_77 = arith.constant 0 : index
    %437 = vector.load %arg15[%c0_76, %c0_77] : memref<1x1xf32, #tpu.memory_space<vmem>>, vector<1x1xf32>
    %438 = vector.shape_cast %200 : vector<8x16xf32> to vector<1x8x16xf32>
    %439 = vector.shape_cast %234 : vector<8x16xf32> to vector<1x8x16xf32>
    %440 = vector.shape_cast %268 : vector<8x16xf32> to vector<1x8x16xf32>
    %441 = vector.shape_cast %302 : vector<8x16xf32> to vector<1x8x16xf32>
    %442 = vector.shape_cast %336 : vector<8x16xf32> to vector<1x8x16xf32>
    %443 = vector.shape_cast %370 : vector<8x16xf32> to vector<1x8x16xf32>
    %444 = vector.shape_cast %403 : vector<8x16xf32> to vector<1x8x16xf32>
    %445 = vector.shape_cast %433 : vector<8x16xf32> to vector<1x8x16xf32>
    %446 = tpu.concatenate %438, %439, %440, %441, %442, %443, %444, %445 in 0 : vector<1x8x16xf32>, vector<1x8x16xf32>, vector<1x8x16xf32>, vector<1x8x16xf32>, vector<1x8x16xf32>, vector<1x8x16xf32>, vector<1x8x16xf32>, vector<1x8x16xf32> -> vector<8x8x16xf32>
    %447 = vector.shape_cast %436 : vector<1x16xf32> to vector<1x1x16xf32>
    %448 = vector.broadcast %447 : vector<1x1x16xf32> to vector<8x8x16xf32>
    %449 = arith.mulf %446, %448 : vector<8x8x16xf32>
    %cst_78 = arith.constant dense<0.000000e+00> : vector<8x8xf32>
    %450 = vector.multi_reduction <add>, %449, %cst_78 [2] : vector<8x8x16xf32> to vector<8x8xf32>
    %451 = vector.broadcast %437 : vector<1x1xf32> to vector<8x8xf32>
    %452 = arith.addf %450, %451 : vector<8x8xf32>
    %cst_79 = arith.constant 0.000000e+00 : f32
    %453 = vector.broadcast %cst_79 : f32 to vector<8x8xf32>
    %454 = arith.maximumf %452, %453 : vector<8x8xf32>
    %455 = vector.shape_cast %201 : vector<8x16xf32> to vector<1x8x16xf32>
    %456 = vector.shape_cast %235 : vector<8x16xf32> to vector<1x8x16xf32>
    %457 = vector.shape_cast %269 : vector<8x16xf32> to vector<1x8x16xf32>
    %458 = vector.shape_cast %303 : vector<8x16xf32> to vector<1x8x16xf32>
    %459 = vector.shape_cast %337 : vector<8x16xf32> to vector<1x8x16xf32>
    %460 = vector.shape_cast %371 : vector<8x16xf32> to vector<1x8x16xf32>
    %461 = tpu.concatenate %455, %456, %457, %458, %459, %460 in 0 : vector<1x8x16xf32>, vector<1x8x16xf32>, vector<1x8x16xf32>, vector<1x8x16xf32>, vector<1x8x16xf32>, vector<1x8x16xf32> -> vector<6x8x16xf32>
    %462 = vector.shape_cast %436 : vector<1x16xf32> to vector<1x1x16xf32>
    %463 = vector.broadcast %462 : vector<1x1x16xf32> to vector<6x8x16xf32>
    %464 = arith.mulf %461, %463 : vector<6x8x16xf32>
    %cst_80 = arith.constant dense<0.000000e+00> : vector<6x8xf32>
    %465 = vector.multi_reduction <add>, %464, %cst_80 [2] : vector<6x8x16xf32> to vector<6x8xf32>
    %466 = vector.broadcast %437 : vector<1x1xf32> to vector<6x8xf32>
    %467 = arith.addf %465, %466 : vector<6x8xf32>
    %cst_81 = arith.constant 0.000000e+00 : f32
    %468 = vector.broadcast %cst_81 : f32 to vector<6x8xf32>
    %469 = arith.maximumf %467, %468 : vector<6x8xf32>
    %c0_82 = arith.constant 0 : index
    %c0_83 = arith.constant 0 : index
    %470 = vector.load %arg24[%c0_82, %c0_83] : memref<5x8xf32, #tpu.memory_space<vmem>>, vector<5x8xf32>
    %471 = tpu.concatenate %454, %470 in 0 : vector<8x8xf32>, vector<5x8xf32> -> vector<13x8xf32>
    %c0_84 = arith.constant 0 : index
    %c0_85 = arith.constant 0 : index
    %472 = vector.load %arg18[%c0_84, %c0_85] : memref<8x4xf32, #tpu.memory_space<vmem>>, vector<8x4xf32>
    %c0_86 = arith.constant 0 : index
    %c0_87 = arith.constant 0 : index
    %473 = vector.load %arg19[%c0_86, %c0_87] : memref<1x4xf32, #tpu.memory_space<vmem>>, vector<1x4xf32>
    %cst_88 = arith.constant dense<0.000000e+00> : vector<13x4xf32>
    %474 = tpu.matmul %471, %472, %cst_88 {dimension_numbers = #tpu.dot_dimension_numbers<[1], [0], [0], [1], [0, 0, 1, 1], [], []>} : vector<13x8xf32>, vector<8x4xf32>, vector<13x4xf32> -> vector<13x4xf32>
    %475 = vector.broadcast %473 : vector<1x4xf32> to vector<13x4xf32>
    %476 = arith.addf %474, %475 : vector<13x4xf32>
    %cst_89 = arith.constant 0.000000e+00 : f32
    %477 = vector.broadcast %cst_89 : f32 to vector<13x4xf32>
    %478 = arith.maximumf %476, %477 : vector<13x4xf32>
    %c0_90 = arith.constant 0 : index
    %c0_91 = arith.constant 0 : index
    %479 = vector.load %arg20[%c0_90, %c0_91] : memref<4x8xf32, #tpu.memory_space<vmem>>, vector<4x8xf32>
    %c0_92 = arith.constant 0 : index
    %c0_93 = arith.constant 0 : index
    %480 = vector.load %arg21[%c0_92, %c0_93] : memref<1x8xf32, #tpu.memory_space<vmem>>, vector<1x8xf32>
    %cst_94 = arith.constant dense<0.000000e+00> : vector<13x8xf32>
    %481 = tpu.matmul %478, %479, %cst_94 {dimension_numbers = #tpu.dot_dimension_numbers<[1], [0], [0], [1], [0, 0, 1, 1], [], []>} : vector<13x4xf32>, vector<4x8xf32>, vector<13x8xf32> -> vector<13x8xf32>
    %482 = vector.broadcast %480 : vector<1x8xf32> to vector<13x8xf32>
    %483 = arith.addf %481, %482 : vector<13x8xf32>
    %cst_95 = arith.constant 0.000000e+00 : f32
    %484 = vector.broadcast %cst_95 : f32 to vector<13x8xf32>
    %485 = arith.maximumf %483, %484 : vector<13x8xf32>
    %486 = vector.extract_strided_slice %485 {offsets = [0, 0], sizes = [8, 8], strides = [1, 1]} : vector<13x8xf32> to vector<8x8xf32>
    %487 = vector.extract_strided_slice %485 {offsets = [8, 0], sizes = [5, 8], strides = [1, 1]} : vector<13x8xf32> to vector<5x8xf32>
    %cst_96 = arith.constant dense<0.000000e+00> : vector<8xf32>
    %488 = vector.multi_reduction <add>, %487, %cst_96 [0] : vector<5x8xf32> to vector<8xf32>
    %489 = vector.shape_cast %488 : vector<8xf32> to vector<1x8xf32>
    %cst_97 = arith.constant 5.000000e+00 : f32
    %490 = vector.broadcast %cst_97 : f32 to vector<1x8xf32>
    %491 = arith.divf %489, %490 : vector<1x8xf32>
    %cst_98 = arith.constant dense<0.000000e+00> : vector<8x1xf32>
    %492 = tpu.matmul %486, %491, %cst_98 {dimension_numbers = #tpu.dot_dimension_numbers<[1], [1], [0], [0], [0, 0, 1, 0], [], []>} : vector<8x8xf32>, vector<1x8xf32>, vector<8x1xf32> -> vector<8x1xf32>
    %493 = math.tanh %492 : vector<8x1xf32>
    %494 = math.absf %493 : vector<8x1xf32>
    %cst_99 = arith.constant 9.99999996E-13 : f32
    %495 = vector.broadcast %cst_99 : f32 to vector<8x1xf32>
    %496 = arith.maximumf %494, %495 : vector<8x1xf32>
    %497 = arith.divf %493, %496 : vector<8x1xf32>
    %c0_100 = arith.constant 0 : index
    %c0_101 = arith.constant 0 : index
    %498 = vector.load %arg25[%c0_100, %c0_101] : memref<7x8xf32, #tpu.memory_space<vmem>>, vector<7x8xf32>
    %499 = tpu.concatenate %469, %498 in 0 : vector<6x8xf32>, vector<7x8xf32> -> vector<13x8xf32>
    %c0_102 = arith.constant 0 : index
    %c0_103 = arith.constant 0 : index
    %500 = vector.load %arg18[%c0_102, %c0_103] : memref<8x4xf32, #tpu.memory_space<vmem>>, vector<8x4xf32>
    %c0_104 = arith.constant 0 : index
    %c0_105 = arith.constant 0 : index
    %501 = vector.load %arg19[%c0_104, %c0_105] : memref<1x4xf32, #tpu.memory_space<vmem>>, vector<1x4xf32>
    %cst_106 = arith.constant dense<0.000000e+00> : vector<13x4xf32>
    %502 = tpu.matmul %499, %500, %cst_106 {dimension_numbers = #tpu.dot_dimension_numbers<[1], [0], [0], [1], [0, 0, 1, 1], [], []>} : vector<13x8xf32>, vector<8x4xf32>, vector<13x4xf32> -> vector<13x4xf32>
    %503 = vector.broadcast %501 : vector<1x4xf32> to vector<13x4xf32>
    %504 = arith.addf %502, %503 : vector<13x4xf32>
    %cst_107 = arith.constant 0.000000e+00 : f32
    %505 = vector.broadcast %cst_107 : f32 to vector<13x4xf32>
    %506 = arith.maximumf %504, %505 : vector<13x4xf32>
    %c0_108 = arith.constant 0 : index
    %c0_109 = arith.constant 0 : index
    %507 = vector.load %arg20[%c0_108, %c0_109] : memref<4x8xf32, #tpu.memory_space<vmem>>, vector<4x8xf32>
    %c0_110 = arith.constant 0 : index
    %c0_111 = arith.constant 0 : index
    %508 = vector.load %arg21[%c0_110, %c0_111] : memref<1x8xf32, #tpu.memory_space<vmem>>, vector<1x8xf32>
    %cst_112 = arith.constant dense<0.000000e+00> : vector<13x8xf32>
    %509 = tpu.matmul %506, %507, %cst_112 {dimension_numbers = #tpu.dot_dimension_numbers<[1], [0], [0], [1], [0, 0, 1, 1], [], []>} : vector<13x4xf32>, vector<4x8xf32>, vector<13x8xf32> -> vector<13x8xf32>
    %510 = vector.broadcast %508 : vector<1x8xf32> to vector<13x8xf32>
    %511 = arith.addf %509, %510 : vector<13x8xf32>
    %cst_113 = arith.constant 0.000000e+00 : f32
    %512 = vector.broadcast %cst_113 : f32 to vector<13x8xf32>
    %513 = arith.maximumf %511, %512 : vector<13x8xf32>
    %514 = vector.extract_strided_slice %513 {offsets = [0, 0], sizes = [6, 8], strides = [1, 1]} : vector<13x8xf32> to vector<6x8xf32>
    %515 = vector.extract_strided_slice %513 {offsets = [6, 0], sizes = [7, 8], strides = [1, 1]} : vector<13x8xf32> to vector<7x8xf32>
    %cst_114 = arith.constant dense<0.000000e+00> : vector<8xf32>
    %516 = vector.multi_reduction <add>, %515, %cst_114 [0] : vector<7x8xf32> to vector<8xf32>
    %517 = vector.shape_cast %516 : vector<8xf32> to vector<1x8xf32>
    %cst_115 = arith.constant 7.000000e+00 : f32
    %518 = vector.broadcast %cst_115 : f32 to vector<1x8xf32>
    %519 = arith.divf %517, %518 : vector<1x8xf32>
    %cst_116 = arith.constant dense<0.000000e+00> : vector<6x1xf32>
    %520 = tpu.matmul %514, %519, %cst_116 {dimension_numbers = #tpu.dot_dimension_numbers<[1], [1], [0], [0], [0, 0, 1, 0], [], []>} : vector<6x8xf32>, vector<1x8xf32>, vector<6x1xf32> -> vector<6x1xf32>
    %521 = math.tanh %520 : vector<6x1xf32>
    %522 = math.absf %521 : vector<6x1xf32>
    %cst_117 = arith.constant 9.99999996E-13 : f32
    %523 = vector.broadcast %cst_117 : f32 to vector<6x1xf32>
    %524 = arith.maximumf %522, %523 : vector<6x1xf32>
    %525 = arith.divf %521, %524 : vector<6x1xf32>
    %c0_118 = arith.constant 0 : index
    %c0_119 = arith.constant 0 : index
    %526 = vector.load %arg22[%c0_118, %c0_119] : memref<9x64xf32, #tpu.memory_space<vmem>>, vector<9x64xf32>
    %c0_120 = arith.constant 0 : index
    %c0_121 = arith.constant 0 : index
    %527 = vector.load %arg23[%c0_120, %c0_121] : memref<1x64xf32, #tpu.memory_space<vmem>>, vector<1x64xf32>
    %528 = vector.extract_strided_slice %526 {offsets = [0, 0], sizes = [8, 64], strides = [1, 1]} : vector<9x64xf32> to vector<8x64xf32>
    %529 = vector.extract_strided_slice %526 {offsets = [8, 0], sizes = [1, 64], strides = [1, 1]} : vector<9x64xf32> to vector<1x64xf32>
    %cst_122 = arith.constant dense<0.000000e+00> : vector<8x64xf32>
    %530 = tpu.matmul %454, %528, %cst_122 {dimension_numbers = #tpu.dot_dimension_numbers<[1], [0], [0], [1], [0, 0, 1, 1], [], []>} : vector<8x8xf32>, vector<8x64xf32>, vector<8x64xf32> -> vector<8x64xf32>
    %531 = vector.broadcast %497 : vector<8x1xf32> to vector<8x64xf32>
    %532 = vector.broadcast %529 : vector<1x64xf32> to vector<8x64xf32>
    %533 = arith.mulf %531, %532 : vector<8x64xf32>
    %534 = arith.addf %530, %533 : vector<8x64xf32>
    %535 = vector.broadcast %527 : vector<1x64xf32> to vector<8x64xf32>
    %536 = arith.addf %534, %535 : vector<8x64xf32>
    %cst_123 = arith.constant 0.000000e+00 : f32
    %537 = vector.broadcast %cst_123 : f32 to vector<8x64xf32>
    %538 = arith.maximumf %536, %537 : vector<8x64xf32>
    %cst_124 = arith.constant dense<0.000000e+00> : vector<6x64xf32>
    %539 = tpu.matmul %469, %528, %cst_124 {dimension_numbers = #tpu.dot_dimension_numbers<[1], [0], [0], [1], [0, 0, 1, 1], [], []>} : vector<6x8xf32>, vector<8x64xf32>, vector<6x64xf32> -> vector<6x64xf32>
    %540 = vector.broadcast %525 : vector<6x1xf32> to vector<6x64xf32>
    %541 = vector.broadcast %529 : vector<1x64xf32> to vector<6x64xf32>
    %542 = arith.mulf %540, %541 : vector<6x64xf32>
    %543 = arith.addf %539, %542 : vector<6x64xf32>
    %544 = vector.broadcast %527 : vector<1x64xf32> to vector<6x64xf32>
    %545 = arith.addf %543, %544 : vector<6x64xf32>
    %cst_125 = arith.constant 0.000000e+00 : f32
    %546 = vector.broadcast %cst_125 : f32 to vector<6x64xf32>
    %547 = arith.maximumf %545, %546 : vector<6x64xf32>
    %cst_126 = arith.constant dense<0.000000e+00> : vector<64xf32>
    %548 = vector.multi_reduction <add>, %538, %cst_126 [0] : vector<8x64xf32> to vector<64xf32>
    %549 = vector.shape_cast %548 : vector<64xf32> to vector<1x64xf32>
    %cst_127 = arith.constant 8.000000e+00 : f32
    %550 = vector.broadcast %cst_127 : f32 to vector<1x64xf32>
    %551 = arith.divf %549, %550 : vector<1x64xf32>
    %cst_128 = arith.constant dense<0.000000e+00> : vector<1x6xf32>
    %552 = tpu.matmul %551, %547, %cst_128 {dimension_numbers = #tpu.dot_dimension_numbers<[1], [1], [0], [0], [0, 0, 1, 0], [], []>} : vector<1x64xf32>, vector<6x64xf32>, vector<1x6xf32> -> vector<1x6xf32>
    %c0_129 = arith.constant 0 : index
    %c0_130 = arith.constant 0 : index
    %553 = vector.load %arg26[%c0_129, %c0_130] : memref<1x6xf32, #tpu.memory_space<vmem>>, vector<1x6xf32>
    tpu.vector_store %arg26[%c0_129, %c0_130], %552 {strides = array<i32>} : memref<1x6xf32, #tpu.memory_space<vmem>>, vector<1x6xf32>,
    return
  }
}

</mosaic_0001>

<llo_original>
// kernel: tpu_custom_call.1
$region0: #{tpu_custom_call.1}
  #allocation0 [shape = 'u32[]', space=smem, size = 0x4, offset = 0x4, fixed_abs, tag = 'smem constant byte address 0x4 - core index']
  #allocation1 [shape = 'u32[144,128]{1,0:T(1,128)}', space=vmem, size = 0x12000, scoped, tag = 'internal scratch']
  #allocation2 [shape = 'f32[1,1]{1,0:T(1,128)S(1)}', space=vmem, size = 0x200, scoped, tag = 'scoped memory for tpu_custom_call.1']
  %s0 = inlined_call_operand.vmem [shape: f32[8,8], index: 0, kind: input, shape index: {}]
  %s1 = inlined_call_operand.vmem [shape: f32[8,1], index: 1, kind: input, shape index: {}]
  %s2 = inlined_call_operand.vmem [shape: f32[6,8], index: 2, kind: input, shape index: {}]
  %s3 = inlined_call_operand.vmem [shape: f32[6,1], index: 3, kind: input, shape index: {}]
  %s4 = inlined_call_operand.hbm [shape: f32[1,8], index: 4, kind: input, shape index: {}]
  %s5 = inlined_call_operand.hbm [shape: f32[1,8], index: 5, kind: input, shape index: {}]
  %s6 = inlined_call_operand.hbm [shape: f32[4,3], index: 6, kind: input, shape index: {}]
  %s7 = inlined_call_operand.vmem [shape: f32[4,1], index: 7, kind: input, shape index: {}]
  %s8 = inlined_call_operand.vmem [shape: f32[8,12], index: 8, kind: input, shape index: {}]
  %s9 = inlined_call_operand.vmem [shape: f32[8,1], index: 9, kind: input, shape index: {}]
  %s10 = inlined_call_operand.vmem [shape: f32[5,48], index: 10, kind: input, shape index: {}]
  %s11 = inlined_call_operand.vmem [shape: f32[16,48], index: 11, kind: input, shape index: {}]
  %s12 = inlined_call_operand.hbm [shape: f32[1,48], index: 12, kind: input, shape index: {}]
  %s13 = inlined_call_operand.hbm [shape: f32[1,48], index: 13, kind: input, shape index: {}]
  %s14 = inlined_call_operand.hbm [shape: f32[1,16], index: 14, kind: input, shape index: {}]
  %s15 = inlined_call_operand.<no memory space> [shape: f32[1,1], index: 15, kind: input, shape index: {}]
  %s16 = inlined_call_operand.vmem [shape: f32[8,16], index: 16, kind: input, shape index: {}]
  %s17 = inlined_call_operand.vmem [shape: f32[8,16], index: 17, kind: input, shape index: {}]
  %s18 = inlined_call_operand.vmem [shape: f32[8,4], index: 18, kind: input, shape index: {}]
  %s19 = inlined_call_operand.vmem [shape: f32[1,4], index: 19, kind: input, shape index: {}]
  %s20 = inlined_call_operand.vmem [shape: f32[4,8], index: 20, kind: input, shape index: {}]
  %s21 = inlined_call_operand.vmem [shape: f32[1,8], index: 21, kind: input, shape index: {}]
  %s22 = inlined_call_operand.vmem [shape: f32[9,64], index: 22, kind: input, shape index: {}]
  %s23 = inlined_call_operand.vmem [shape: f32[1,64], index: 23, kind: input, shape index: {}]
  %s24 = inlined_call_operand.vmem [shape: f32[5,8], index: 24, kind: input, shape index: {}]
  %s25 = inlined_call_operand.vmem [shape: f32[7,8], index: 25, kind: input, shape index: {}]
  %s26 = inlined_call_operand.hbm [shape: f32[1,6], index: 26, kind: output, shape index: {0}]
  %s27 = inlined_call_operand.hbm [shape: f32[8,16], index: 27, kind: output, shape index: {1}]
  %s28 = inlined_call_operand.hbm [shape: f32[8,16], index: 28, kind: output, shape index: {2}]
  %29 = xla_tuple %s26, %s27, %s28
  %s30 = sld [smem:[#allocation0]]
  $region154: #{tpu_custom_call.1} parent=0
    _
  %s32 = ssub.s32 1, %s30
  %s33 = scalar_select 0, %s32, %s30
  %v34 = vstv %s15
  %35 = vst [vmem:[#allocation2] sm:$0x1] %v34
  $region1: #{tpu_custom_call.1} parent=0
    #allocation3 [shape = 'u8[512]{0}', space=vmem, size = 0x400, scoped, tag = 'input window, operand 4, single buffered']
    #allocation4 [shape = 's32[1]{0}', space=sflag, size = 0x4, scoped, tag = 'scoped memory for tpu_custom_call.1']
    #allocation5 [shape = 's32[1]{0}', space=sflag, size = 0x4, scoped, tag = 'scoped memory for tpu_custom_call.1']
    #allocation6 [shape = 'u8[512]{0}', space=vmem, size = 0x400, scoped, tag = 'input window, operand 5, single buffered']
    #allocation7 [shape = 's32[1]{0}', space=sflag, size = 0x4, scoped, tag = 'scoped memory for tpu_custom_call.1']
    #allocation8 [shape = 'u8[2048]{0}', space=vmem, size = 0x800, scoped, tag = 'input window, operand 6, single buffered']
    #allocation9 [shape = 'u8[512]{0}', space=vmem, size = 0x400, scoped, tag = 'input window, operand 12, single buffered']
    #allocation10 [shape = 's32[1]{0}', space=sflag, size = 0x4, scoped, tag = 'scoped memory for tpu_custom_call.1']
    #allocation11 [shape = 'u8[512]{0}', space=vmem, size = 0x400, scoped, tag = 'input window, operand 13, single buffered']
    #allocation12 [shape = 'u8[512]{0}', space=vmem, size = 0x400, scoped, tag = 'input window, operand 14, single buffered']
    #allocation13 [shape = 's32[1]{0}', space=sflag, size = 0x4, scoped, tag = 'scoped memory for tpu_custom_call.1']
    #allocation14 [shape = 'u8[512]{0}', space=vmem, size = 0x400, scoped, tag = 'output window, operand 0, single buffered']
    #allocation15 [shape = 'u8[4096]{0}', space=vmem, size = 0x1000, scoped, tag = 'output window, operand 1, single buffered']
    #allocation16 [shape = 's32[1]{0}', space=sflag, size = 0x4, scoped, tag = 'scoped memory for tpu_custom_call.1']
    #allocation17 [shape = 'u8[4096]{0}', space=vmem, size = 0x1000, scoped, tag = 'output window, operand 2, single buffered']
    %36 = vsyncpa [#allocation4], 0
    %37 = vsyncpa [#allocation7], 0
    %38 = vsyncpa [#allocation10], 0
    %39 = vsyncpa [#allocation13], 0
    %40 = vsyncpa [#allocation5], 0
    %41 = vsyncpa [#allocation16], 0
    // Predicated region
    $region2: #{tpu_custom_call.1} parent=1 // pred_check
      _
    $region3: #{tpu_custom_call.1} parent=1 // pred_check_branch
      %43 = sbr.rel (0) target = $region5
    $region4: #{tpu_custom_call.1} parent=1 // pred_region
      _
    $region5: #{tpu_custom_call.1} parent=1 // pred_fallthru
      _
    // Predicated region
    $region6: #{tpu_custom_call.1} parent=1 // pred_check
      _
    $region7: #{tpu_custom_call.1} parent=1 // pred_check_branch
      %45 = sbr.rel (0) target = $region9
    $region8: #{tpu_custom_call.1} parent=1 // pred_region
      _
    $region9: #{tpu_custom_call.1} parent=1 // pred_fallthru
      _
    // Predicated region
    $region10: #{tpu_custom_call.1} parent=1 // pred_check
      _
    $region11: #{tpu_custom_call.1} parent=1 // pred_check_branch
      %47 = sbr.rel (0) target = $region13
    $region12: #{tpu_custom_call.1} parent=1 // pred_region
      _
    $region13: #{tpu_custom_call.1} parent=1 // pred_fallthru
      _
    // Predicated region
    $region14: #{tpu_custom_call.1} parent=1 // pred_check
      _
    $region15: #{tpu_custom_call.1} parent=1 // pred_check_branch
      %49 = sbr.rel (0) target = $region17
    $region16: #{tpu_custom_call.1} parent=1 // pred_region
      _
    $region17: #{tpu_custom_call.1} parent=1 // pred_fallthru
      _
    // Predicated region
    $region18: #{tpu_custom_call.1} parent=1 // pred_check
      _
    $region19: #{tpu_custom_call.1} parent=1 // pred_check_branch
      %51 = sbr.rel (0) target = $region21
    $region20: #{tpu_custom_call.1} parent=1 // pred_region
      %s53 = ssub.s32 16, 16
      %54 = vsyncadd [#allocation4], %s53
      %s56 = sshll.u32 [#allocation3], 4
      %s57 = int_to_ptr.vmem [resolvable:$true] %s56
      %59 = dma.hbm_to_vmem [thread:$0]  %s4, 16, %s57, [#allocation4]
    $region21: #{tpu_custom_call.1} parent=1 // pred_fallthru
      _
    // Predicated region
    $region22: #{tpu_custom_call.1} parent=1 // pred_check
      _
    $region23: #{tpu_custom_call.1} parent=1 // pred_check_branch
      %61 = sbr.rel (0) target = $region25
    $region24: #{tpu_custom_call.1} parent=1 // pred_region
      %s63 = ssub.s32 16, 16
      %64 = vsyncadd [#allocation7], %s63
      %s66 = sshll.u32 [#allocation6], 4
      %s67 = int_to_ptr.vmem [resolvable:$true] %s66
      %69 = dma.hbm_to_vmem [thread:$0]  %s5, 16, %s67, [#allocation7]
    $region25: #{tpu_custom_call.1} parent=1 // pred_fallthru
      _
    // Predicated region
    $region26: #{tpu_custom_call.1} parent=1 // pred_check
      _
    $region27: #{tpu_custom_call.1} parent=1 // pred_check_branch
      %71 = sbr.rel (0) target = $region29
    $region28: #{tpu_custom_call.1} parent=1 // pred_region
      %s73 = ssub.s32 64, 64
      %74 = vsyncadd [#allocation7], %s73
      %s76 = sshll.u32 [#allocation8], 4
      %s77 = int_to_ptr.vmem [resolvable:$true] %s76
      %79 = dma.hbm_to_vmem [thread:$0]  %s6, 64, %s77, [#allocation7]
    $region29: #{tpu_custom_call.1} parent=1 // pred_fallthru
      _
    // Predicated region
    $region30: #{tpu_custom_call.1} parent=1 // pred_check
      _
    $region31: #{tpu_custom_call.1} parent=1 // pred_check_branch
      %81 = sbr.rel (0) target = $region33
    $region32: #{tpu_custom_call.1} parent=1 // pred_region
      _
    $region33: #{tpu_custom_call.1} parent=1 // pred_fallthru
      _
    // Predicated region
    $region34: #{tpu_custom_call.1} parent=1 // pred_check
      _
    $region35: #{tpu_custom_call.1} parent=1 // pred_check_branch
      %83 = sbr.rel (0) target = $region37
    $region36: #{tpu_custom_call.1} parent=1 // pred_region
      _
    $region37: #{tpu_custom_call.1} parent=1 // pred_fallthru
      _
    // Predicated region
    $region38: #{tpu_custom_call.1} parent=1 // pred_check
      _
    $region39: #{tpu_custom_call.1} parent=1 // pred_check_branch
      %85 = sbr.rel (0) target = $region41
    $region40: #{tpu_custom_call.1} parent=1 // pred_region
      _
    $region41: #{tpu_custom_call.1} parent=1 // pred_fallthru
      _
    // Predicated region
    $region42: #{tpu_custom_call.1} parent=1 // pred_check
      _
    $region43: #{tpu_custom_call.1} parent=1 // pred_check_branch
      %87 = sbr.rel (0) target = $region45
    $region44: #{tpu_custom_call.1} parent=1 // pred_region
      _
    $region45: #{tpu_custom_call.1} parent=1 // pred_fallthru
      _
    // Predicated region
    $region46: #{tpu_custom_call.1} parent=1 // pred_check
      _
    $region47: #{tpu_custom_call.1} parent=1 // pred_check_branch
      %89 = sbr.rel (0) target = $region49
    $region48: #{tpu_custom_call.1} parent=1 // pred_region
      _
    $region49: #{tpu_custom_call.1} parent=1 // pred_fallthru
      _
    // Predicated region
    $region50: #{tpu_custom_call.1} parent=1 // pred_check
      _
    $region51: #{tpu_custom_call.1} parent=1 // pred_check_branch
      %91 = sbr.rel (0) target = $region53
    $region52: #{tpu_custom_call.1} parent=1 // pred_region
      %s93 = ssub.s32 16, 16
      %94 = vsyncadd [#allocation10], %s93
      %s96 = sshll.u32 [#allocation9], 4
      %s97 = int_to_ptr.vmem [resolvable:$true] %s96
      %99 = dma.hbm_to_vmem [thread:$0]  %s12, 16, %s97, [#allocation10]
    $region53: #{tpu_custom_call.1} parent=1 // pred_fallthru
      _
    // Predicated region
    $region54: #{tpu_custom_call.1} parent=1 // pred_check
      _
    $region55: #{tpu_custom_call.1} parent=1 // pred_check_branch
      %101 = sbr.rel (0) target = $region57
    $region56: #{tpu_custom_call.1} parent=1 // pred_region
      %s103 = ssub.s32 16, 16
      %104 = vsyncadd [#allocation10], %s103
      %s106 = sshll.u32 [#allocation11], 4
      %s107 = int_to_ptr.vmem [resolvable:$true] %s106
      %109 = dma.hbm_to_vmem [thread:$0]  %s13, 16, %s107, [#allocation10]
    $region57: #{tpu_custom_call.1} parent=1 // pred_fallthru
      _
    // Predicated region
    $region58: #{tpu_custom_call.1} parent=1 // pred_check
      _
    $region59: #{tpu_custom_call.1} parent=1 // pred_check_branch
      %111 = sbr.rel (0) target = $region61
    $region60: #{tpu_custom_call.1} parent=1 // pred_region
      %s113 = ssub.s32 16, 16
      %114 = vsyncadd [#allocation13], %s113
      %s116 = sshll.u32 [#allocation12], 4
      %s117 = int_to_ptr.vmem [resolvable:$true] %s116
      %119 = dma.hbm_to_vmem [thread:$0]  %s14, 16, %s117, [#allocation13]
    $region61: #{tpu_custom_call.1} parent=1 // pred_fallthru
      _
    // Predicated region
    $region62: #{tpu_custom_call.1} parent=1 // pred_check
      _
    $region63: #{tpu_custom_call.1} parent=1 // pred_check_branch
      %121 = sbr.rel (0) target = $region65
    $region64: #{tpu_custom_call.1} parent=1 // pred_region
      _
    $region65: #{tpu_custom_call.1} parent=1 // pred_fallthru
      _
    // Predicated region
    $region66: #{tpu_custom_call.1} parent=1 // pred_check
      _
    $region67: #{tpu_custom_call.1} parent=1 // pred_check_branch
      %123 = sbr.rel (0) target = $region69
    $region68: #{tpu_custom_call.1} parent=1 // pred_region
      _
    $region69: #{tpu_custom_call.1} parent=1 // pred_fallthru
      _
    // Predicated region
    $region70: #{tpu_custom_call.1} parent=1 // pred_check
      _
    $region71: #{tpu_custom_call.1} parent=1 // pred_check_branch
      %125 = sbr.rel (0) target = $region73
    $region72: #{tpu_custom_call.1} parent=1 // pred_region
      _
    $region73: #{tpu_custom_call.1} parent=1 // pred_fallthru
      _
    // Predicated region
    $region74: #{tpu_custom_call.1} parent=1 // pred_check
      _
    $region75: #{tpu_custom_call.1} parent=1 // pred_check_branch
      %127 = sbr.rel (0) target = $region77
    $region76: #{tpu_custom_call.1} parent=1 // pred_region
      _
    $region77: #{tpu_custom_call.1} parent=1 // pred_fallthru
      _
    // Predicated region
    $region78: #{tpu_custom_call.1} parent=1 // pred_check
      _
    $region79: #{tpu_custom_call.1} parent=1 // pred_check_branch
      %129 = sbr.rel (0) target = $region81
    $region80: #{tpu_custom_call.1} parent=1 // pred_region
      _
    $region81: #{tpu_custom_call.1} parent=1 // pred_fallthru
      _
    // Predicated region
    $region82: #{tpu_custom_call.1} parent=1 // pred_check
      _
    $region83: #{tpu_custom_call.1} parent=1 // pred_check_branch
      %131 = sbr.rel (0) target = $region85
    $region84: #{tpu_custom_call.1} parent=1 // pred_region
      _
    $region85: #{tpu_custom_call.1} parent=1 // pred_fallthru
      _
    // Predicated region
    $region86: #{tpu_custom_call.1} parent=1 // pred_check
      _
    $region87: #{tpu_custom_call.1} parent=1 // pred_check_branch
      %133 = sbr.rel (0) target = $region89
    $region88: #{tpu_custom_call.1} parent=1 // pred_region
      _
    $region89: #{tpu_custom_call.1} parent=1 // pred_fallthru
      _
    // Predicated region
    $region90: #{tpu_custom_call.1} parent=1 // pred_check
      _
    $region91: #{tpu_custom_call.1} parent=1 // pred_check_branch
      %135 = sbr.rel (0) target = $region93
    $region92: #{tpu_custom_call.1} parent=1 // pred_region
      _
    $region93: #{tpu_custom_call.1} parent=1 // pred_fallthru
      _
    // Predicated region
    $region94: #{tpu_custom_call.1} parent=1 // pred_check
      _
    $region95: #{tpu_custom_call.1} parent=1 // pred_check_branch
      %137 = sbr.rel (0) target = $region97
    $region96: #{tpu_custom_call.1} parent=1 // pred_region
      _
    $region97: #{tpu_custom_call.1} parent=1 // pred_fallthru
      _
    // Predicated region
    $region98: #{tpu_custom_call.1} parent=1 // pred_check
      _
    $region99: #{tpu_custom_call.1} parent=1 // pred_check_branch
      %139 = sbr.rel (0) target = $region101
    $region100: #{tpu_custom_call.1} parent=1 // pred_region
      _
    $region101: #{tpu_custom_call.1} parent=1 // pred_fallthru
      _
    // Predicated region
    $region102: #{tpu_custom_call.1} parent=1 // pred_check
      _
    $region103: #{tpu_custom_call.1} parent=1 // pred_check_branch
      %141 = sbr.rel (0) target = $region105
    $region104: #{tpu_custom_call.1} parent=1 // pred_region
      _
    $region105: #{tpu_custom_call.1} parent=1 // pred_fallthru
      _
    // Predicated region
    $region106: #{tpu_custom_call.1} parent=1 // pred_check
      _
    $region107: #{tpu_custom_call.1} parent=1 // pred_check_branch
      %143 = sbr.rel (0) target = $region109
    $region108: #{tpu_custom_call.1} parent=1 // pred_region
      %144 = dma.done [#allocation4], 16
    $region109: #{tpu_custom_call.1} parent=1 // pred_fallthru
      _
    // Predicated region
    $region110: #{tpu_custom_call.1} parent=1 // pred_check
      _
    $region111: #{tpu_custom_call.1} parent=1 // pred_check_branch
      %146 = sbr.rel (0) target = $region113
    $region112: #{tpu_custom_call.1} parent=1 // pred_region
      %147 = dma.done [#allocation7], 16
    $region113: #{tpu_custom_call.1} parent=1 // pred_fallthru
      _
    // Predicated region
    $region114: #{tpu_custom_call.1} parent=1 // pred_check
      _
    $region115: #{tpu_custom_call.1} parent=1 // pred_check_branch
      %149 = sbr.rel (0) target = $region117
    $region116: #{tpu_custom_call.1} parent=1 // pred_region
      %150 = dma.done [#allocation7], 64
    $region117: #{tpu_custom_call.1} parent=1 // pred_fallthru
      _
    // Predicated region
    $region118: #{tpu_custom_call.1} parent=1 // pred_check
      _
    $region119: #{tpu_custom_call.1} parent=1 // pred_check_branch
      %152 = sbr.rel (0) target = $region121
    $region120: #{tpu_custom_call.1} parent=1 // pred_region
      %153 = dma.done [#allocation10], 16
    $region121: #{tpu_custom_call.1} parent=1 // pred_fallthru
      _
    // Predicated region
    $region122: #{tpu_custom_call.1} parent=1 // pred_check
      _
    $region123: #{tpu_custom_call.1} parent=1 // pred_check_branch
      %155 = sbr.rel (0) target = $region125
    $region124: #{tpu_custom_call.1} parent=1 // pred_region
      %156 = dma.done [#allocation10], 16
    $region125: #{tpu_custom_call.1} parent=1 // pred_fallthru
      _
    // Predicated region
    $region126: #{tpu_custom_call.1} parent=1 // pred_check
      _
    $region127: #{tpu_custom_call.1} parent=1 // pred_check_branch
      %158 = sbr.rel (0) target = $region129
    $region128: #{tpu_custom_call.1} parent=1 // pred_region
      %159 = dma.done [#allocation13], 16
    $region129: #{tpu_custom_call.1} parent=1 // pred_fallthru
      _
    %v160 = vld [vmem:[#allocation3] sm:$0x1]
    %v161 = vmul.f32 %v160, 0.999995
    %v162 = vld [vmem:[#allocation6] sm:$0x1]
    %v163 = vld [vmem:[%s0] sm:$0xff]
    %v164 = vld [vmem:[%s1] sm:$0xff]
    %v166 = vlaneseq
    %v167 = vshrl.u32 %v166, 7
    %v168 = vsub.s32 0, %v167
    %v169 = vrot.slane %v161, %v168
    %v171 = vmul.f32 %v163, %v169
    %v173 = vlaneseq
    %v174 = vshrl.u32 %v173, 7
    %v175 = vsub.s32 0, %v174
    %v176 = vrot.slane %v162, %v175
    %v178 = vadd.f32 %v171, %v176
    %vm179 = vcmask 7168
    %v180 = vsel %vm179, %v164, inf
    %v181 = vrot.slane %v180, 4
    %v182 = vmin.f32 %v180, %v181
    %v183 = vrot.slane %v182, 2
    %v184 = vmin.f32 %v182, %v183
    %v185 = vrot.slane %v184, 1
    %v186 = vmin.f32 %v184, %v185
    %v187 = vsel %vm179, %v164, -inf
    %v188 = vrot.slane %v187, 4
    %v189 = vmax.f32 %v187, %v188
    %v190 = vrot.slane %v189, 2
    %v191 = vmax.f32 %v189, %v190
    %v192 = vrot.slane %v191, 1
    %v193 = vmax.f32 %v191, %v192
    %v194 = vsub.f32 %v164, %v186
    %v195 = vsub.f32 %v193, %v186
    %v196 = vrcp.pop %v195
    %v197 = vmul.f32 %v194, %v196
    %199 = vrot.lane.b32.xlu0 %v197, 8
    %v200 = vpop.permute.xlu0 %199
    %vm202 = vcmask 64512
    %v203 = vsel %vm202, %v178, %v200
    %v204 = vld [vmem:[%s2] sm:$0x3f]
    %v205 = vld [vmem:[%s3] sm:$0x3f]
    %v206 = vmul.f32 %v204, %v169
    %v207 = vadd.f32 %v206, %v176
    %vm208 = vcmask 5120
    %v209 = vsel %vm208, %v205, inf
    %v210 = vrot.slane %v209, 4
    %v211 = vmin.f32 %v209, %v210
    %v212 = vrot.slane %v211, 2
    %v213 = vmin.f32 %v211, %v212
    %v214 = vrot.slane %v213, 1
    %v215 = vmin.f32 %v213, %v214
    %v216 = vsel %vm208, %v205, -inf
    %v217 = vrot.slane %v216, 4
    %v218 = vmax.f32 %v216, %v217
    %v219 = vrot.slane %v218, 2
    %v220 = vmax.f32 %v218, %v219
    %v221 = vrot.slane %v220, 1
    %v222 = vmax.f32 %v220, %v221
    %v223 = vsub.f32 %v205, %v215
    %v224 = vsub.f32 %v222, %v215
    %v225 = vrcp.pop %v224
    %v226 = vmul.f32 %v223, %v225
    %228 = vrot.lane.b32.xlu0 %v226, 8
    %v229 = vpop.permute.xlu0 %228
    %v231 = vsel %vm202, %v207, %v229
    %v232 = vld [vmem:[#allocation8] sm:$0xf]
    %v233 = vld [vmem:[%s7] sm:$0xf]
    %v236 = vcombine.high %v203, %v203
    %v238 = vunpack.c.l.s4 1966171168
    %v239 = vunpack.c.0.s8 %v238
    %v240 = vlaneseq
    %v241 = vshrl.u32 %v240, 7
    %v242 = vsub.s32 %v239, %v241
    %v243 = vrot.slane %v203, %v242
    %v245 = vunpack.c.l.s4 1966171168
    %v246 = vunpack.c.0.s8 %v245
    %v247 = vlaneseq
    %v248 = vshrl.u32 %v247, 7
    %v249 = vsub.s32 %v246, %v248
    %v250 = vrot.slane %v236, %v249
    %v251 = vcombine.high %v243, %v243
    %v252 = vcombine.high %v250, %v250
    %v254 = vunpack.c.l.s4 1966171168
    %v255 = vunpack.c.0.s8 %v254
    %v256 = vlaneseq
    %v257 = vshrl.u32 %v256, 7
    %v258 = vsub.s32 %v255, %v257
    %v259 = vrot.slane %v243, %v258
    %v261 = vunpack.c.l.s4 1966171168
    %v262 = vunpack.c.0.s8 %v261
    %v263 = vlaneseq
    %v264 = vshrl.u32 %v263, 7
    %v265 = vsub.s32 %v262, %v264
    %v266 = vrot.slane %v250, %v265
    %v268 = vunpack.c.l.s4 1966171168
    %v269 = vunpack.c.0.s8 %v268
    %v270 = vlaneseq
    %v271 = vshrl.u32 %v270, 7
    %v272 = vsub.s32 %v269, %v271
    %v273 = vrot.slane %v251, %v272
    %v275 = vunpack.c.l.s4 1966171168
    %v276 = vunpack.c.0.s8 %v275
    %v277 = vlaneseq
    %v278 = vshrl.u32 %v277, 7
    %v279 = vsub.s32 %v276, %v278
    %v280 = vrot.slane %v252, %v279
    %v281 = vcombine.high %v259, %v259
    %v282 = vcombine.high %v266, %v266
    %v283 = vcombine.high %v273, %v273
    %v284 = vcombine.high %v280, %v280
    %v285 = vcombine.high %v231, %v231
    %v287 = vunpack.c.l.s4 1966171168
    %v288 = vunpack.c.0.s8 %v287
    %v289 = vlaneseq
    %v290 = vshrl.u32 %v289, 7
    %v291 = vsub.s32 %v288, %v290
    %v292 = vrot.slane %v231, %v291
    %v294 = vunpack.c.l.s4 1966171168
    %v295 = vunpack.c.0.s8 %v294
    %v296 = vlaneseq
    %v297 = vshrl.u32 %v296, 7
    %v298 = vsub.s32 %v295, %v297
    %v299 = vrot.slane %v285, %v298
    %v300 = vcombine.high %v292, %v292
    %v301 = vcombine.high %v299, %v299
    %v303 = vunpack.c.l.s4 1966171168
    %v304 = vunpack.c.0.s8 %v303
    %v305 = vlaneseq
    %v306 = vshrl.u32 %v305, 7
    %v307 = vsub.s32 %v304, %v306
    %v308 = vrot.slane %v292, %v307
    %v310 = vunpack.c.l.s4 1966171168
    %v311 = vunpack.c.0.s8 %v310
    %v312 = vlaneseq
    %v313 = vshrl.u32 %v312, 7
    %v314 = vsub.s32 %v311, %v313
    %v315 = vrot.slane %v299, %v314
    %v317 = vunpack.c.l.s4 1966171168
    %v318 = vunpack.c.0.s8 %v317
    %v319 = vlaneseq
    %v320 = vshrl.u32 %v319, 7
    %v321 = vsub.s32 %v318, %v320
    %v322 = vrot.slane %v300, %v321
    %v324 = vunpack.c.l.s4 1966171168
    %v325 = vunpack.c.0.s8 %v324
    %v326 = vlaneseq
    %v327 = vshrl.u32 %v326, 7
    %v328 = vsub.s32 %v325, %v327
    %v329 = vrot.slane %v301, %v328
    %v330 = vcombine.high %v308, %v308
    %v331 = vcombine.high %v322, %v322
    %333 = vset.pattern.permute.xlu0 0
    %334 = vperm.xlu0 %333, %v232
    %v335 = vpop.permute.xlu0 %334
    %v337 = vlaneseq
    %v338 = vshrl.u32 %v337, 7
    %v339 = vsub.s32 0, %v338
    %v340 = vrot.slane %v259, %v339
    %v341 = vlaneseq
    %v342 = vshrl.u32 %v341, 7
    %v343 = vsub.s32 0, %v342
    %v344 = vrot.slane %v273, %v343
    %v345 = vlaneseq
    %v346 = vshrl.u32 %v345, 7
    %v347 = vsub.s32 0, %v346
    %v348 = vrot.slane %v281, %v347
    %v349 = vlaneseq
    %v350 = vshrl.u32 %v349, 7
    %v351 = vsub.s32 0, %v350
    %v352 = vrot.slane %v283, %v351
    %v353 = vlaneseq
    %v354 = vshrl.u32 %v353, 7
    %v355 = vsub.s32 0, %v354
    %v356 = vrot.slane %v266, %v355
    %v357 = vlaneseq
    %v358 = vshrl.u32 %v357, 7
    %v359 = vsub.s32 0, %v358
    %v360 = vrot.slane %v280, %v359
    %v361 = vlaneseq
    %v362 = vshrl.u32 %v361, 7
    %v363 = vsub.s32 0, %v362
    %v364 = vrot.slane %v282, %v363
    %v365 = vlaneseq
    %v366 = vshrl.u32 %v365, 7
    %v367 = vsub.s32 0, %v366
    %v368 = vrot.slane %v284, %v367
    %v369 = vlaneseq
    %v370 = vshrl.u32 %v369, 7
    %v371 = vsub.s32 0, %v370
    %v372 = vrot.slane %v308, %v371
    %v373 = vlaneseq
    %v374 = vshrl.u32 %v373, 7
    %v375 = vsub.s32 0, %v374
    %v376 = vrot.slane %v322, %v375
    %v377 = vlaneseq
    %v378 = vshrl.u32 %v377, 7
    %v379 = vsub.s32 0, %v378
    %v380 = vrot.slane %v330, %v379
    %v381 = vlaneseq
    %v382 = vshrl.u32 %v381, 7
    %v383 = vsub.s32 0, %v382
    %v384 = vrot.slane %v331, %v383
    %v385 = vlaneseq
    %v386 = vshrl.u32 %v385, 7
    %v387 = vsub.s32 0, %v386
    %v388 = vrot.slane %v315, %v387
    %v389 = vlaneseq
    %v390 = vshrl.u32 %v389, 7
    %v391 = vsub.s32 0, %v390
    %v392 = vrot.slane %v329, %v391
    %v407 = vmul.f32 %v335, %v340
    %v408 = vmul.f32 %v335, %v344
    %v409 = vmul.f32 %v335, %v348
    %v410 = vmul.f32 %v335, %v352
    %v411 = vmul.f32 %v335, %v356
    %v412 = vmul.f32 %v335, %v360
    %v413 = vmul.f32 %v335, %v364
    %v414 = vmul.f32 %v335, %v368
    %v415 = vmul.f32 %v335, %v372
    %v416 = vmul.f32 %v335, %v376
    %v417 = vmul.f32 %v335, %v380
    %v418 = vmul.f32 %v335, %v384
    %v419 = vmul.f32 %v335, %v388
    %v420 = vmul.f32 %v335, %v392
    %421 = vset.pattern.permute.xlu0 1
    %422 = vperm.xlu0 %421, %v232
    %v423 = vpop.permute.xlu0 %422
    %v425 = vmul.f32 %v423, %v340
    %v426 = vmul.f32 %v423, %v344
    %v427 = vmul.f32 %v423, %v348
    %v428 = vmul.f32 %v423, %v352
    %v429 = vmul.f32 %v423, %v356
    %v430 = vmul.f32 %v423, %v360
    %v431 = vmul.f32 %v423, %v364
    %v432 = vmul.f32 %v423, %v368
    %v433 = vmul.f32 %v423, %v372
    %v434 = vmul.f32 %v423, %v376
    %v435 = vmul.f32 %v423, %v380
    %v436 = vmul.f32 %v423, %v384
    %v437 = vmul.f32 %v423, %v388
    %v438 = vmul.f32 %v423, %v392
    %453 = vrot.lane.b32.xlu0 %v425, 127
    %v454 = vpop.permute.xlu0 %453
    %455 = vrot.lane.b32.xlu0 %v426, 127
    %v456 = vpop.permute.xlu0 %455
    %457 = vrot.lane.b32.xlu0 %v427, 127
    %v458 = vpop.permute.xlu0 %457
    %459 = vrot.lane.b32.xlu0 %v428, 127
    %v460 = vpop.permute.xlu0 %459
    %461 = vrot.lane.b32.xlu0 %v429, 127
    %v462 = vpop.permute.xlu0 %461
    %463 = vrot.lane.b32.xlu0 %v430, 127
    %v464 = vpop.permute.xlu0 %463
    %465 = vrot.lane.b32.xlu0 %v431, 127
    %v466 = vpop.permute.xlu0 %465
    %467 = vrot.lane.b32.xlu0 %v432, 127
    %v468 = vpop.permute.xlu0 %467
    %469 = vrot.lane.b32.xlu0 %v433, 127
    %v470 = vpop.permute.xlu0 %469
    %471 = vrot.lane.b32.xlu0 %v434, 127
    %v472 = vpop.permute.xlu0 %471
    %473 = vrot.lane.b32.xlu0 %v435, 127
    %v474 = vpop.permute.xlu0 %473
    %475 = vrot.lane.b32.xlu0 %v436, 127
    %v476 = vpop.permute.xlu0 %475
    %477 = vrot.lane.b32.xlu0 %v437, 127
    %v478 = vpop.permute.xlu0 %477
    %479 = vrot.lane.b32.xlu0 %v438, 127
    %v480 = vpop.permute.xlu0 %479
    %v495 = vadd.f32 %v407, %v454
    %v496 = vadd.f32 %v408, %v456
    %v497 = vadd.f32 %v409, %v458
    %v498 = vadd.f32 %v410, %v460
    %v499 = vadd.f32 %v411, %v462
    %v500 = vadd.f32 %v412, %v464
    %v501 = vadd.f32 %v413, %v466
    %v502 = vadd.f32 %v414, %v468
    %v503 = vadd.f32 %v415, %v470
    %v504 = vadd.f32 %v416, %v472
    %v505 = vadd.f32 %v417, %v474
    %v506 = vadd.f32 %v418, %v476
    %v507 = vadd.f32 %v419, %v478
    %v508 = vadd.f32 %v420, %v480
    %509 = vset.pattern.permute.xlu0 2
    %510 = vperm.xlu0 %509, %v232
    %v511 = vpop.permute.xlu0 %510
    %v513 = vmul.f32 %v511, %v340
    %v514 = vmul.f32 %v511, %v344
    %v515 = vmul.f32 %v511, %v348
    %v516 = vmul.f32 %v511, %v352
    %v517 = vmul.f32 %v511, %v356
    %v518 = vmul.f32 %v511, %v360
    %v519 = vmul.f32 %v511, %v364
    %v520 = vmul.f32 %v511, %v368
    %v521 = vmul.f32 %v511, %v372
    %v522 = vmul.f32 %v511, %v376
    %v523 = vmul.f32 %v511, %v380
    %v524 = vmul.f32 %v511, %v384
    %v525 = vmul.f32 %v511, %v388
    %v526 = vmul.f32 %v511, %v392
    %541 = vrot.lane.b32.xlu0 %v513, 126
    %v542 = vpop.permute.xlu0 %541
    %543 = vrot.lane.b32.xlu0 %v514, 126
    %v544 = vpop.permute.xlu0 %543
    %545 = vrot.lane.b32.xlu0 %v515, 126
    %v546 = vpop.permute.xlu0 %545
    %547 = vrot.lane.b32.xlu0 %v516, 126
    %v548 = vpop.permute.xlu0 %547
    %549 = vrot.lane.b32.xlu0 %v517, 126
    %v550 = vpop.permute.xlu0 %549
    %551 = vrot.lane.b32.xlu0 %v518, 126
    %v552 = vpop.permute.xlu0 %551
    %553 = vrot.lane.b32.xlu0 %v519, 126
    %v554 = vpop.permute.xlu0 %553
    %555 = vrot.lane.b32.xlu0 %v520, 126
    %v556 = vpop.permute.xlu0 %555
    %557 = vrot.lane.b32.xlu0 %v521, 126
    %v558 = vpop.permute.xlu0 %557
    %559 = vrot.lane.b32.xlu0 %v522, 126
    %v560 = vpop.permute.xlu0 %559
    %561 = vrot.lane.b32.xlu0 %v523, 126
    %v562 = vpop.permute.xlu0 %561
    %563 = vrot.lane.b32.xlu0 %v524, 126
    %v564 = vpop.permute.xlu0 %563
    %565 = vrot.lane.b32.xlu0 %v525, 126
    %v566 = vpop.permute.xlu0 %565
    %567 = vrot.lane.b32.xlu0 %v526, 126
    %v568 = vpop.permute.xlu0 %567
    %v583 = vadd.f32 %v495, %v542
    %v584 = vadd.f32 %v496, %v544
    %v585 = vadd.f32 %v497, %v546
    %v586 = vadd.f32 %v498, %v548
    %v587 = vadd.f32 %v499, %v550
    %v588 = vadd.f32 %v500, %v552
    %v589 = vadd.f32 %v501, %v554
    %v590 = vadd.f32 %v502, %v556
    %v591 = vadd.f32 %v503, %v558
    %v592 = vadd.f32 %v504, %v560
    %v593 = vadd.f32 %v505, %v562
    %v594 = vadd.f32 %v506, %v564
    %v595 = vadd.f32 %v507, %v566
    %v596 = vadd.f32 %v508, %v568
    %598 = vset.pattern.permute.xlu0 0
    %599 = vperm.xlu0 %598, %v233
    %v600 = vpop.permute.xlu0 %599
    %v602 = vadd.f32 %v583, %v600
    %v603 = vadd.f32 %v584, %v600
    %v604 = vadd.f32 %v585, %v600
    %v605 = vadd.f32 %v586, %v600
    %v606 = vadd.f32 %v587, %v600
    %v607 = vadd.f32 %v588, %v600
    %v608 = vadd.f32 %v589, %v600
    %v609 = vadd.f32 %v590, %v600
    %v610 = vadd.f32 %v591, %v600
    %v611 = vadd.f32 %v592, %v600
    %v612 = vadd.f32 %v593, %v600
    %v613 = vadd.f32 %v594, %v600
    %v614 = vadd.f32 %v595, %v600
    %v615 = vadd.f32 %v596, %v600
    %v616 = vmax.f32 %v602, 0.0
    %v617 = vmax.f32 %v603, 0.0
    %v618 = vmax.f32 %v604, 0.0
    %v619 = vmax.f32 %v605, 0.0
    %v620 = vmax.f32 %v606, 0.0
    %v621 = vmax.f32 %v607, 0.0
    %v622 = vmax.f32 %v608, 0.0
    %v623 = vmax.f32 %v609, 0.0
    %v624 = vmax.f32 %v610, 0.0
    %v625 = vmax.f32 %v611, 0.0
    %v626 = vmax.f32 %v612, 0.0
    %v627 = vmax.f32 %v613, 0.0
    %v628 = vmax.f32 %v614, 0.0
    %v629 = vmax.f32 %v615, 0.0
    %v630 = vld [vmem:[%s8] sm:$0xff]
    %v631 = vld [vmem:[%s9] sm:$0xff]
    %633 = vset.pattern.permute.xlu0 0
    %634 = vperm.xlu0 %633, %v630
    %v635 = vpop.permute.xlu0 %634
    %v637 = vlaneseq
    %v638 = vshrl.u32 %v637, 7
    %v639 = vsub.s32 0, %v638
    %v640 = vrot.slane %v616, %v639
    %v641 = vlaneseq
    %v642 = vshrl.u32 %v641, 7
    %v643 = vsub.s32 0, %v642
    %v644 = vrot.slane %v617, %v643
    %v645 = vlaneseq
    %v646 = vshrl.u32 %v645, 7
    %v647 = vsub.s32 0, %v646
    %v648 = vrot.slane %v618, %v647
    %v649 = vlaneseq
    %v650 = vshrl.u32 %v649, 7
    %v651 = vsub.s32 0, %v650
    %v652 = vrot.slane %v619, %v651
    %v653 = vlaneseq
    %v654 = vshrl.u32 %v653, 7
    %v655 = vsub.s32 0, %v654
    %v656 = vrot.slane %v620, %v655
    %v657 = vlaneseq
    %v658 = vshrl.u32 %v657, 7
    %v659 = vsub.s32 0, %v658
    %v660 = vrot.slane %v621, %v659
    %v661 = vlaneseq
    %v662 = vshrl.u32 %v661, 7
    %v663 = vsub.s32 0, %v662
    %v664 = vrot.slane %v622, %v663
    %v665 = vlaneseq
    %v666 = vshrl.u32 %v665, 7
    %v667 = vsub.s32 0, %v666
    %v668 = vrot.slane %v623, %v667
    %v669 = vlaneseq
    %v670 = vshrl.u32 %v669, 7
    %v671 = vsub.s32 0, %v670
    %v672 = vrot.slane %v624, %v671
    %v673 = vlaneseq
    %v674 = vshrl.u32 %v673, 7
    %v675 = vsub.s32 0, %v674
    %v676 = vrot.slane %v625, %v675
    %v677 = vlaneseq
    %v678 = vshrl.u32 %v677, 7
    %v679 = vsub.s32 0, %v678
    %v680 = vrot.slane %v626, %v679
    %v681 = vlaneseq
    %v682 = vshrl.u32 %v681, 7
    %v683 = vsub.s32 0, %v682
    %v684 = vrot.slane %v627, %v683
    %v685 = vlaneseq
    %v686 = vshrl.u32 %v685, 7
    %v687 = vsub.s32 0, %v686
    %v688 = vrot.slane %v628, %v687
    %v689 = vlaneseq
    %v690 = vshrl.u32 %v689, 7
    %v691 = vsub.s32 0, %v690
    %v692 = vrot.slane %v629, %v691
    %v693 = vmul.f32 %v635, %v640
    %v694 = vmul.f32 %v635, %v644
    %v695 = vmul.f32 %v635, %v648
    %v696 = vmul.f32 %v635, %v652
    %v697 = vmul.f32 %v635, %v656
    %v698 = vmul.f32 %v635, %v660
    %v699 = vmul.f32 %v635, %v664
    %v700 = vmul.f32 %v635, %v668
    %v701 = vmul.f32 %v635, %v672
    %v702 = vmul.f32 %v635, %v676
    %v703 = vmul.f32 %v635, %v680
    %v704 = vmul.f32 %v635, %v684
    %v705 = vmul.f32 %v635, %v688
    %v706 = vmul.f32 %v635, %v692
    %707 = vset.pattern.permute.xlu0 1
    %708 = vperm.xlu0 %707, %v630
    %v709 = vpop.permute.xlu0 %708
    %v711 = vlaneseq
    %v712 = vshrl.u32 %v711, 7
    %v713 = vsub.s32 1, %v712
    %v714 = vrot.slane %v616, %v713
    %v715 = vlaneseq
    %v716 = vshrl.u32 %v715, 7
    %v717 = vsub.s32 1, %v716
    %v718 = vrot.slane %v617, %v717
    %v719 = vlaneseq
    %v720 = vshrl.u32 %v719, 7
    %v721 = vsub.s32 1, %v720
    %v722 = vrot.slane %v618, %v721
    %v723 = vlaneseq
    %v724 = vshrl.u32 %v723, 7
    %v725 = vsub.s32 1, %v724
    %v726 = vrot.slane %v619, %v725
    %v727 = vlaneseq
    %v728 = vshrl.u32 %v727, 7
    %v729 = vsub.s32 1, %v728
    %v730 = vrot.slane %v620, %v729
    %v731 = vlaneseq
    %v732 = vshrl.u32 %v731, 7
    %v733 = vsub.s32 1, %v732
    %v734 = vrot.slane %v621, %v733
    %v735 = vlaneseq
    %v736 = vshrl.u32 %v735, 7
    %v737 = vsub.s32 1, %v736
    %v738 = vrot.slane %v622, %v737
    %v739 = vlaneseq
    %v740 = vshrl.u32 %v739, 7
    %v741 = vsub.s32 1, %v740
    %v742 = vrot.slane %v623, %v741
    %v743 = vlaneseq
    %v744 = vshrl.u32 %v743, 7
    %v745 = vsub.s32 1, %v744
    %v746 = vrot.slane %v624, %v745
    %v747 = vlaneseq
    %v748 = vshrl.u32 %v747, 7
    %v749 = vsub.s32 1, %v748
    %v750 = vrot.slane %v625, %v749
    %v751 = vlaneseq
    %v752 = vshrl.u32 %v751, 7
    %v753 = vsub.s32 1, %v752
    %v754 = vrot.slane %v626, %v753
    %v755 = vlaneseq
    %v756 = vshrl.u32 %v755, 7
    %v757 = vsub.s32 1, %v756
    %v758 = vrot.slane %v627, %v757
    %v759 = vlaneseq
    %v760 = vshrl.u32 %v759, 7
    %v761 = vsub.s32 1, %v760
    %v762 = vrot.slane %v628, %v761
    %v763 = vlaneseq
    %v764 = vshrl.u32 %v763, 7
    %v765 = vsub.s32 1, %v764
    %v766 = vrot.slane %v629, %v765
    %v767 = vmul.f32 %v709, %v714
    %v768 = vmul.f32 %v709, %v718
    %v769 = vmul.f32 %v709, %v722
    %v770 = vmul.f32 %v709, %v726
    %v771 = vmul.f32 %v709, %v730
    %v772 = vmul.f32 %v709, %v734
    %v773 = vmul.f32 %v709, %v738
    %v774 = vmul.f32 %v709, %v742
    %v775 = vmul.f32 %v709, %v746
    %v776 = vmul.f32 %v709, %v750
    %v777 = vmul.f32 %v709, %v754
    %v778 = vmul.f32 %v709, %v758
    %v779 = vmul.f32 %v709, %v762
    %v780 = vmul.f32 %v709, %v766
    %v781 = vadd.f32 %v693, %v767
    %v782 = vadd.f32 %v694, %v768
    %v783 = vadd.f32 %v695, %v769
    %v784 = vadd.f32 %v696, %v770
    %v785 = vadd.f32 %v697, %v771
    %v786 = vadd.f32 %v698, %v772
    %v787 = vadd.f32 %v699, %v773
    %v788 = vadd.f32 %v700, %v774
    %v789 = vadd.f32 %v701, %v775
    %v790 = vadd.f32 %v702, %v776
    %v791 = vadd.f32 %v703, %v777
    %v792 = vadd.f32 %v704, %v778
    %v793 = vadd.f32 %v705, %v779
    %v794 = vadd.f32 %v706, %v780
    %795 = vset.pattern.permute.xlu0 2
    %796 = vperm.xlu0 %795, %v630
    %v797 = vpop.permute.xlu0 %796
    %v799 = vlaneseq
    %v800 = vshrl.u32 %v799, 7
    %v801 = vsub.s32 2, %v800
    %v802 = vrot.slane %v616, %v801
    %v803 = vlaneseq
    %v804 = vshrl.u32 %v803, 7
    %v805 = vsub.s32 2, %v804
    %v806 = vrot.slane %v617, %v805
    %v807 = vlaneseq
    %v808 = vshrl.u32 %v807, 7
    %v809 = vsub.s32 2, %v808
    %v810 = vrot.slane %v618, %v809
    %v811 = vlaneseq
    %v812 = vshrl.u32 %v811, 7
    %v813 = vsub.s32 2, %v812
    %v814 = vrot.slane %v619, %v813
    %v815 = vlaneseq
    %v816 = vshrl.u32 %v815, 7
    %v817 = vsub.s32 2, %v816
    %v818 = vrot.slane %v620, %v817
    %v819 = vlaneseq
    %v820 = vshrl.u32 %v819, 7
    %v821 = vsub.s32 2, %v820
    %v822 = vrot.slane %v621, %v821
    %v823 = vlaneseq
    %v824 = vshrl.u32 %v823, 7
    %v825 = vsub.s32 2, %v824
    %v826 = vrot.slane %v622, %v825
    %v827 = vlaneseq
    %v828 = vshrl.u32 %v827, 7
    %v829 = vsub.s32 2, %v828
    %v830 = vrot.slane %v623, %v829
    %v831 = vlaneseq
    %v832 = vshrl.u32 %v831, 7
    %v833 = vsub.s32 2, %v832
    %v834 = vrot.slane %v624, %v833
    %v835 = vlaneseq
    %v836 = vshrl.u32 %v835, 7
    %v837 = vsub.s32 2, %v836
    %v838 = vrot.slane %v625, %v837
    %v839 = vlaneseq
    %v840 = vshrl.u32 %v839, 7
    %v841 = vsub.s32 2, %v840
    %v842 = vrot.slane %v626, %v841
    %v843 = vlaneseq
    %v844 = vshrl.u32 %v843, 7
    %v845 = vsub.s32 2, %v844
    %v846 = vrot.slane %v627, %v845
    %v847 = vlaneseq
    %v848 = vshrl.u32 %v847, 7
    %v849 = vsub.s32 2, %v848
    %v850 = vrot.slane %v628, %v849
    %v851 = vlaneseq
    %v852 = vshrl.u32 %v851, 7
    %v853 = vsub.s32 2, %v852
    %v854 = vrot.slane %v629, %v853
    %v855 = vmul.f32 %v797, %v802
    %v856 = vmul.f32 %v797, %v806
    %v857 = vmul.f32 %v797, %v810
    %v858 = vmul.f32 %v797, %v814
    %v859 = vmul.f32 %v797, %v818
    %v860 = vmul.f32 %v797, %v822
    %v861 = vmul.f32 %v797, %v826
    %v862 = vmul.f32 %v797, %v830
    %v863 = vmul.f32 %v797, %v834
    %v864 = vmul.f32 %v797, %v838
    %v865 = vmul.f32 %v797, %v842
    %v866 = vmul.f32 %v797, %v846
    %v867 = vmul.f32 %v797, %v850
    %v868 = vmul.f32 %v797, %v854
    %v869 = vadd.f32 %v781, %v855
    %v870 = vadd.f32 %v782, %v856
    %v871 = vadd.f32 %v783, %v857
    %v872 = vadd.f32 %v784, %v858
    %v873 = vadd.f32 %v785, %v859
    %v874 = vadd.f32 %v786, %v860
    %v875 = vadd.f32 %v787, %v861
    %v876 = vadd.f32 %v788, %v862
    %v877 = vadd.f32 %v789, %v863
    %v878 = vadd.f32 %v790, %v864
    %v879 = vadd.f32 %v791, %v865
    %v880 = vadd.f32 %v792, %v866
    %v881 = vadd.f32 %v793, %v867
    %v882 = vadd.f32 %v794, %v868
    %883 = vset.pattern.permute.xlu0 3
    %884 = vperm.xlu0 %883, %v630
    %v885 = vpop.permute.xlu0 %884
    %v887 = vlaneseq
    %v888 = vshrl.u32 %v887, 7
    %v889 = vsub.s32 3, %v888
    %v890 = vrot.slane %v616, %v889
    %v891 = vlaneseq
    %v892 = vshrl.u32 %v891, 7
    %v893 = vsub.s32 3, %v892
    %v894 = vrot.slane %v617, %v893
    %v895 = vlaneseq
    %v896 = vshrl.u32 %v895, 7
    %v897 = vsub.s32 3, %v896
    %v898 = vrot.slane %v618, %v897
    %v899 = vlaneseq
    %v900 = vshrl.u32 %v899, 7
    %v901 = vsub.s32 3, %v900
    %v902 = vrot.slane %v619, %v901
    %v903 = vlaneseq
    %v904 = vshrl.u32 %v903, 7
    %v905 = vsub.s32 3, %v904
    %v906 = vrot.slane %v620, %v905
    %v907 = vlaneseq
    %v908 = vshrl.u32 %v907, 7
    %v909 = vsub.s32 3, %v908
    %v910 = vrot.slane %v621, %v909
    %v911 = vlaneseq
    %v912 = vshrl.u32 %v911, 7
    %v913 = vsub.s32 3, %v912
    %v914 = vrot.slane %v622, %v913
    %v915 = vlaneseq
    %v916 = vshrl.u32 %v915, 7
    %v917 = vsub.s32 3, %v916
    %v918 = vrot.slane %v623, %v917
    %v919 = vlaneseq
    %v920 = vshrl.u32 %v919, 7
    %v921 = vsub.s32 3, %v920
    %v922 = vrot.slane %v624, %v921
    %v923 = vlaneseq
    %v924 = vshrl.u32 %v923, 7
    %v925 = vsub.s32 3, %v924
    %v926 = vrot.slane %v625, %v925
    %v927 = vlaneseq
    %v928 = vshrl.u32 %v927, 7
    %v929 = vsub.s32 3, %v928
    %v930 = vrot.slane %v626, %v929
    %v931 = vlaneseq
    %v932 = vshrl.u32 %v931, 7
    %v933 = vsub.s32 3, %v932
    %v934 = vrot.slane %v627, %v933
    %v935 = vlaneseq
    %v936 = vshrl.u32 %v935, 7
    %v937 = vsub.s32 3, %v936
    %v938 = vrot.slane %v628, %v937
    %v939 = vlaneseq
    %v940 = vshrl.u32 %v939, 7
    %v941 = vsub.s32 3, %v940
    %v942 = vrot.slane %v629, %v941
    %v943 = vmul.f32 %v885, %v890
    %v944 = vmul.f32 %v885, %v894
    %v945 = vmul.f32 %v885, %v898
    %v946 = vmul.f32 %v885, %v902
    %v947 = vmul.f32 %v885, %v906
    %v948 = vmul.f32 %v885, %v910
    %v949 = vmul.f32 %v885, %v914
    %v950 = vmul.f32 %v885, %v918
    %v951 = vmul.f32 %v885, %v922
    %v952 = vmul.f32 %v885, %v926
    %v953 = vmul.f32 %v885, %v930
    %v954 = vmul.f32 %v885, %v934
    %v955 = vmul.f32 %v885, %v938
    %v956 = vmul.f32 %v885, %v942
    %v957 = vadd.f32 %v869, %v943
    %v958 = vadd.f32 %v870, %v944
    %v959 = vadd.f32 %v871, %v945
    %v960 = vadd.f32 %v872, %v946
    %v961 = vadd.f32 %v873, %v947
    %v962 = vadd.f32 %v874, %v948
    %v963 = vadd.f32 %v875, %v949
    %v964 = vadd.f32 %v876, %v950
    %v965 = vadd.f32 %v877, %v951
    %v966 = vadd.f32 %v878, %v952
    %v967 = vadd.f32 %v879, %v953
    %v968 = vadd.f32 %v880, %v954
    %v969 = vadd.f32 %v881, %v955
    %v970 = vadd.f32 %v882, %v956
    %971 = vset.pattern.permute.xlu0 4
    %972 = vperm.xlu0 %971, %v630
    %v973 = vpop.permute.xlu0 %972
    %v975 = vmul.f32 %v973, %v640
    %v976 = vmul.f32 %v973, %v644
    %v977 = vmul.f32 %v973, %v648
    %v978 = vmul.f32 %v973, %v652
    %v979 = vmul.f32 %v973, %v656
    %v980 = vmul.f32 %v973, %v660
    %v981 = vmul.f32 %v973, %v664
    %v982 = vmul.f32 %v973, %v668
    %v983 = vmul.f32 %v973, %v672
    %v984 = vmul.f32 %v973, %v676
    %v985 = vmul.f32 %v973, %v680
    %v986 = vmul.f32 %v973, %v684
    %v987 = vmul.f32 %v973, %v688
    %v988 = vmul.f32 %v973, %v692
    %1003 = vrot.lane.b32.xlu0 %v975, 127
    %v1004 = vpop.permute.xlu0 %1003
    %1005 = vrot.lane.b32.xlu0 %v976, 127
    %v1006 = vpop.permute.xlu0 %1005
    %1007 = vrot.lane.b32.xlu0 %v977, 127
    %v1008 = vpop.permute.xlu0 %1007
    %1009 = vrot.lane.b32.xlu0 %v978, 127
    %v1010 = vpop.permute.xlu0 %1009
    %1011 = vrot.lane.b32.xlu0 %v979, 127
    %v1012 = vpop.permute.xlu0 %1011
    %1013 = vrot.lane.b32.xlu0 %v980, 127
    %v1014 = vpop.permute.xlu0 %1013
    %1015 = vrot.lane.b32.xlu0 %v981, 127
    %v1016 = vpop.permute.xlu0 %1015
    %1017 = vrot.lane.b32.xlu0 %v982, 127
    %v1018 = vpop.permute.xlu0 %1017
    %1019 = vrot.lane.b32.xlu0 %v983, 127
    %v1020 = vpop.permute.xlu0 %1019
    %1021 = vrot.lane.b32.xlu0 %v984, 127
    %v1022 = vpop.permute.xlu0 %1021
    %1023 = vrot.lane.b32.xlu0 %v985, 127
    %v1024 = vpop.permute.xlu0 %1023
    %1025 = vrot.lane.b32.xlu0 %v986, 127
    %v1026 = vpop.permute.xlu0 %1025
    %1027 = vrot.lane.b32.xlu0 %v987, 127
    %v1028 = vpop.permute.xlu0 %1027
    %1029 = vrot.lane.b32.xlu0 %v988, 127
    %v1030 = vpop.permute.xlu0 %1029
    %v1045 = vadd.f32 %v957, %v1004
    %v1046 = vadd.f32 %v958, %v1006
    %v1047 = vadd.f32 %v959, %v1008
    %v1048 = vadd.f32 %v960, %v1010
    %v1049 = vadd.f32 %v961, %v1012
    %v1050 = vadd.f32 %v962, %v1014
    %v1051 = vadd.f32 %v963, %v1016
    %v1052 = vadd.f32 %v964, %v1018
    %v1053 = vadd.f32 %v965, %v1020
    %v1054 = vadd.f32 %v966, %v1022
    %v1055 = vadd.f32 %v967, %v1024
    %v1056 = vadd.f32 %v968, %v1026
    %v1057 = vadd.f32 %v969, %v1028
    %v1058 = vadd.f32 %v970, %v1030
    %1059 = vset.pattern.permute.xlu0 5
    %1060 = vperm.xlu0 %1059, %v630
    %v1061 = vpop.permute.xlu0 %1060
    %v1063 = vmul.f32 %v1061, %v714
    %v1064 = vmul.f32 %v1061, %v718
    %v1065 = vmul.f32 %v1061, %v722
    %v1066 = vmul.f32 %v1061, %v726
    %v1067 = vmul.f32 %v1061, %v730
    %v1068 = vmul.f32 %v1061, %v734
    %v1069 = vmul.f32 %v1061, %v738
    %v1070 = vmul.f32 %v1061, %v742
    %v1071 = vmul.f32 %v1061, %v746
    %v1072 = vmul.f32 %v1061, %v750
    %v1073 = vmul.f32 %v1061, %v754
    %v1074 = vmul.f32 %v1061, %v758
    %v1075 = vmul.f32 %v1061, %v762
    %v1076 = vmul.f32 %v1061, %v766
    %1091 = vrot.lane.b32.xlu0 %v1063, 127
    %v1092 = vpop.permute.xlu0 %1091
    %1093 = vrot.lane.b32.xlu0 %v1064, 127
    %v1094 = vpop.permute.xlu0 %1093
    %1095 = vrot.lane.b32.xlu0 %v1065, 127
    %v1096 = vpop.permute.xlu0 %1095
    %1097 = vrot.lane.b32.xlu0 %v1066, 127
    %v1098 = vpop.permute.xlu0 %1097
    %1099 = vrot.lane.b32.xlu0 %v1067, 127
    %v1100 = vpop.permute.xlu0 %1099
    %1101 = vrot.lane.b32.xlu0 %v1068, 127
    %v1102 = vpop.permute.xlu0 %1101
    %1103 = vrot.lane.b32.xlu0 %v1069, 127
    %v1104 = vpop.permute.xlu0 %1103
    %1105 = vrot.lane.b32.xlu0 %v1070, 127
    %v1106 = vpop.permute.xlu0 %1105
    %1107 = vrot.lane.b32.xlu0 %v1071, 127
    %v1108 = vpop.permute.xlu0 %1107
    %1109 = vrot.lane.b32.xlu0 %v1072, 127
    %v1110 = vpop.permute.xlu0 %1109
    %1111 = vrot.lane.b32.xlu0 %v1073, 127
    %v1112 = vpop.permute.xlu0 %1111
    %1113 = vrot.lane.b32.xlu0 %v1074, 127
    %v1114 = vpop.permute.xlu0 %1113
    %1115 = vrot.lane.b32.xlu0 %v1075, 127
    %v1116 = vpop.permute.xlu0 %1115
    %1117 = vrot.lane.b32.xlu0 %v1076, 127
    %v1118 = vpop.permute.xlu0 %1117
    %v1133 = vadd.f32 %v1045, %v1092
    %v1134 = vadd.f32 %v1046, %v1094
    %v1135 = vadd.f32 %v1047, %v1096
    %v1136 = vadd.f32 %v1048, %v1098
    %v1137 = vadd.f32 %v1049, %v1100
    %v1138 = vadd.f32 %v1050, %v1102
    %v1139 = vadd.f32 %v1051, %v1104
    %v1140 = vadd.f32 %v1052, %v1106
    %v1141 = vadd.f32 %v1053, %v1108
    %v1142 = vadd.f32 %v1054, %v1110
    %v1143 = vadd.f32 %v1055, %v1112
    %v1144 = vadd.f32 %v1056, %v1114
    %v1145 = vadd.f32 %v1057, %v1116
    %v1146 = vadd.f32 %v1058, %v1118
    %1147 = vset.pattern.permute.xlu0 6
    %1148 = vperm.xlu0 %1147, %v630
    %v1149 = vpop.permute.xlu0 %1148
    %v1151 = vmul.f32 %v1149, %v802
    %v1152 = vmul.f32 %v1149, %v806
    %v1153 = vmul.f32 %v1149, %v810
    %v1154 = vmul.f32 %v1149, %v814
    %v1155 = vmul.f32 %v1149, %v818
    %v1156 = vmul.f32 %v1149, %v822
    %v1157 = vmul.f32 %v1149, %v826
    %v1158 = vmul.f32 %v1149, %v830
    %v1159 = vmul.f32 %v1149, %v834
    %v1160 = vmul.f32 %v1149, %v838
    %v1161 = vmul.f32 %v1149, %v842
    %v1162 = vmul.f32 %v1149, %v846
    %v1163 = vmul.f32 %v1149, %v850
    %v1164 = vmul.f32 %v1149, %v854
    %1179 = vrot.lane.b32.xlu0 %v1151, 127
    %v1180 = vpop.permute.xlu0 %1179
    %1181 = vrot.lane.b32.xlu0 %v1152, 127
    %v1182 = vpop.permute.xlu0 %1181
    %1183 = vrot.lane.b32.xlu0 %v1153, 127
    %v1184 = vpop.permute.xlu0 %1183
    %1185 = vrot.lane.b32.xlu0 %v1154, 127
    %v1186 = vpop.permute.xlu0 %1185
    %1187 = vrot.lane.b32.xlu0 %v1155, 127
    %v1188 = vpop.permute.xlu0 %1187
    %1189 = vrot.lane.b32.xlu0 %v1156, 127
    %v1190 = vpop.permute.xlu0 %1189
    %1191 = vrot.lane.b32.xlu0 %v1157, 127
    %v1192 = vpop.permute.xlu0 %1191
    %1193 = vrot.lane.b32.xlu0 %v1158, 127
    %v1194 = vpop.permute.xlu0 %1193
    %1195 = vrot.lane.b32.xlu0 %v1159, 127
    %v1196 = vpop.permute.xlu0 %1195
    %1197 = vrot.lane.b32.xlu0 %v1160, 127
    %v1198 = vpop.permute.xlu0 %1197
    %1199 = vrot.lane.b32.xlu0 %v1161, 127
    %v1200 = vpop.permute.xlu0 %1199
    %1201 = vrot.lane.b32.xlu0 %v1162, 127
    %v1202 = vpop.permute.xlu0 %1201
    %1203 = vrot.lane.b32.xlu0 %v1163, 127
    %v1204 = vpop.permute.xlu0 %1203
    %1205 = vrot.lane.b32.xlu0 %v1164, 127
    %v1206 = vpop.permute.xlu0 %1205
    %v1221 = vadd.f32 %v1133, %v1180
    %v1222 = vadd.f32 %v1134, %v1182
    %v1223 = vadd.f32 %v1135, %v1184
    %v1224 = vadd.f32 %v1136, %v1186
    %v1225 = vadd.f32 %v1137, %v1188
    %v1226 = vadd.f32 %v1138, %v1190
    %v1227 = vadd.f32 %v1139, %v1192
    %v1228 = vadd.f32 %v1140, %v1194
    %v1229 = vadd.f32 %v1141, %v1196
    %v1230 = vadd.f32 %v1142, %v1198
    %v1231 = vadd.f32 %v1143, %v1200
    %v1232 = vadd.f32 %v1144, %v1202
    %v1233 = vadd.f32 %v1145, %v1204
    %v1234 = vadd.f32 %v1146, %v1206
    %1235 = vset.pattern.permute.xlu0 7
    %1236 = vperm.xlu0 %1235, %v630
    %v1237 = vpop.permute.xlu0 %1236
    %v1239 = vmul.f32 %v1237, %v890
    %v1240 = vmul.f32 %v1237, %v894
    %v1241 = vmul.f32 %v1237, %v898
    %v1242 = vmul.f32 %v1237, %v902
    %v1243 = vmul.f32 %v1237, %v906
    %v1244 = vmul.f32 %v1237, %v910
    %v1245 = vmul.f32 %v1237, %v914
    %v1246 = vmul.f32 %v1237, %v918
    %v1247 = vmul.f32 %v1237, %v922
    %v1248 = vmul.f32 %v1237, %v926
    %v1249 = vmul.f32 %v1237, %v930
    %v1250 = vmul.f32 %v1237, %v934
    %v1251 = vmul.f32 %v1237, %v938
    %v1252 = vmul.f32 %v1237, %v942
    %1267 = vrot.lane.b32.xlu0 %v1239, 127
    %v1268 = vpop.permute.xlu0 %1267
    %1269 = vrot.lane.b32.xlu0 %v1240, 127
    %v1270 = vpop.permute.xlu0 %1269
    %1271 = vrot.lane.b32.xlu0 %v1241, 127
    %v1272 = vpop.permute.xlu0 %1271
    %1273 = vrot.lane.b32.xlu0 %v1242, 127
    %v1274 = vpop.permute.xlu0 %1273
    %1275 = vrot.lane.b32.xlu0 %v1243, 127
    %v1276 = vpop.permute.xlu0 %1275
    %1277 = vrot.lane.b32.xlu0 %v1244, 127
    %v1278 = vpop.permute.xlu0 %1277
    %1279 = vrot.lane.b32.xlu0 %v1245, 127
    %v1280 = vpop.permute.xlu0 %1279
    %1281 = vrot.lane.b32.xlu0 %v1246, 127
    %v1282 = vpop.permute.xlu0 %1281
    %1283 = vrot.lane.b32.xlu0 %v1247, 127
    %v1284 = vpop.permute.xlu0 %1283
    %1285 = vrot.lane.b32.xlu0 %v1248, 127
    %v1286 = vpop.permute.xlu0 %1285
    %1287 = vrot.lane.b32.xlu0 %v1249, 127
    %v1288 = vpop.permute.xlu0 %1287
    %1289 = vrot.lane.b32.xlu0 %v1250, 127
    %v1290 = vpop.permute.xlu0 %1289
    %1291 = vrot.lane.b32.xlu0 %v1251, 127
    %v1292 = vpop.permute.xlu0 %1291
    %1293 = vrot.lane.b32.xlu0 %v1252, 127
    %v1294 = vpop.permute.xlu0 %1293
    %v1309 = vadd.f32 %v1221, %v1268
    %v1310 = vadd.f32 %v1222, %v1270
    %v1311 = vadd.f32 %v1223, %v1272
    %v1312 = vadd.f32 %v1224, %v1274
    %v1313 = vadd.f32 %v1225, %v1276
    %v1314 = vadd.f32 %v1226, %v1278
    %v1315 = vadd.f32 %v1227, %v1280
    %v1316 = vadd.f32 %v1228, %v1282
    %v1317 = vadd.f32 %v1229, %v1284
    %v1318 = vadd.f32 %v1230, %v1286
    %v1319 = vadd.f32 %v1231, %v1288
    %v1320 = vadd.f32 %v1232, %v1290
    %v1321 = vadd.f32 %v1233, %v1292
    %v1322 = vadd.f32 %v1234, %v1294
    %1323 = vset.pattern.permute.xlu0 8
    %1324 = vperm.xlu0 %1323, %v630
    %v1325 = vpop.permute.xlu0 %1324
    %v1327 = vmul.f32 %v1325, %v640
    %v1328 = vmul.f32 %v1325, %v644
    %v1329 = vmul.f32 %v1325, %v648
    %v1330 = vmul.f32 %v1325, %v652
    %v1331 = vmul.f32 %v1325, %v656
    %v1332 = vmul.f32 %v1325, %v660
    %v1333 = vmul.f32 %v1325, %v664
    %v1334 = vmul.f32 %v1325, %v668
    %v1335 = vmul.f32 %v1325, %v672
    %v1336 = vmul.f32 %v1325, %v676
    %v1337 = vmul.f32 %v1325, %v680
    %v1338 = vmul.f32 %v1325, %v684
    %v1339 = vmul.f32 %v1325, %v688
    %v1340 = vmul.f32 %v1325, %v692
    %1355 = vrot.lane.b32.xlu0 %v1327, 126
    %v1356 = vpop.permute.xlu0 %1355
    %1357 = vrot.lane.b32.xlu0 %v1328, 126
    %v1358 = vpop.permute.xlu0 %1357
    %1359 = vrot.lane.b32.xlu0 %v1329, 126
    %v1360 = vpop.permute.xlu0 %1359
    %1361 = vrot.lane.b32.xlu0 %v1330, 126
    %v1362 = vpop.permute.xlu0 %1361
    %1363 = vrot.lane.b32.xlu0 %v1331, 126
    %v1364 = vpop.permute.xlu0 %1363
    %1365 = vrot.lane.b32.xlu0 %v1332, 126
    %v1366 = vpop.permute.xlu0 %1365
    %1367 = vrot.lane.b32.xlu0 %v1333, 126
    %v1368 = vpop.permute.xlu0 %1367
    %1369 = vrot.lane.b32.xlu0 %v1334, 126
    %v1370 = vpop.permute.xlu0 %1369
    %1371 = vrot.lane.b32.xlu0 %v1335, 126
    %v1372 = vpop.permute.xlu0 %1371
    %1373 = vrot.lane.b32.xlu0 %v1336, 126
    %v1374 = vpop.permute.xlu0 %1373
    %1375 = vrot.lane.b32.xlu0 %v1337, 126
    %v1376 = vpop.permute.xlu0 %1375
    %1377 = vrot.lane.b32.xlu0 %v1338, 126
    %v1378 = vpop.permute.xlu0 %1377
    %1379 = vrot.lane.b32.xlu0 %v1339, 126
    %v1380 = vpop.permute.xlu0 %1379
    %1381 = vrot.lane.b32.xlu0 %v1340, 126
    %v1382 = vpop.permute.xlu0 %1381
    %v1397 = vadd.f32 %v1309, %v1356
    %v1398 = vadd.f32 %v1310, %v1358
    %v1399 = vadd.f32 %v1311, %v1360
    %v1400 = vadd.f32 %v1312, %v1362
    %v1401 = vadd.f32 %v1313, %v1364
    %v1402 = vadd.f32 %v1314, %v1366
    %v1403 = vadd.f32 %v1315, %v1368
    %v1404 = vadd.f32 %v1316, %v1370
    %v1405 = vadd.f32 %v1317, %v1372
    %v1406 = vadd.f32 %v1318, %v1374
    %v1407 = vadd.f32 %v1319, %v1376
    %v1408 = vadd.f32 %v1320, %v1378
    %v1409 = vadd.f32 %v1321, %v1380
    %v1410 = vadd.f32 %v1322, %v1382
    %1411 = vset.pattern.permute.xlu0 9
    %1412 = vperm.xlu0 %1411, %v630
    %v1413 = vpop.permute.xlu0 %1412
    %v1415 = vmul.f32 %v1413, %v714
    %v1416 = vmul.f32 %v1413, %v718
    %v1417 = vmul.f32 %v1413, %v722
    %v1418 = vmul.f32 %v1413, %v726
    %v1419 = vmul.f32 %v1413, %v730
    %v1420 = vmul.f32 %v1413, %v734
    %v1421 = vmul.f32 %v1413, %v738
    %v1422 = vmul.f32 %v1413, %v742
    %v1423 = vmul.f32 %v1413, %v746
    %v1424 = vmul.f32 %v1413, %v750
    %v1425 = vmul.f32 %v1413, %v754
    %v1426 = vmul.f32 %v1413, %v758
    %v1427 = vmul.f32 %v1413, %v762
    %v1428 = vmul.f32 %v1413, %v766
    %1443 = vrot.lane.b32.xlu0 %v1415, 126
    %v1444 = vpop.permute.xlu0 %1443
    %1445 = vrot.lane.b32.xlu0 %v1416, 126
    %v1446 = vpop.permute.xlu0 %1445
    %1447 = vrot.lane.b32.xlu0 %v1417, 126
    %v1448 = vpop.permute.xlu0 %1447
    %1449 = vrot.lane.b32.xlu0 %v1418, 126
    %v1450 = vpop.permute.xlu0 %1449
    %1451 = vrot.lane.b32.xlu0 %v1419, 126
    %v1452 = vpop.permute.xlu0 %1451
    %1453 = vrot.lane.b32.xlu0 %v1420, 126
    %v1454 = vpop.permute.xlu0 %1453
    %1455 = vrot.lane.b32.xlu0 %v1421, 126
    %v1456 = vpop.permute.xlu0 %1455
    %1457 = vrot.lane.b32.xlu0 %v1422, 126
    %v1458 = vpop.permute.xlu0 %1457
    %1459 = vrot.lane.b32.xlu0 %v1423, 126
    %v1460 = vpop.permute.xlu0 %1459
    %1461 = vrot.lane.b32.xlu0 %v1424, 126
    %v1462 = vpop.permute.xlu0 %1461
    %1463 = vrot.lane.b32.xlu0 %v1425, 126
    %v1464 = vpop.permute.xlu0 %1463
    %1465 = vrot.lane.b32.xlu0 %v1426, 126
    %v1466 = vpop.permute.xlu0 %1465
    %1467 = vrot.lane.b32.xlu0 %v1427, 126
    %v1468 = vpop.permute.xlu0 %1467
    %1469 = vrot.lane.b32.xlu0 %v1428, 126
    %v1470 = vpop.permute.xlu0 %1469
    %v1485 = vadd.f32 %v1397, %v1444
    %v1486 = vadd.f32 %v1398, %v1446
    %v1487 = vadd.f32 %v1399, %v1448
    %v1488 = vadd.f32 %v1400, %v1450
    %v1489 = vadd.f32 %v1401, %v1452
    %v1490 = vadd.f32 %v1402, %v1454
    %v1491 = vadd.f32 %v1403, %v1456
    %v1492 = vadd.f32 %v1404, %v1458
    %v1493 = vadd.f32 %v1405, %v1460
    %v1494 = vadd.f32 %v1406, %v1462
    %v1495 = vadd.f32 %v1407, %v1464
    %v1496 = vadd.f32 %v1408, %v1466
    %v1497 = vadd.f32 %v1409, %v1468
    %v1498 = vadd.f32 %v1410, %v1470
    %1499 = vset.pattern.permute.xlu0 10
    %1500 = vperm.xlu0 %1499, %v630
    %v1501 = vpop.permute.xlu0 %1500
    %v1503 = vmul.f32 %v1501, %v802
    %v1504 = vmul.f32 %v1501, %v806
    %v1505 = vmul.f32 %v1501, %v810
    %v1506 = vmul.f32 %v1501, %v814
    %v1507 = vmul.f32 %v1501, %v818
    %v1508 = vmul.f32 %v1501, %v822
    %v1509 = vmul.f32 %v1501, %v826
    %v1510 = vmul.f32 %v1501, %v830
    %v1511 = vmul.f32 %v1501, %v834
    %v1512 = vmul.f32 %v1501, %v838
    %v1513 = vmul.f32 %v1501, %v842
    %v1514 = vmul.f32 %v1501, %v846
    %v1515 = vmul.f32 %v1501, %v850
    %v1516 = vmul.f32 %v1501, %v854
    %1531 = vrot.lane.b32.xlu0 %v1503, 126
    %v1532 = vpop.permute.xlu0 %1531
    %1533 = vrot.lane.b32.xlu0 %v1504, 126
    %v1534 = vpop.permute.xlu0 %1533
    %1535 = vrot.lane.b32.xlu0 %v1505, 126
    %v1536 = vpop.permute.xlu0 %1535
    %1537 = vrot.lane.b32.xlu0 %v1506, 126
    %v1538 = vpop.permute.xlu0 %1537
    %1539 = vrot.lane.b32.xlu0 %v1507, 126
    %v1540 = vpop.permute.xlu0 %1539
    %1541 = vrot.lane.b32.xlu0 %v1508, 126
    %v1542 = vpop.permute.xlu0 %1541
    %1543 = vrot.lane.b32.xlu0 %v1509, 126
    %v1544 = vpop.permute.xlu0 %1543
    %1545 = vrot.lane.b32.xlu0 %v1510, 126
    %v1546 = vpop.permute.xlu0 %1545
    %1547 = vrot.lane.b32.xlu0 %v1511, 126
    %v1548 = vpop.permute.xlu0 %1547
    %1549 = vrot.lane.b32.xlu0 %v1512, 126
    %v1550 = vpop.permute.xlu0 %1549
    %1551 = vrot.lane.b32.xlu0 %v1513, 126
    %v1552 = vpop.permute.xlu0 %1551
    %1553 = vrot.lane.b32.xlu0 %v1514, 126
    %v1554 = vpop.permute.xlu0 %1553
    %1555 = vrot.lane.b32.xlu0 %v1515, 126
    %v1556 = vpop.permute.xlu0 %1555
    %1557 = vrot.lane.b32.xlu0 %v1516, 126
    %v1558 = vpop.permute.xlu0 %1557
    %v1573 = vadd.f32 %v1485, %v1532
    %v1574 = vadd.f32 %v1486, %v1534
    %v1575 = vadd.f32 %v1487, %v1536
    %v1576 = vadd.f32 %v1488, %v1538
    %v1577 = vadd.f32 %v1489, %v1540
    %v1578 = vadd.f32 %v1490, %v1542
    %v1579 = vadd.f32 %v1491, %v1544
    %v1580 = vadd.f32 %v1492, %v1546
    %v1581 = vadd.f32 %v1493, %v1548
    %v1582 = vadd.f32 %v1494, %v1550
    %v1583 = vadd.f32 %v1495, %v1552
    %v1584 = vadd.f32 %v1496, %v1554
    %v1585 = vadd.f32 %v1497, %v1556
    %v1586 = vadd.f32 %v1498, %v1558
    %1587 = vset.pattern.permute.xlu0 11
    %1588 = vperm.xlu0 %1587, %v630
    %v1589 = vpop.permute.xlu0 %1588
    %v1591 = vmul.f32 %v1589, %v890
    %v1592 = vmul.f32 %v1589, %v894
    %v1593 = vmul.f32 %v1589, %v898
    %v1594 = vmul.f32 %v1589, %v902
    %v1595 = vmul.f32 %v1589, %v906
    %v1596 = vmul.f32 %v1589, %v910
    %v1597 = vmul.f32 %v1589, %v914
    %v1598 = vmul.f32 %v1589, %v918
    %v1599 = vmul.f32 %v1589, %v922
    %v1600 = vmul.f32 %v1589, %v926
    %v1601 = vmul.f32 %v1589, %v930
    %v1602 = vmul.f32 %v1589, %v934
    %v1603 = vmul.f32 %v1589, %v938
    %v1604 = vmul.f32 %v1589, %v942
    %1619 = vrot.lane.b32.xlu0 %v1591, 126
    %v1620 = vpop.permute.xlu0 %1619
    %1621 = vrot.lane.b32.xlu0 %v1592, 126
    %v1622 = vpop.permute.xlu0 %1621
    %1623 = vrot.lane.b32.xlu0 %v1593, 126
    %v1624 = vpop.permute.xlu0 %1623
    %1625 = vrot.lane.b32.xlu0 %v1594, 126
    %v1626 = vpop.permute.xlu0 %1625
    %1627 = vrot.lane.b32.xlu0 %v1595, 126
    %v1628 = vpop.permute.xlu0 %1627
    %1629 = vrot.lane.b32.xlu0 %v1596, 126
    %v1630 = vpop.permute.xlu0 %1629
    %1631 = vrot.lane.b32.xlu0 %v1597, 126
    %v1632 = vpop.permute.xlu0 %1631
    %1633 = vrot.lane.b32.xlu0 %v1598, 126
    %v1634 = vpop.permute.xlu0 %1633
    %1635 = vrot.lane.b32.xlu0 %v1599, 126
    %v1636 = vpop.permute.xlu0 %1635
    %1637 = vrot.lane.b32.xlu0 %v1600, 126
    %v1638 = vpop.permute.xlu0 %1637
    %1639 = vrot.lane.b32.xlu0 %v1601, 126
    %v1640 = vpop.permute.xlu0 %1639
    %1641 = vrot.lane.b32.xlu0 %v1602, 126
    %v1642 = vpop.permute.xlu0 %1641
    %1643 = vrot.lane.b32.xlu0 %v1603, 126
    %v1644 = vpop.permute.xlu0 %1643
    %1645 = vrot.lane.b32.xlu0 %v1604, 126
    %v1646 = vpop.permute.xlu0 %1645
    %v1661 = vadd.f32 %v1573, %v1620
    %v1662 = vadd.f32 %v1574, %v1622
    %v1663 = vadd.f32 %v1575, %v1624
    %v1664 = vadd.f32 %v1576, %v1626
    %v1665 = vadd.f32 %v1577, %v1628
    %v1666 = vadd.f32 %v1578, %v1630
    %v1667 = vadd.f32 %v1579, %v1632
    %v1668 = vadd.f32 %v1580, %v1634
    %v1669 = vadd.f32 %v1581, %v1636
    %v1670 = vadd.f32 %v1582, %v1638
    %v1671 = vadd.f32 %v1583, %v1640
    %v1672 = vadd.f32 %v1584, %v1642
    %v1673 = vadd.f32 %v1585, %v1644
    %v1674 = vadd.f32 %v1586, %v1646
    %1676 = vset.pattern.permute.xlu0 0
    %1677 = vperm.xlu0 %1676, %v631
    %v1678 = vpop.permute.xlu0 %1677
    %v1680 = vadd.f32 %v1661, %v1678
    %v1681 = vadd.f32 %v1662, %v1678
    %v1682 = vadd.f32 %v1663, %v1678
    %v1683 = vadd.f32 %v1664, %v1678
    %v1684 = vadd.f32 %v1665, %v1678
    %v1685 = vadd.f32 %v1666, %v1678
    %v1686 = vadd.f32 %v1667, %v1678
    %v1687 = vadd.f32 %v1668, %v1678
    %v1688 = vadd.f32 %v1669, %v1678
    %v1689 = vadd.f32 %v1670, %v1678
    %v1690 = vadd.f32 %v1671, %v1678
    %v1691 = vadd.f32 %v1672, %v1678
    %v1692 = vadd.f32 %v1673, %v1678
    %v1693 = vadd.f32 %v1674, %v1678
    %v1694 = vmax.f32 %v1680, 0.0
    %v1695 = vmax.f32 %v1681, 0.0
    %v1696 = vmax.f32 %v1682, 0.0
    %v1697 = vmax.f32 %v1683, 0.0
    %v1698 = vmax.f32 %v1684, 0.0
    %v1699 = vmax.f32 %v1685, 0.0
    %v1700 = vmax.f32 %v1686, 0.0
    %v1701 = vmax.f32 %v1687, 0.0
    %v1702 = vmax.f32 %v1688, 0.0
    %v1703 = vmax.f32 %v1689, 0.0
    %v1704 = vmax.f32 %v1690, 0.0
    %v1705 = vmax.f32 %v1691, 0.0
    %v1706 = vmax.f32 %v1692, 0.0
    %v1707 = vmax.f32 %v1693, 0.0
    %v1708 = vld [vmem:[%s10] sm:$0x1f]
    %v1709 = vld [vmem:[#allocation9] sm:$0x1]
    %v1711 = vlaneseq
    %v1712 = vshrl.u32 %v1711, 7
    %v1713 = vsub.s32 0, %v1712
    %v1714 = vrot.slane %v1709, %v1713
    %vm1716 = vcmask 39936
    %v1718 = vsel %vm1716, %v1694, 0
    %v1721 = vsel %vm1716, %v1695, 0
    %v1724 = vsel %vm1716, %v1696, 0
    %v1727 = vsel %vm1716, %v1697, 0
    %v1730 = vsel %vm1716, %v1698, 0
    %v1733 = vsel %vm1716, %v1699, 0
    %v1736 = vsel %vm1716, %v1700, 0
    %v1739 = vsel %vm1716, %v1701, 0
    %v1742 = vsel %vm1716, %v1702, 0
    %v1745 = vsel %vm1716, %v1703, 0
    %v1748 = vsel %vm1716, %v1704, 0
    %v1751 = vsel %vm1716, %v1705, 0
    %v1754 = vsel %vm1716, %v1706, 0
    %v1757 = vsel %vm1716, %v1707, 0
    %vm1759 = vcmask 1044480
    %v1761 = vsel %vm1759, %v1708, 0
    %1763 = vmatprep.subr.mxu0 0.0
    %1764 = vmatpush1.msra.mxu0 %v1761
    %1765 = vmatprep.subr.mxu0 0.0
    %1766 = vmatpush1.msra.mxu0 0.0
    %1767 = vmatprep.subr.mxu0 0.0
    %1768 = vmatpush1.msra.mxu0 0.0
    %1769 = vmatprep.subr.mxu0 0.0
    %1770 = vmatpush1.msra.mxu0 0.0
    %1771 = vmatprep.subr.mxu0 0.0
    %1772 = vmatpush1.msra.mxu0 0.0
    %1773 = vmatprep.subr.mxu0 0.0
    %1774 = vmatpush1.msra.mxu0 0.0
    %1775 = vmatprep.subr.mxu0 0.0
    %1776 = vmatpush1.msra.mxu0 0.0
    %1777 = vmatprep.subr.mxu0 0.0
    %1778 = vmatpush1.msra.mxu0 0.0
    %1779 = vmatprep.subr.mxu0 0.0
    %1780 = vmatpush1.msra.mxu0 0.0
    %1781 = vmatprep.subr.mxu0 0.0
    %1782 = vmatpush1.msra.mxu0 0.0
    %1783 = vmatprep.subr.mxu0 0.0
    %1784 = vmatpush1.msra.mxu0 0.0
    %1785 = vmatprep.subr.mxu0 0.0
    %1786 = vmatpush1.msra.mxu0 0.0
    %1787 = vmatprep.subr.mxu0 0.0
    %1788 = vmatpush1.msra.mxu0 0.0
    %1789 = vmatprep.subr.mxu0 0.0
    %1790 = vmatpush1.msra.mxu0 0.0
    %1791 = vmatprep.subr.mxu0 0.0
    %1792 = vmatpush1.msra.mxu0 0.0
    %1793 = vmatprep.subr.mxu0 0.0
    %1794 = vmatpush1.msra.mxu0 0.0
    %1795 = vmatprep.subr.mxu0 0.0
    %1796 = vmatpush1.msra.mxu0 0.0
    %1797 = vmatprep.subr.mxu0 0.0
    %1798 = vmatpush1.msra.mxu0 0.0
    %1799 = vmatprep.subr.mxu0 0.0
    %1800 = vmatpush1.msra.mxu0 0.0
    %1801 = vmatprep.subr.mxu0 0.0
    %1802 = vmatpush1.msra.mxu0 0.0
    %1803 = vmatprep.subr.mxu0 0.0
    %1804 = vmatpush1.msra.mxu0 0.0
    %1805 = vmatprep.subr.mxu0 0.0
    %1806 = vmatpush1.msra.mxu0 0.0
    %1807 = vmatprep.subr.mxu0 0.0
    %1808 = vmatpush1.msra.mxu0 0.0
    %1809 = vmatprep.subr.mxu0 0.0
    %1810 = vmatpush1.msra.mxu0 0.0
    %1811 = vmatprep.subr.mxu0 0.0
    %1812 = vmatpush1.msra.mxu0 0.0
    %1813 = vmatprep.subr.mxu0 0.0
    %1814 = vmatpush1.msra.mxu0 0.0
    %1815 = vmatprep.subr.mxu0 0.0
    %1816 = vmatpush1.msra.mxu0 0.0
    %1817 = vmatprep.subr.mxu0 0.0
    %1818 = vmatpush1.msra.mxu0 0.0
    %1819 = vmatprep.subr.mxu0 0.0
    %1820 = vmatpush1.msra.mxu0 0.0
    %1821 = vmatprep.subr.mxu0 0.0
    %1822 = vmatpush1.msra.mxu0 0.0
    %1823 = vmatprep.subr.mxu0 0.0
    %1824 = vmatpush1.msra.mxu0 0.0
    %1825 = vmatprep.subr.mxu0 0.0
    %1826 = vmatpush1.msra.mxu0 0.0
    %1827 = vmatprep.mubr.f32.mxu0 0.0
    %1828 = vmatmul.mubr.f32.gmra.mrb[0].mxu0 %v1718
    %v1829 = vpop.f32.mrb[0].mxu0
    %v1830 = vadd.f32 %v1714, %v1829
    %v1831 = vpop.f32.mrb[0].mxu0
    %1832 = vmatprep.mubr.f32.mxu0 0.0
    %1833 = vmatmul.mubr.f32.gmra.mrb[0].mxu0 %v1721
    %v1834 = vpop.f32.mrb[0].mxu0
    %v1835 = vadd.f32 %v1714, %v1834
    %v1836 = vpop.f32.mrb[0].mxu0
    %1837 = vmatprep.mubr.f32.mxu0 0.0
    %1838 = vmatmul.mubr.f32.gmra.mrb[0].mxu0 %v1724
    %v1839 = vpop.f32.mrb[0].mxu0
    %v1840 = vadd.f32 %v1714, %v1839
    %v1841 = vpop.f32.mrb[0].mxu0
    %1842 = vmatprep.mubr.f32.mxu0 0.0
    %1843 = vmatmul.mubr.f32.gmra.mrb[0].mxu0 %v1727
    %v1844 = vpop.f32.mrb[0].mxu0
    %v1845 = vadd.f32 %v1714, %v1844
    %v1846 = vpop.f32.mrb[0].mxu0
    %1847 = vmatprep.mubr.f32.mxu0 0.0
    %1848 = vmatmul.mubr.f32.gmra.mrb[0].mxu0 %v1730
    %v1849 = vpop.f32.mrb[0].mxu0
    %v1850 = vadd.f32 %v1714, %v1849
    %v1851 = vpop.f32.mrb[0].mxu0
    %1852 = vmatprep.mubr.f32.mxu0 0.0
    %1853 = vmatmul.mubr.f32.gmra.mrb[0].mxu0 %v1733
    %v1854 = vpop.f32.mrb[0].mxu0
    %v1855 = vadd.f32 %v1714, %v1854
    %v1856 = vpop.f32.mrb[0].mxu0
    %1857 = vmatprep.mubr.f32.mxu0 0.0
    %1858 = vmatmul.mubr.f32.gmra.mrb[0].mxu0 %v1736
    %v1859 = vpop.f32.mrb[0].mxu0
    %v1860 = vadd.f32 %v1714, %v1859
    %v1861 = vpop.f32.mrb[0].mxu0
    %1862 = vmatprep.mubr.f32.mxu0 0.0
    %1863 = vmatmul.mubr.f32.gmra.mrb[0].mxu0 %v1739
    %v1864 = vpop.f32.mrb[0].mxu0
    %v1865 = vadd.f32 %v1714, %v1864
    %v1866 = vpop.f32.mrb[0].mxu0
    %1867 = vmatprep.mubr.f32.mxu0 0.0
    %1868 = vmatmul.mubr.f32.gmra.mrb[0].mxu0 %v1742
    %v1869 = vpop.f32.mrb[0].mxu0
    %v1870 = vadd.f32 %v1714, %v1869
    %v1871 = vpop.f32.mrb[0].mxu0
    %1872 = vmatprep.mubr.f32.mxu0 0.0
    %1873 = vmatmul.mubr.f32.gmra.mrb[0].mxu0 %v1745
    %v1874 = vpop.f32.mrb[0].mxu0
    %v1875 = vadd.f32 %v1714, %v1874
    %v1876 = vpop.f32.mrb[0].mxu0
    %1877 = vmatprep.mubr.f32.mxu0 0.0
    %1878 = vmatmul.mubr.f32.gmra.mrb[0].mxu0 %v1748
    %v1879 = vpop.f32.mrb[0].mxu0
    %v1880 = vadd.f32 %v1714, %v1879
    %v1881 = vpop.f32.mrb[0].mxu0
    %1882 = vmatprep.mubr.f32.mxu0 0.0
    %1883 = vmatmul.mubr.f32.gmra.mrb[0].mxu0 %v1751
    %v1884 = vpop.f32.mrb[0].mxu0
    %v1885 = vadd.f32 %v1714, %v1884
    %v1886 = vpop.f32.mrb[0].mxu0
    %1887 = vmatprep.mubr.f32.mxu0 0.0
    %1888 = vmatmul.mubr.f32.gmra.mrb[0].mxu0 %v1754
    %v1889 = vpop.f32.mrb[0].mxu0
    %v1890 = vadd.f32 %v1714, %v1889
    %v1891 = vpop.f32.mrb[0].mxu0
    %1892 = vmatprep.mubr.f32.mxu0 0.0
    %1893 = vmatmul.mubr.f32.gmra.mrb[0].mxu0 %v1757
    %v1894 = vpop.f32.mrb[0].mxu0
    %v1895 = vadd.f32 %v1714, %v1894
    %v1896 = vpop.f32.mrb[0].mxu0
    %1897 = vdwg.mxu0
    %v1898 = vld [vmem:[%s11] sm:$0xff]
    %v1899 = vld [vmem:[%s11 + $0x8] sm:$0xff]
    %v1900 = vld [vmem:[#allocation11] sm:$0x1]
    %v1901 = vld [vmem:[%s16] sm:$0xff]
    %v1902 = vld [vmem:[%s17] sm:$0xff]
    %v1904 = vlaneseq
    %v1905 = vshrl.u32 %v1904, 7
    %v1906 = vsub.s32 0, %v1905
    %v1907 = vrot.slane %v1900, %v1906
    %vm1909 = vcmask 130048
    %v1911 = vsel %vm1909, %v1901, 0
    %v1914 = vsel %vm1909, %v1902, 0
    %1916 = vmatprep.subr.mxu0 0.0
    %1917 = vmatpush1.msra.mxu0 %v1898
    %1918 = vmatprep.subr.mxu0 0.0
    %1919 = vmatpush1.msra.mxu0 %v1899
    %1920 = vmatprep.subr.mxu0 0.0
    %1921 = vmatpush1.msra.mxu0 0.0
    %1922 = vmatprep.subr.mxu0 0.0
    %1923 = vmatpush1.msra.mxu0 0.0
    %1924 = vmatprep.subr.mxu0 0.0
    %1925 = vmatpush1.msra.mxu0 0.0
    %1926 = vmatprep.subr.mxu0 0.0
    %1927 = vmatpush1.msra.mxu0 0.0
    %1928 = vmatprep.subr.mxu0 0.0
    %1929 = vmatpush1.msra.mxu0 0.0
    %1930 = vmatprep.subr.mxu0 0.0
    %1931 = vmatpush1.msra.mxu0 0.0
    %1932 = vmatprep.subr.mxu0 0.0
    %1933 = vmatpush1.msra.mxu0 0.0
    %1934 = vmatprep.subr.mxu0 0.0
    %1935 = vmatpush1.msra.mxu0 0.0
    %1936 = vmatprep.subr.mxu0 0.0
    %1937 = vmatpush1.msra.mxu0 0.0
    %1938 = vmatprep.subr.mxu0 0.0
    %1939 = vmatpush1.msra.mxu0 0.0
    %1940 = vmatprep.subr.mxu0 0.0
    %1941 = vmatpush1.msra.mxu0 0.0
    %1942 = vmatprep.subr.mxu0 0.0
    %1943 = vmatpush1.msra.mxu0 0.0
    %1944 = vmatprep.subr.mxu0 0.0
    %1945 = vmatpush1.msra.mxu0 0.0
    %1946 = vmatprep.subr.mxu0 0.0
    %1947 = vmatpush1.msra.mxu0 0.0
    %1948 = vmatprep.subr.mxu0 0.0
    %1949 = vmatpush1.msra.mxu0 0.0
    %1950 = vmatprep.subr.mxu0 0.0
    %1951 = vmatpush1.msra.mxu0 0.0
    %1952 = vmatprep.subr.mxu0 0.0
    %1953 = vmatpush1.msra.mxu0 0.0
    %1954 = vmatprep.subr.mxu0 0.0
    %1955 = vmatpush1.msra.mxu0 0.0
    %1956 = vmatprep.subr.mxu0 0.0
    %1957 = vmatpush1.msra.mxu0 0.0
    %1958 = vmatprep.subr.mxu0 0.0
    %1959 = vmatpush1.msra.mxu0 0.0
    %1960 = vmatprep.subr.mxu0 0.0
    %1961 = vmatpush1.msra.mxu0 0.0
    %1962 = vmatprep.subr.mxu0 0.0
    %1963 = vmatpush1.msra.mxu0 0.0
    %1964 = vmatprep.subr.mxu0 0.0
    %1965 = vmatpush1.msra.mxu0 0.0
    %1966 = vmatprep.subr.mxu0 0.0
    %1967 = vmatpush1.msra.mxu0 0.0
    %1968 = vmatprep.subr.mxu0 0.0
    %1969 = vmatpush1.msra.mxu0 0.0
    %1970 = vmatprep.subr.mxu0 0.0
    %1971 = vmatpush1.msra.mxu0 0.0
    %1972 = vmatprep.subr.mxu0 0.0
    %1973 = vmatpush1.msra.mxu0 0.0
    %1974 = vmatprep.subr.mxu0 0.0
    %1975 = vmatpush1.msra.mxu0 0.0
    %1976 = vmatprep.subr.mxu0 0.0
    %1977 = vmatpush1.msra.mxu0 0.0
    %1978 = vmatprep.subr.mxu0 0.0
    %1979 = vmatpush1.msra.mxu0 0.0
    %1980 = vmatprep.mubr.f32.mxu0 0.0
    %1981 = vmatmul.mubr.f32.gmra.mrb[0].mxu0 %v1911
    %v1982 = vpop.f32.mrb[0].mxu0
    %v1983 = vadd.f32 %v1907, %v1982
    %v1984 = vpop.f32.mrb[0].mxu0
    %1985 = vmatprep.mubr.f32.mxu0 0.0
    %1986 = vmatmul.mubr.f32.gmra.mrb[0].mxu0 %v1914
    %v1987 = vpop.f32.mrb[0].mxu0
    %v1988 = vadd.f32 %v1907, %v1987
    %v1989 = vpop.f32.mrb[0].mxu0
    %1990 = vdwg.mxu0
    %v1991 = vadd.f32 %v1830, %v1983
    %v1992 = vadd.f32 %v1870, %v1988
    %v1993 = vxor.u32 %v1991, 2147483648
    %v1994 = vxor.u32 %v1992, 2147483648
    %v1995 = vmul.f32 %v1993, 1.442695
    %v1996 = vpow.pop %v1995
    %v1997 = vmul.f32 %v1994, 1.442695
    %v1998 = vpow.pop %v1997
    %v1999 = vadd.f32 %v1996, 1.0
    %v2000 = vadd.f32 %v1998, 1.0
    %v2001 = vrcp.pop %v1999
    %v2002 = vmul.f32 1.0, %v2001
    %v2003 = vrcp.pop %v2000
    %v2004 = vmul.f32 1.0, %v2003
    %2007 = vrot.lane.b32.xlu0 %v1983, 96
    %v2008 = vpop.permute.xlu0 %2007
    %2009 = vrot.lane.b32.xlu0 %v1988, 96
    %v2010 = vpop.permute.xlu0 %2009
    %v2013 = vmul.f32 %v2002, %v2008
    %v2014 = vmul.f32 %v2004, %v2010
    %2017 = vrot.lane.b32.xlu0 %v2013, 32
    %v2018 = vpop.permute.xlu0 %2017
    %2019 = vrot.lane.b32.xlu0 %v2014, 32
    %v2020 = vpop.permute.xlu0 %2019
    %v2023 = vadd.f32 %v1830, %v2018
    %v2024 = vadd.f32 %v1870, %v2020
    %v2025 = vtanh.pop %v2023
    %v2026 = vtanh.pop %v2024
    %v2027 = vsub.f32 1.0, %v2002
    %v2028 = vsub.f32 1.0, %v2004
    %2031 = vrot.lane.b32.xlu0 %v2025, 112
    %v2032 = vpop.permute.xlu0 %2031
    %2033 = vrot.lane.b32.xlu0 %v2026, 112
    %v2034 = vpop.permute.xlu0 %2033
    %v2037 = vmul.f32 %v2027, %v2032
    %v2038 = vmul.f32 %v2028, %v2034
    %2039 = vrot.lane.b32.xlu0 %v1901, 16
    %v2040 = vpop.permute.xlu0 %2039
    %2041 = vrot.lane.b32.xlu0 %v1902, 16
    %v2042 = vpop.permute.xlu0 %2041
    %v2045 = vmul.f32 %v2002, %v2040
    %v2046 = vmul.f32 %v2004, %v2042
    %v2047 = vadd.f32 %v2037, %v2045
    %v2048 = vadd.f32 %v2038, %v2046
    %2051 = vrot.lane.b32.xlu0 %v2047, 112
    %v2052 = vpop.permute.xlu0 %2051
    %2053 = vrot.lane.b32.xlu0 %v2048, 112
    %v2054 = vpop.permute.xlu0 %2053
    %v2055 = vsel %vm1909, %v2052, 0
    %v2057 = vsel %vm1909, %v2054, 0
    %2059 = vmatprep.subr.mxu0 0.0
    %2060 = vmatpush1.msra.mxu0 %v1898
    %2061 = vmatprep.subr.mxu0 0.0
    %2062 = vmatpush1.msra.mxu0 %v1899
    %2063 = vmatprep.subr.mxu0 0.0
    %2064 = vmatpush1.msra.mxu0 0.0
    %2065 = vmatprep.subr.mxu0 0.0
    %2066 = vmatpush1.msra.mxu0 0.0
    %2067 = vmatprep.subr.mxu0 0.0
    %2068 = vmatpush1.msra.mxu0 0.0
    %2069 = vmatprep.subr.mxu0 0.0
    %2070 = vmatpush1.msra.mxu0 0.0
    %2071 = vmatprep.subr.mxu0 0.0
    %2072 = vmatpush1.msra.mxu0 0.0
    %2073 = vmatprep.subr.mxu0 0.0
    %2074 = vmatpush1.msra.mxu0 0.0
    %2075 = vmatprep.subr.mxu0 0.0
    %2076 = vmatpush1.msra.mxu0 0.0
    %2077 = vmatprep.subr.mxu0 0.0
    %2078 = vmatpush1.msra.mxu0 0.0
    %2079 = vmatprep.subr.mxu0 0.0
    %2080 = vmatpush1.msra.mxu0 0.0
    %2081 = vmatprep.subr.mxu0 0.0
    %2082 = vmatpush1.msra.mxu0 0.0
    %2083 = vmatprep.subr.mxu0 0.0
    %2084 = vmatpush1.msra.mxu0 0.0
    %2085 = vmatprep.subr.mxu0 0.0
    %2086 = vmatpush1.msra.mxu0 0.0
    %2087 = vmatprep.subr.mxu0 0.0
    %2088 = vmatpush1.msra.mxu0 0.0
    %2089 = vmatprep.subr.mxu0 0.0
    %2090 = vmatpush1.msra.mxu0 0.0
    %2091 = vmatprep.subr.mxu0 0.0
    %2092 = vmatpush1.msra.mxu0 0.0
    %2093 = vmatprep.subr.mxu0 0.0
    %2094 = vmatpush1.msra.mxu0 0.0
    %2095 = vmatprep.subr.mxu0 0.0
    %2096 = vmatpush1.msra.mxu0 0.0
    %2097 = vmatprep.subr.mxu0 0.0
    %2098 = vmatpush1.msra.mxu0 0.0
    %2099 = vmatprep.subr.mxu0 0.0
    %2100 = vmatpush1.msra.mxu0 0.0
    %2101 = vmatprep.subr.mxu0 0.0
    %2102 = vmatpush1.msra.mxu0 0.0
    %2103 = vmatprep.subr.mxu0 0.0
    %2104 = vmatpush1.msra.mxu0 0.0
    %2105 = vmatprep.subr.mxu0 0.0
    %2106 = vmatpush1.msra.mxu0 0.0
    %2107 = vmatprep.subr.mxu0 0.0
    %2108 = vmatpush1.msra.mxu0 0.0
    %2109 = vmatprep.subr.mxu0 0.0
    %2110 = vmatpush1.msra.mxu0 0.0
    %2111 = vmatprep.subr.mxu0 0.0
    %2112 = vmatpush1.msra.mxu0 0.0
    %2113 = vmatprep.subr.mxu0 0.0
    %2114 = vmatpush1.msra.mxu0 0.0
    %2115 = vmatprep.subr.mxu0 0.0
    %2116 = vmatpush1.msra.mxu0 0.0
    %2117 = vmatprep.subr.mxu0 0.0
    %2118 = vmatpush1.msra.mxu0 0.0
    %2119 = vmatprep.subr.mxu0 0.0
    %2120 = vmatpush1.msra.mxu0 0.0
    %2121 = vmatprep.subr.mxu0 0.0
    %2122 = vmatpush1.msra.mxu0 0.0
    %2123 = vmatprep.mubr.f32.mxu0 0.0
    %2124 = vmatmul.mubr.f32.gmra.mrb[0].mxu0 %v2055
    %v2125 = vpop.f32.mrb[0].mxu0
    %v2126 = vadd.f32 %v1907, %v2125
    %v2127 = vpop.f32.mrb[0].mxu0
    %2128 = vmatprep.mubr.f32.mxu0 0.0
    %2129 = vmatmul.mubr.f32.gmra.mrb[0].mxu0 %v2057
    %v2130 = vpop.f32.mrb[0].mxu0
    %v2131 = vadd.f32 %v1907, %v2130
    %v2132 = vpop.f32.mrb[0].mxu0
    %2133 = vdwg.mxu0
    %v2134 = vadd.f32 %v1835, %v2126
    %v2135 = vadd.f32 %v1875, %v2131
    %v2136 = vxor.u32 %v2134, 2147483648
    %v2137 = vxor.u32 %v2135, 2147483648
    %v2138 = vmul.f32 %v2136, 1.442695
    %v2139 = vpow.pop %v2138
    %v2140 = vmul.f32 %v2137, 1.442695
    %v2141 = vpow.pop %v2140
    %v2142 = vadd.f32 %v2139, 1.0
    %v2143 = vadd.f32 %v2141, 1.0
    %v2144 = vrcp.pop %v2142
    %v2145 = vmul.f32 1.0, %v2144
    %v2146 = vrcp.pop %v2143
    %v2147 = vmul.f32 1.0, %v2146
    %2150 = vrot.lane.b32.xlu0 %v2126, 96
    %v2151 = vpop.permute.xlu0 %2150
    %2152 = vrot.lane.b32.xlu0 %v2131, 96
    %v2153 = vpop.permute.xlu0 %2152
    %v2156 = vmul.f32 %v2145, %v2151
    %v2157 = vmul.f32 %v2147, %v2153
    %2160 = vrot.lane.b32.xlu0 %v2156, 32
    %v2161 = vpop.permute.xlu0 %2160
    %2162 = vrot.lane.b32.xlu0 %v2157, 32
    %v2163 = vpop.permute.xlu0 %2162
    %v2166 = vadd.f32 %v1835, %v2161
    %v2167 = vadd.f32 %v1875, %v2163
    %v2168 = vtanh.pop %v2166
    %v2169 = vtanh.pop %v2167
    %v2170 = vsub.f32 1.0, %v2145
    %v2171 = vsub.f32 1.0, %v2147
    %2174 = vrot.lane.b32.xlu0 %v2168, 112
    %v2175 = vpop.permute.xlu0 %2174
    %2176 = vrot.lane.b32.xlu0 %v2169, 112
    %v2177 = vpop.permute.xlu0 %2176
    %v2180 = vmul.f32 %v2170, %v2175
    %v2181 = vmul.f32 %v2171, %v2177
    %v2182 = vmul.f32 %v2145, %v2047
    %v2183 = vmul.f32 %v2147, %v2048
    %v2184 = vadd.f32 %v2180, %v2182
    %v2185 = vadd.f32 %v2181, %v2183
    %2188 = vrot.lane.b32.xlu0 %v2184, 112
    %v2189 = vpop.permute.xlu0 %2188
    %2190 = vrot.lane.b32.xlu0 %v2185, 112
    %v2191 = vpop.permute.xlu0 %2190
    %v2192 = vsel %vm1909, %v2189, 0
    %v2194 = vsel %vm1909, %v2191, 0
    %2196 = vmatprep.subr.mxu0 0.0
    %2197 = vmatpush1.msra.mxu0 %v1898
    %2198 = vmatprep.subr.mxu0 0.0
    %2199 = vmatpush1.msra.mxu0 %v1899
    %2200 = vmatprep.subr.mxu0 0.0
    %2201 = vmatpush1.msra.mxu0 0.0
    %2202 = vmatprep.subr.mxu0 0.0
    %2203 = vmatpush1.msra.mxu0 0.0
    %2204 = vmatprep.subr.mxu0 0.0
    %2205 = vmatpush1.msra.mxu0 0.0
    %2206 = vmatprep.subr.mxu0 0.0
    %2207 = vmatpush1.msra.mxu0 0.0
    %2208 = vmatprep.subr.mxu0 0.0
    %2209 = vmatpush1.msra.mxu0 0.0
    %2210 = vmatprep.subr.mxu0 0.0
    %2211 = vmatpush1.msra.mxu0 0.0
    %2212 = vmatprep.subr.mxu0 0.0
    %2213 = vmatpush1.msra.mxu0 0.0
    %2214 = vmatprep.subr.mxu0 0.0
    %2215 = vmatpush1.msra.mxu0 0.0
    %2216 = vmatprep.subr.mxu0 0.0
    %2217 = vmatpush1.msra.mxu0 0.0
    %2218 = vmatprep.subr.mxu0 0.0
    %2219 = vmatpush1.msra.mxu0 0.0
    %2220 = vmatprep.subr.mxu0 0.0
    %2221 = vmatpush1.msra.mxu0 0.0
    %2222 = vmatprep.subr.mxu0 0.0
    %2223 = vmatpush1.msra.mxu0 0.0
    %2224 = vmatprep.subr.mxu0 0.0
    %2225 = vmatpush1.msra.mxu0 0.0
    %2226 = vmatprep.subr.mxu0 0.0
    %2227 = vmatpush1.msra.mxu0 0.0
    %2228 = vmatprep.subr.mxu0 0.0
    %2229 = vmatpush1.msra.mxu0 0.0
    %2230 = vmatprep.subr.mxu0 0.0
    %2231 = vmatpush1.msra.mxu0 0.0
    %2232 = vmatprep.subr.mxu0 0.0
    %2233 = vmatpush1.msra.mxu0 0.0
    %2234 = vmatprep.subr.mxu0 0.0
    %2235 = vmatpush1.msra.mxu0 0.0
    %2236 = vmatprep.subr.mxu0 0.0
    %2237 = vmatpush1.msra.mxu0 0.0
    %2238 = vmatprep.subr.mxu0 0.0
    %2239 = vmatpush1.msra.mxu0 0.0
    %2240 = vmatprep.subr.mxu0 0.0
    %2241 = vmatpush1.msra.mxu0 0.0
    %2242 = vmatprep.subr.mxu0 0.0
    %2243 = vmatpush1.msra.mxu0 0.0
    %2244 = vmatprep.subr.mxu0 0.0
    %2245 = vmatpush1.msra.mxu0 0.0
    %2246 = vmatprep.subr.mxu0 0.0
    %2247 = vmatpush1.msra.mxu0 0.0
    %2248 = vmatprep.subr.mxu0 0.0
    %2249 = vmatpush1.msra.mxu0 0.0
    %2250 = vmatprep.subr.mxu0 0.0
    %2251 = vmatpush1.msra.mxu0 0.0
    %2252 = vmatprep.subr.mxu0 0.0
    %2253 = vmatpush1.msra.mxu0 0.0
    %2254 = vmatprep.subr.mxu0 0.0
    %2255 = vmatpush1.msra.mxu0 0.0
    %2256 = vmatprep.subr.mxu0 0.0
    %2257 = vmatpush1.msra.mxu0 0.0
    %2258 = vmatprep.subr.mxu0 0.0
    %2259 = vmatpush1.msra.mxu0 0.0
    %2260 = vmatprep.mubr.f32.mxu0 0.0
    %2261 = vmatmul.mubr.f32.gmra.mrb[0].mxu0 %v2192
    %v2262 = vpop.f32.mrb[0].mxu0
    %v2263 = vadd.f32 %v1907, %v2262
    %v2264 = vpop.f32.mrb[0].mxu0
    %2265 = vmatprep.mubr.f32.mxu0 0.0
    %2266 = vmatmul.mubr.f32.gmra.mrb[0].mxu0 %v2194
    %v2267 = vpop.f32.mrb[0].mxu0
    %v2268 = vadd.f32 %v1907, %v2267
    %v2269 = vpop.f32.mrb[0].mxu0
    %2270 = vdwg.mxu0
    %v2271 = vadd.f32 %v1840, %v2263
    %v2272 = vadd.f32 %v1880, %v2268
    %v2273 = vxor.u32 %v2271, 2147483648
    %v2274 = vxor.u32 %v2272, 2147483648
    %v2275 = vmul.f32 %v2273, 1.442695
    %v2276 = vpow.pop %v2275
    %v2277 = vmul.f32 %v2274, 1.442695
    %v2278 = vpow.pop %v2277
    %v2279 = vadd.f32 %v2276, 1.0
    %v2280 = vadd.f32 %v2278, 1.0
    %v2281 = vrcp.pop %v2279
    %v2282 = vmul.f32 1.0, %v2281
    %v2283 = vrcp.pop %v2280
    %v2284 = vmul.f32 1.0, %v2283
    %2287 = vrot.lane.b32.xlu0 %v2263, 96
    %v2288 = vpop.permute.xlu0 %2287
    %2289 = vrot.lane.b32.xlu0 %v2268, 96
    %v2290 = vpop.permute.xlu0 %2289
    %v2293 = vmul.f32 %v2282, %v2288
    %v2294 = vmul.f32 %v2284, %v2290
    %2297 = vrot.lane.b32.xlu0 %v2293, 32
    %v2298 = vpop.permute.xlu0 %2297
    %2299 = vrot.lane.b32.xlu0 %v2294, 32
    %v2300 = vpop.permute.xlu0 %2299
    %v2303 = vadd.f32 %v1840, %v2298
    %v2304 = vadd.f32 %v1880, %v2300
    %v2305 = vtanh.pop %v2303
    %v2306 = vtanh.pop %v2304
    %v2307 = vsub.f32 1.0, %v2282
    %v2308 = vsub.f32 1.0, %v2284
    %2311 = vrot.lane.b32.xlu0 %v2305, 112
    %v2312 = vpop.permute.xlu0 %2311
    %2313 = vrot.lane.b32.xlu0 %v2306, 112
    %v2314 = vpop.permute.xlu0 %2313
    %v2317 = vmul.f32 %v2307, %v2312
    %v2318 = vmul.f32 %v2308, %v2314
    %v2319 = vmul.f32 %v2282, %v2184
    %v2320 = vmul.f32 %v2284, %v2185
    %v2321 = vadd.f32 %v2317, %v2319
    %v2322 = vadd.f32 %v2318, %v2320
    %2325 = vrot.lane.b32.xlu0 %v2321, 112
    %v2326 = vpop.permute.xlu0 %2325
    %2327 = vrot.lane.b32.xlu0 %v2322, 112
    %v2328 = vpop.permute.xlu0 %2327
    %v2329 = vsel %vm1909, %v2326, 0
    %v2331 = vsel %vm1909, %v2328, 0
    %2333 = vmatprep.subr.mxu0 0.0
    %2334 = vmatpush1.msra.mxu0 %v1898
    %2335 = vmatprep.subr.mxu0 0.0
    %2336 = vmatpush1.msra.mxu0 %v1899
    %2337 = vmatprep.subr.mxu0 0.0
    %2338 = vmatpush1.msra.mxu0 0.0
    %2339 = vmatprep.subr.mxu0 0.0
    %2340 = vmatpush1.msra.mxu0 0.0
    %2341 = vmatprep.subr.mxu0 0.0
    %2342 = vmatpush1.msra.mxu0 0.0
    %2343 = vmatprep.subr.mxu0 0.0
    %2344 = vmatpush1.msra.mxu0 0.0
    %2345 = vmatprep.subr.mxu0 0.0
    %2346 = vmatpush1.msra.mxu0 0.0
    %2347 = vmatprep.subr.mxu0 0.0
    %2348 = vmatpush1.msra.mxu0 0.0
    %2349 = vmatprep.subr.mxu0 0.0
    %2350 = vmatpush1.msra.mxu0 0.0
    %2351 = vmatprep.subr.mxu0 0.0
    %2352 = vmatpush1.msra.mxu0 0.0
    %2353 = vmatprep.subr.mxu0 0.0
    %2354 = vmatpush1.msra.mxu0 0.0
    %2355 = vmatprep.subr.mxu0 0.0
    %2356 = vmatpush1.msra.mxu0 0.0
    %2357 = vmatprep.subr.mxu0 0.0
    %2358 = vmatpush1.msra.mxu0 0.0
    %2359 = vmatprep.subr.mxu0 0.0
    %2360 = vmatpush1.msra.mxu0 0.0
    %2361 = vmatprep.subr.mxu0 0.0
    %2362 = vmatpush1.msra.mxu0 0.0
    %2363 = vmatprep.subr.mxu0 0.0
    %2364 = vmatpush1.msra.mxu0 0.0
    %2365 = vmatprep.subr.mxu0 0.0
    %2366 = vmatpush1.msra.mxu0 0.0
    %2367 = vmatprep.subr.mxu0 0.0
    %2368 = vmatpush1.msra.mxu0 0.0
    %2369 = vmatprep.subr.mxu0 0.0
    %2370 = vmatpush1.msra.mxu0 0.0
    %2371 = vmatprep.subr.mxu0 0.0
    %2372 = vmatpush1.msra.mxu0 0.0
    %2373 = vmatprep.subr.mxu0 0.0
    %2374 = vmatpush1.msra.mxu0 0.0
    %2375 = vmatprep.subr.mxu0 0.0
    %2376 = vmatpush1.msra.mxu0 0.0
    %2377 = vmatprep.subr.mxu0 0.0
    %2378 = vmatpush1.msra.mxu0 0.0
    %2379 = vmatprep.subr.mxu0 0.0
    %2380 = vmatpush1.msra.mxu0 0.0
    %2381 = vmatprep.subr.mxu0 0.0
    %2382 = vmatpush1.msra.mxu0 0.0
    %2383 = vmatprep.subr.mxu0 0.0
    %2384 = vmatpush1.msra.mxu0 0.0
    %2385 = vmatprep.subr.mxu0 0.0
    %2386 = vmatpush1.msra.mxu0 0.0
    %2387 = vmatprep.subr.mxu0 0.0
    %2388 = vmatpush1.msra.mxu0 0.0
    %2389 = vmatprep.subr.mxu0 0.0
    %2390 = vmatpush1.msra.mxu0 0.0
    %2391 = vmatprep.subr.mxu0 0.0
    %2392 = vmatpush1.msra.mxu0 0.0
    %2393 = vmatprep.subr.mxu0 0.0
    %2394 = vmatpush1.msra.mxu0 0.0
    %2395 = vmatprep.subr.mxu0 0.0
    %2396 = vmatpush1.msra.mxu0 0.0
    %2397 = vmatprep.mubr.f32.mxu0 0.0
    %2398 = vmatmul.mubr.f32.gmra.mrb[0].mxu0 %v2329
    %v2399 = vpop.f32.mrb[0].mxu0
    %v2400 = vadd.f32 %v1907, %v2399
    %v2401 = vpop.f32.mrb[0].mxu0
    %2402 = vmatprep.mubr.f32.mxu0 0.0
    %2403 = vmatmul.mubr.f32.gmra.mrb[0].mxu0 %v2331
    %v2404 = vpop.f32.mrb[0].mxu0
    %v2405 = vadd.f32 %v1907, %v2404
    %v2406 = vpop.f32.mrb[0].mxu0
    %2407 = vdwg.mxu0
    %v2408 = vadd.f32 %v1845, %v2400
    %v2409 = vadd.f32 %v1885, %v2405
    %v2410 = vxor.u32 %v2408, 2147483648
    %v2411 = vxor.u32 %v2409, 2147483648
    %v2412 = vmul.f32 %v2410, 1.442695
    %v2413 = vpow.pop %v2412
    %v2414 = vmul.f32 %v2411, 1.442695
    %v2415 = vpow.pop %v2414
    %v2416 = vadd.f32 %v2413, 1.0
    %v2417 = vadd.f32 %v2415, 1.0
    %v2418 = vrcp.pop %v2416
    %v2419 = vmul.f32 1.0, %v2418
    %v2420 = vrcp.pop %v2417
    %v2421 = vmul.f32 1.0, %v2420
    %2424 = vrot.lane.b32.xlu0 %v2400, 96
    %v2425 = vpop.permute.xlu0 %2424
    %2426 = vrot.lane.b32.xlu0 %v2405, 96
    %v2427 = vpop.permute.xlu0 %2426
    %v2430 = vmul.f32 %v2419, %v2425
    %v2431 = vmul.f32 %v2421, %v2427
    %2434 = vrot.lane.b32.xlu0 %v2430, 32
    %v2435 = vpop.permute.xlu0 %2434
    %2436 = vrot.lane.b32.xlu0 %v2431, 32
    %v2437 = vpop.permute.xlu0 %2436
    %v2440 = vadd.f32 %v1845, %v2435
    %v2441 = vadd.f32 %v1885, %v2437
    %v2442 = vtanh.pop %v2440
    %v2443 = vtanh.pop %v2441
    %v2444 = vsub.f32 1.0, %v2419
    %v2445 = vsub.f32 1.0, %v2421
    %2448 = vrot.lane.b32.xlu0 %v2442, 112
    %v2449 = vpop.permute.xlu0 %2448
    %2450 = vrot.lane.b32.xlu0 %v2443, 112
    %v2451 = vpop.permute.xlu0 %2450
    %v2454 = vmul.f32 %v2444, %v2449
    %v2455 = vmul.f32 %v2445, %v2451
    %v2456 = vmul.f32 %v2419, %v2321
    %v2457 = vmul.f32 %v2421, %v2322
    %v2458 = vadd.f32 %v2454, %v2456
    %v2459 = vadd.f32 %v2455, %v2457
    %2462 = vrot.lane.b32.xlu0 %v2458, 112
    %v2463 = vpop.permute.xlu0 %2462
    %2464 = vrot.lane.b32.xlu0 %v2459, 112
    %v2465 = vpop.permute.xlu0 %2464
    %v2466 = vsel %vm1909, %v2463, 0
    %v2468 = vsel %vm1909, %v2465, 0
    %2470 = vmatprep.subr.mxu0 0.0
    %2471 = vmatpush1.msra.mxu0 %v1898
    %2472 = vmatprep.subr.mxu0 0.0
    %2473 = vmatpush1.msra.mxu0 %v1899
    %2474 = vmatprep.subr.mxu0 0.0
    %2475 = vmatpush1.msra.mxu0 0.0
    %2476 = vmatprep.subr.mxu0 0.0
    %2477 = vmatpush1.msra.mxu0 0.0
    %2478 = vmatprep.subr.mxu0 0.0
    %2479 = vmatpush1.msra.mxu0 0.0
    %2480 = vmatprep.subr.mxu0 0.0
    %2481 = vmatpush1.msra.mxu0 0.0
    %2482 = vmatprep.subr.mxu0 0.0
    %2483 = vmatpush1.msra.mxu0 0.0
    %2484 = vmatprep.subr.mxu0 0.0
    %2485 = vmatpush1.msra.mxu0 0.0
    %2486 = vmatprep.subr.mxu0 0.0
    %2487 = vmatpush1.msra.mxu0 0.0
    %2488 = vmatprep.subr.mxu0 0.0
    %2489 = vmatpush1.msra.mxu0 0.0
    %2490 = vmatprep.subr.mxu0 0.0
    %2491 = vmatpush1.msra.mxu0 0.0
    %2492 = vmatprep.subr.mxu0 0.0
    %2493 = vmatpush1.msra.mxu0 0.0
    %2494 = vmatprep.subr.mxu0 0.0
    %2495 = vmatpush1.msra.mxu0 0.0
    %2496 = vmatprep.subr.mxu0 0.0
    %2497 = vmatpush1.msra.mxu0 0.0
    %2498 = vmatprep.subr.mxu0 0.0
    %2499 = vmatpush1.msra.mxu0 0.0
    %2500 = vmatprep.subr.mxu0 0.0
    %2501 = vmatpush1.msra.mxu0 0.0
    %2502 = vmatprep.subr.mxu0 0.0
    %2503 = vmatpush1.msra.mxu0 0.0
    %2504 = vmatprep.subr.mxu0 0.0
    %2505 = vmatpush1.msra.mxu0 0.0
    %2506 = vmatprep.subr.mxu0 0.0
    %2507 = vmatpush1.msra.mxu0 0.0
    %2508 = vmatprep.subr.mxu0 0.0
    %2509 = vmatpush1.msra.mxu0 0.0
    %2510 = vmatprep.subr.mxu0 0.0
    %2511 = vmatpush1.msra.mxu0 0.0
    %2512 = vmatprep.subr.mxu0 0.0
    %2513 = vmatpush1.msra.mxu0 0.0
    %2514 = vmatprep.subr.mxu0 0.0
    %2515 = vmatpush1.msra.mxu0 0.0
    %2516 = vmatprep.subr.mxu0 0.0
    %2517 = vmatpush1.msra.mxu0 0.0
    %2518 = vmatprep.subr.mxu0 0.0
    %2519 = vmatpush1.msra.mxu0 0.0
    %2520 = vmatprep.subr.mxu0 0.0
    %2521 = vmatpush1.msra.mxu0 0.0
    %2522 = vmatprep.subr.mxu0 0.0
    %2523 = vmatpush1.msra.mxu0 0.0
    %2524 = vmatprep.subr.mxu0 0.0
    %2525 = vmatpush1.msra.mxu0 0.0
    %2526 = vmatprep.subr.mxu0 0.0
    %2527 = vmatpush1.msra.mxu0 0.0
    %2528 = vmatprep.subr.mxu0 0.0
    %2529 = vmatpush1.msra.mxu0 0.0
    %2530 = vmatprep.subr.mxu0 0.0
    %2531 = vmatpush1.msra.mxu0 0.0
    %2532 = vmatprep.subr.mxu0 0.0
    %2533 = vmatpush1.msra.mxu0 0.0
    %2534 = vmatprep.mubr.f32.mxu0 0.0
    %2535 = vmatmul.mubr.f32.gmra.mrb[0].mxu0 %v2466
    %v2536 = vpop.f32.mrb[0].mxu0
    %v2537 = vadd.f32 %v1907, %v2536
    %v2538 = vpop.f32.mrb[0].mxu0
    %2539 = vmatprep.mubr.f32.mxu0 0.0
    %2540 = vmatmul.mubr.f32.gmra.mrb[0].mxu0 %v2468
    %v2541 = vpop.f32.mrb[0].mxu0
    %v2542 = vadd.f32 %v1907, %v2541
    %v2543 = vpop.f32.mrb[0].mxu0
    %2544 = vdwg.mxu0
    %v2545 = vadd.f32 %v1850, %v2537
    %v2546 = vadd.f32 %v1890, %v2542
    %v2547 = vxor.u32 %v2545, 2147483648
    %v2548 = vxor.u32 %v2546, 2147483648
    %v2549 = vmul.f32 %v2547, 1.442695
    %v2550 = vpow.pop %v2549
    %v2551 = vmul.f32 %v2548, 1.442695
    %v2552 = vpow.pop %v2551
    %v2553 = vadd.f32 %v2550, 1.0
    %v2554 = vadd.f32 %v2552, 1.0
    %v2555 = vrcp.pop %v2553
    %v2556 = vmul.f32 1.0, %v2555
    %v2557 = vrcp.pop %v2554
    %v2558 = vmul.f32 1.0, %v2557
    %2561 = vrot.lane.b32.xlu0 %v2537, 96
    %v2562 = vpop.permute.xlu0 %2561
    %2563 = vrot.lane.b32.xlu0 %v2542, 96
    %v2564 = vpop.permute.xlu0 %2563
    %v2567 = vmul.f32 %v2556, %v2562
    %v2568 = vmul.f32 %v2558, %v2564
    %2571 = vrot.lane.b32.xlu0 %v2567, 32
    %v2572 = vpop.permute.xlu0 %2571
    %2573 = vrot.lane.b32.xlu0 %v2568, 32
    %v2574 = vpop.permute.xlu0 %2573
    %v2577 = vadd.f32 %v1850, %v2572
    %v2578 = vadd.f32 %v1890, %v2574
    %v2579 = vtanh.pop %v2577
    %v2580 = vtanh.pop %v2578
    %v2581 = vsub.f32 1.0, %v2556
    %v2582 = vsub.f32 1.0, %v2558
    %2585 = vrot.lane.b32.xlu0 %v2579, 112
    %v2586 = vpop.permute.xlu0 %2585
    %2587 = vrot.lane.b32.xlu0 %v2580, 112
    %v2588 = vpop.permute.xlu0 %2587
    %v2591 = vmul.f32 %v2581, %v2586
    %v2592 = vmul.f32 %v2582, %v2588
    %v2593 = vmul.f32 %v2556, %v2458
    %v2594 = vmul.f32 %v2558, %v2459
    %v2595 = vadd.f32 %v2591, %v2593
    %v2596 = vadd.f32 %v2592, %v2594
    %2599 = vrot.lane.b32.xlu0 %v2595, 112
    %v2600 = vpop.permute.xlu0 %2599
    %2601 = vrot.lane.b32.xlu0 %v2596, 112
    %v2602 = vpop.permute.xlu0 %2601
    %v2603 = vsel %vm1909, %v2600, 0
    %v2605 = vsel %vm1909, %v2602, 0
    %2607 = vmatprep.subr.mxu0 0.0
    %2608 = vmatpush1.msra.mxu0 %v1898
    %2609 = vmatprep.subr.mxu0 0.0
    %2610 = vmatpush1.msra.mxu0 %v1899
    %2611 = vmatprep.subr.mxu0 0.0
    %2612 = vmatpush1.msra.mxu0 0.0
    %2613 = vmatprep.subr.mxu0 0.0
    %2614 = vmatpush1.msra.mxu0 0.0
    %2615 = vmatprep.subr.mxu0 0.0
    %2616 = vmatpush1.msra.mxu0 0.0
    %2617 = vmatprep.subr.mxu0 0.0
    %2618 = vmatpush1.msra.mxu0 0.0
    %2619 = vmatprep.subr.mxu0 0.0
    %2620 = vmatpush1.msra.mxu0 0.0
    %2621 = vmatprep.subr.mxu0 0.0
    %2622 = vmatpush1.msra.mxu0 0.0
    %2623 = vmatprep.subr.mxu0 0.0
    %2624 = vmatpush1.msra.mxu0 0.0
    %2625 = vmatprep.subr.mxu0 0.0
    %2626 = vmatpush1.msra.mxu0 0.0
    %2627 = vmatprep.subr.mxu0 0.0
    %2628 = vmatpush1.msra.mxu0 0.0
    %2629 = vmatprep.subr.mxu0 0.0
    %2630 = vmatpush1.msra.mxu0 0.0
    %2631 = vmatprep.subr.mxu0 0.0
    %2632 = vmatpush1.msra.mxu0 0.0
    %2633 = vmatprep.subr.mxu0 0.0
    %2634 = vmatpush1.msra.mxu0 0.0
    %2635 = vmatprep.subr.mxu0 0.0
    %2636 = vmatpush1.msra.mxu0 0.0
    %2637 = vmatprep.subr.mxu0 0.0
    %2638 = vmatpush1.msra.mxu0 0.0
    %2639 = vmatprep.subr.mxu0 0.0
    %2640 = vmatpush1.msra.mxu0 0.0
    %2641 = vmatprep.subr.mxu0 0.0
    %2642 = vmatpush1.msra.mxu0 0.0
    %2643 = vmatprep.subr.mxu0 0.0
    %2644 = vmatpush1.msra.mxu0 0.0
    %2645 = vmatprep.subr.mxu0 0.0
    %2646 = vmatpush1.msra.mxu0 0.0
    %2647 = vmatprep.subr.mxu0 0.0
    %2648 = vmatpush1.msra.mxu0 0.0
    %2649 = vmatprep.subr.mxu0 0.0
    %2650 = vmatpush1.msra.mxu0 0.0
    %2651 = vmatprep.subr.mxu0 0.0
    %2652 = vmatpush1.msra.mxu0 0.0
    %2653 = vmatprep.subr.mxu0 0.0
    %2654 = vmatpush1.msra.mxu0 0.0
    %2655 = vmatprep.subr.mxu0 0.0
    %2656 = vmatpush1.msra.mxu0 0.0
    %2657 = vmatprep.subr.mxu0 0.0
    %2658 = vmatpush1.msra.mxu0 0.0
    %2659 = vmatprep.subr.mxu0 0.0
    %2660 = vmatpush1.msra.mxu0 0.0
    %2661 = vmatprep.subr.mxu0 0.0
    %2662 = vmatpush1.msra.mxu0 0.0
    %2663 = vmatprep.subr.mxu0 0.0
    %2664 = vmatpush1.msra.mxu0 0.0
    %2665 = vmatprep.subr.mxu0 0.0
    %2666 = vmatpush1.msra.mxu0 0.0
    %2667 = vmatprep.subr.mxu0 0.0
    %2668 = vmatpush1.msra.mxu0 0.0
    %2669 = vmatprep.subr.mxu0 0.0
    %2670 = vmatpush1.msra.mxu0 0.0
    %2671 = vmatprep.mubr.f32.mxu0 0.0
    %2672 = vmatmul.mubr.f32.gmra.mrb[0].mxu0 %v2603
    %v2673 = vpop.f32.mrb[0].mxu0
    %v2674 = vadd.f32 %v1907, %v2673
    %v2675 = vpop.f32.mrb[0].mxu0
    %2676 = vmatprep.mubr.f32.mxu0 0.0
    %2677 = vmatmul.mubr.f32.gmra.mrb[0].mxu0 %v2605
    %v2678 = vpop.f32.mrb[0].mxu0
    %v2679 = vadd.f32 %v1907, %v2678
    %v2680 = vpop.f32.mrb[0].mxu0
    %2681 = vdwg.mxu0
    %v2682 = vadd.f32 %v1855, %v2674
    %v2683 = vadd.f32 %v1895, %v2679
    %v2684 = vxor.u32 %v2682, 2147483648
    %v2685 = vxor.u32 %v2683, 2147483648
    %v2686 = vmul.f32 %v2684, 1.442695
    %v2687 = vpow.pop %v2686
    %v2688 = vmul.f32 %v2685, 1.442695
    %v2689 = vpow.pop %v2688
    %v2690 = vadd.f32 %v2687, 1.0
    %v2691 = vadd.f32 %v2689, 1.0
    %v2692 = vrcp.pop %v2690
    %v2693 = vmul.f32 1.0, %v2692
    %v2694 = vrcp.pop %v2691
    %v2695 = vmul.f32 1.0, %v2694
    %2698 = vrot.lane.b32.xlu0 %v2674, 96
    %v2699 = vpop.permute.xlu0 %2698
    %2700 = vrot.lane.b32.xlu0 %v2679, 96
    %v2701 = vpop.permute.xlu0 %2700
    %v2704 = vmul.f32 %v2693, %v2699
    %v2705 = vmul.f32 %v2695, %v2701
    %2708 = vrot.lane.b32.xlu0 %v2704, 32
    %v2709 = vpop.permute.xlu0 %2708
    %2710 = vrot.lane.b32.xlu0 %v2705, 32
    %v2711 = vpop.permute.xlu0 %2710
    %v2714 = vadd.f32 %v1855, %v2709
    %v2715 = vadd.f32 %v1895, %v2711
    %v2716 = vtanh.pop %v2714
    %v2717 = vtanh.pop %v2715
    %v2718 = vsub.f32 1.0, %v2693
    %v2719 = vsub.f32 1.0, %v2695
    %2722 = vrot.lane.b32.xlu0 %v2716, 112
    %v2723 = vpop.permute.xlu0 %2722
    %2724 = vrot.lane.b32.xlu0 %v2717, 112
    %v2725 = vpop.permute.xlu0 %2724
    %v2728 = vmul.f32 %v2718, %v2723
    %v2729 = vmul.f32 %v2719, %v2725
    %v2730 = vmul.f32 %v2693, %v2595
    %v2731 = vmul.f32 %v2695, %v2596
    %v2732 = vadd.f32 %v2728, %v2730
    %v2733 = vadd.f32 %v2729, %v2731
    %2735 = vrot.lane.b32.xlu0 %v2732, 112
    %v2736 = vpop.permute.xlu0 %2735
    %v2737 = vsel %vm1909, %v2736, 0
    %2739 = vmatprep.subr.mxu0 0.0
    %2740 = vmatpush1.msra.mxu0 %v1898
    %2741 = vmatprep.subr.mxu0 0.0
    %2742 = vmatpush1.msra.mxu0 %v1899
    %2743 = vmatprep.subr.mxu0 0.0
    %2744 = vmatpush1.msra.mxu0 0.0
    %2745 = vmatprep.subr.mxu0 0.0
    %2746 = vmatpush1.msra.mxu0 0.0
    %2747 = vmatprep.subr.mxu0 0.0
    %2748 = vmatpush1.msra.mxu0 0.0
    %2749 = vmatprep.subr.mxu0 0.0
    %2750 = vmatpush1.msra.mxu0 0.0
    %2751 = vmatprep.subr.mxu0 0.0
    %2752 = vmatpush1.msra.mxu0 0.0
    %2753 = vmatprep.subr.mxu0 0.0
    %2754 = vmatpush1.msra.mxu0 0.0
    %2755 = vmatprep.subr.mxu0 0.0
    %2756 = vmatpush1.msra.mxu0 0.0
    %2757 = vmatprep.subr.mxu0 0.0
    %2758 = vmatpush1.msra.mxu0 0.0
    %2759 = vmatprep.subr.mxu0 0.0
    %2760 = vmatpush1.msra.mxu0 0.0
    %2761 = vmatprep.subr.mxu0 0.0
    %2762 = vmatpush1.msra.mxu0 0.0
    %2763 = vmatprep.subr.mxu0 0.0
    %2764 = vmatpush1.msra.mxu0 0.0
    %2765 = vmatprep.subr.mxu0 0.0
    %2766 = vmatpush1.msra.mxu0 0.0
    %2767 = vmatprep.subr.mxu0 0.0
    %2768 = vmatpush1.msra.mxu0 0.0
    %2769 = vmatprep.subr.mxu0 0.0
    %2770 = vmatpush1.msra.mxu0 0.0
    %2771 = vmatprep.subr.mxu0 0.0
    %2772 = vmatpush1.msra.mxu0 0.0
    %2773 = vmatprep.subr.mxu0 0.0
    %2774 = vmatpush1.msra.mxu0 0.0
    %2775 = vmatprep.subr.mxu0 0.0
    %2776 = vmatpush1.msra.mxu0 0.0
    %2777 = vmatprep.subr.mxu0 0.0
    %2778 = vmatpush1.msra.mxu0 0.0
    %2779 = vmatprep.subr.mxu0 0.0
    %2780 = vmatpush1.msra.mxu0 0.0
    %2781 = vmatprep.subr.mxu0 0.0
    %2782 = vmatpush1.msra.mxu0 0.0
    %2783 = vmatprep.subr.mxu0 0.0
    %2784 = vmatpush1.msra.mxu0 0.0
    %2785 = vmatprep.subr.mxu0 0.0
    %2786 = vmatpush1.msra.mxu0 0.0
    %2787 = vmatprep.subr.mxu0 0.0
    %2788 = vmatpush1.msra.mxu0 0.0
    %2789 = vmatprep.subr.mxu0 0.0
    %2790 = vmatpush1.msra.mxu0 0.0
    %2791 = vmatprep.subr.mxu0 0.0
    %2792 = vmatpush1.msra.mxu0 0.0
    %2793 = vmatprep.subr.mxu0 0.0
    %2794 = vmatpush1.msra.mxu0 0.0
    %2795 = vmatprep.subr.mxu0 0.0
    %2796 = vmatpush1.msra.mxu0 0.0
    %2797 = vmatprep.subr.mxu0 0.0
    %2798 = vmatpush1.msra.mxu0 0.0
    %2799 = vmatprep.subr.mxu0 0.0
    %2800 = vmatpush1.msra.mxu0 0.0
    %2801 = vmatprep.subr.mxu0 0.0
    %2802 = vmatpush1.msra.mxu0 0.0
    %2803 = vmatprep.mubr.f32.mxu0 0.0
    %2804 = vmatmul.mubr.f32.gmra.mrb[0].mxu0 %v2737
    %v2805 = vpop.f32.mrb[0].mxu0
    %v2806 = vadd.f32 %v1907, %v2805
    %v2807 = vpop.f32.mrb[0].mxu0
    %2808 = vdwg.mxu0
    %v2809 = vadd.f32 %v1860, %v2806
    %v2810 = vxor.u32 %v2809, 2147483648
    %v2811 = vmul.f32 %v2810, 1.442695
    %v2812 = vpow.pop %v2811
    %v2813 = vadd.f32 %v2812, 1.0
    %v2814 = vrcp.pop %v2813
    %v2815 = vmul.f32 1.0, %v2814
    %2817 = vrot.lane.b32.xlu0 %v2806, 96
    %v2818 = vpop.permute.xlu0 %2817
    %v2820 = vmul.f32 %v2815, %v2818
    %2822 = vrot.lane.b32.xlu0 %v2820, 32
    %v2823 = vpop.permute.xlu0 %2822
    %v2825 = vadd.f32 %v1860, %v2823
    %v2826 = vtanh.pop %v2825
    %v2827 = vsub.f32 1.0, %v2815
    %2829 = vrot.lane.b32.xlu0 %v2826, 112
    %v2830 = vpop.permute.xlu0 %2829
    %v2832 = vmul.f32 %v2827, %v2830
    %v2833 = vmul.f32 %v2815, %v2732
    %v2834 = vadd.f32 %v2832, %v2833
    %2836 = vrot.lane.b32.xlu0 %v2834, 112
    %v2837 = vpop.permute.xlu0 %2836
    %v2838 = vsel %vm1909, %v2837, 0
    %2840 = vmatprep.subr.mxu0 0.0
    %2841 = vmatpush1.msra.mxu0 %v1898
    %2842 = vmatprep.subr.mxu0 0.0
    %2843 = vmatpush1.msra.mxu0 %v1899
    %2844 = vmatprep.subr.mxu0 0.0
    %2845 = vmatpush1.msra.mxu0 0.0
    %2846 = vmatprep.subr.mxu0 0.0
    %2847 = vmatpush1.msra.mxu0 0.0
    %2848 = vmatprep.subr.mxu0 0.0
    %2849 = vmatpush1.msra.mxu0 0.0
    %2850 = vmatprep.subr.mxu0 0.0
    %2851 = vmatpush1.msra.mxu0 0.0
    %2852 = vmatprep.subr.mxu0 0.0
    %2853 = vmatpush1.msra.mxu0 0.0
    %2854 = vmatprep.subr.mxu0 0.0
    %2855 = vmatpush1.msra.mxu0 0.0
    %2856 = vmatprep.subr.mxu0 0.0
    %2857 = vmatpush1.msra.mxu0 0.0
    %2858 = vmatprep.subr.mxu0 0.0
    %2859 = vmatpush1.msra.mxu0 0.0
    %2860 = vmatprep.subr.mxu0 0.0
    %2861 = vmatpush1.msra.mxu0 0.0
    %2862 = vmatprep.subr.mxu0 0.0
    %2863 = vmatpush1.msra.mxu0 0.0
    %2864 = vmatprep.subr.mxu0 0.0
    %2865 = vmatpush1.msra.mxu0 0.0
    %2866 = vmatprep.subr.mxu0 0.0
    %2867 = vmatpush1.msra.mxu0 0.0
    %2868 = vmatprep.subr.mxu0 0.0
    %2869 = vmatpush1.msra.mxu0 0.0
    %2870 = vmatprep.subr.mxu0 0.0
    %2871 = vmatpush1.msra.mxu0 0.0
    %2872 = vmatprep.subr.mxu0 0.0
    %2873 = vmatpush1.msra.mxu0 0.0
    %2874 = vmatprep.subr.mxu0 0.0
    %2875 = vmatpush1.msra.mxu0 0.0
    %2876 = vmatprep.subr.mxu0 0.0
    %2877 = vmatpush1.msra.mxu0 0.0
    %2878 = vmatprep.subr.mxu0 0.0
    %2879 = vmatpush1.msra.mxu0 0.0
    %2880 = vmatprep.subr.mxu0 0.0
    %2881 = vmatpush1.msra.mxu0 0.0
    %2882 = vmatprep.subr.mxu0 0.0
    %2883 = vmatpush1.msra.mxu0 0.0
    %2884 = vmatprep.subr.mxu0 0.0
    %2885 = vmatpush1.msra.mxu0 0.0
    %2886 = vmatprep.subr.mxu0 0.0
    %2887 = vmatpush1.msra.mxu0 0.0
    %2888 = vmatprep.subr.mxu0 0.0
    %2889 = vmatpush1.msra.mxu0 0.0
    %2890 = vmatprep.subr.mxu0 0.0
    %2891 = vmatpush1.msra.mxu0 0.0
    %2892 = vmatprep.subr.mxu0 0.0
    %2893 = vmatpush1.msra.mxu0 0.0
    %2894 = vmatprep.subr.mxu0 0.0
    %2895 = vmatpush1.msra.mxu0 0.0
    %2896 = vmatprep.subr.mxu0 0.0
    %2897 = vmatpush1.msra.mxu0 0.0
    %2898 = vmatprep.subr.mxu0 0.0
    %2899 = vmatpush1.msra.mxu0 0.0
    %2900 = vmatprep.subr.mxu0 0.0
    %2901 = vmatpush1.msra.mxu0 0.0
    %2902 = vmatprep.subr.mxu0 0.0
    %2903 = vmatpush1.msra.mxu0 0.0
    %2904 = vmatprep.mubr.f32.mxu0 0.0
    %2905 = vmatmul.mubr.f32.gmra.mrb[0].mxu0 %v2838
    %v2906 = vpop.f32.mrb[0].mxu0
    %v2907 = vadd.f32 %v1907, %v2906
    %v2908 = vpop.f32.mrb[0].mxu0
    %2909 = vdwg.mxu0
    %v2910 = vadd.f32 %v1865, %v2907
    %v2911 = vxor.u32 %v2910, 2147483648
    %v2912 = vmul.f32 %v2911, 1.442695
    %v2913 = vpow.pop %v2912
    %v2914 = vadd.f32 %v2913, 1.0
    %v2915 = vrcp.pop %v2914
    %v2916 = vmul.f32 1.0, %v2915
    %2918 = vrot.lane.b32.xlu0 %v2907, 96
    %v2919 = vpop.permute.xlu0 %2918
    %v2921 = vmul.f32 %v2916, %v2919
    %2923 = vrot.lane.b32.xlu0 %v2921, 32
    %v2924 = vpop.permute.xlu0 %2923
    %v2926 = vadd.f32 %v1865, %v2924
    %v2927 = vtanh.pop %v2926
    %v2928 = vsub.f32 1.0, %v2916
    %2930 = vrot.lane.b32.xlu0 %v2927, 112
    %v2931 = vpop.permute.xlu0 %2930
    %v2933 = vmul.f32 %v2928, %v2931
    %v2934 = vmul.f32 %v2916, %v2834
    %v2935 = vadd.f32 %v2933, %v2934
    %2937 = vrot.lane.b32.xlu0 %v2935, 112
    %v2938 = vpop.permute.xlu0 %2937
    %2940 = vst.msk [vmem:[#allocation15] sm:$0xff] %vm1909, %v2938
    %2942 = vrot.lane.b32.xlu0 %v2733, 112
    %v2943 = vpop.permute.xlu0 %2942
    %2945 = vst.msk [vmem:[#allocation17] sm:$0xff] %vm1909, %v2943
    %v2946 = vld [vmem:[#allocation12] sm:$0x1]
    %v2947 = vld [vmem:[#allocation2] sm:$0x1]
    %v2949 = vlaneseq
    %v2950 = vshrl.u32 %v2949, 7
    %v2951 = vsub.s32 0, %v2950
    %v2952 = vrot.slane %v2946, %v2951
    %2953 = vrot.lane.b32.xlu0 %v2952, 16
    %v2954 = vpop.permute.xlu0 %2953
    %v2956 = vmul.f32 %v2047, %v2954
    %v2957 = vmul.f32 %v2184, %v2954
    %v2958 = vmul.f32 %v2321, %v2954
    %v2959 = vmul.f32 %v2458, %v2954
    %v2960 = vmul.f32 %v2595, %v2954
    %v2961 = vmul.f32 %v2732, %v2954
    %v2962 = vmul.f32 %v2834, %v2954
    %v2963 = vmul.f32 %v2935, %v2954
    %2972 = vrot.lane.b32.xlu0 %v2956, 112
    %v2973 = vpop.permute.xlu0 %2972
    %2974 = vrot.lane.b32.xlu0 %v2957, 112
    %v2975 = vpop.permute.xlu0 %2974
    %2976 = vrot.lane.b32.xlu0 %v2958, 112
    %v2977 = vpop.permute.xlu0 %2976
    %2978 = vrot.lane.b32.xlu0 %v2959, 112
    %v2979 = vpop.permute.xlu0 %2978
    %2980 = vrot.lane.b32.xlu0 %v2960, 112
    %v2981 = vpop.permute.xlu0 %2980
    %2982 = vrot.lane.b32.xlu0 %v2961, 112
    %v2983 = vpop.permute.xlu0 %2982
    %2984 = vrot.lane.b32.xlu0 %v2962, 112
    %v2985 = vpop.permute.xlu0 %2984
    %2986 = vrot.lane.b32.xlu0 %v2963, 112
    %v2987 = vpop.permute.xlu0 %2986
    %v2996 = vsel %vm1909, %v2973, 0.0
    %2997 = vadd.xlane.f32.xlu0 %v2996
    %v2998 = vpop.xlane.xlu0 %2997
    %v2999 = vsel %vm1909, %v2975, 0.0
    %3000 = vadd.xlane.f32.xlu0 %v2999
    %v3001 = vpop.xlane.xlu0 %3000
    %v3002 = vsel %vm1909, %v2977, 0.0
    %3003 = vadd.xlane.f32.xlu0 %v3002
    %v3004 = vpop.xlane.xlu0 %3003
    %v3005 = vsel %vm1909, %v2979, 0.0
    %3006 = vadd.xlane.f32.xlu0 %v3005
    %v3007 = vpop.xlane.xlu0 %3006
    %v3008 = vsel %vm1909, %v2981, 0.0
    %3009 = vadd.xlane.f32.xlu0 %v3008
    %v3010 = vpop.xlane.xlu0 %3009
    %v3011 = vsel %vm1909, %v2983, 0.0
    %3012 = vadd.xlane.f32.xlu0 %v3011
    %v3013 = vpop.xlane.xlu0 %3012
    %v3014 = vsel %vm1909, %v2985, 0.0
    %3015 = vadd.xlane.f32.xlu0 %v3014
    %v3016 = vpop.xlane.xlu0 %3015
    %v3017 = vsel %vm1909, %v2987, 0.0
    %3018 = vadd.xlane.f32.xlu0 %v3017
    %v3019 = vpop.xlane.xlu0 %3018
    %v3021 = vlaneseq
    %v3022 = vshrl.u32 %v3021, 7
    %v3023 = vsub.s32 0, %v3022
    %v3024 = vrot.slane %v2947, %v3023
    %3025 = vset.pattern.permute.xlu0 0
    %3026 = vperm.xlu0 %3025, %v3024
    %v3027 = vpop.permute.xlu0 %3026
    %v3029 = vadd.f32 %v2998, %v3027
    %v3030 = vadd.f32 %v3001, %v3027
    %v3031 = vadd.f32 %v3004, %v3027
    %v3032 = vadd.f32 %v3007, %v3027
    %v3033 = vadd.f32 %v3010, %v3027
    %v3034 = vadd.f32 %v3013, %v3027
    %v3035 = vadd.f32 %v3016, %v3027
    %v3036 = vadd.f32 %v3019, %v3027
    %v3037 = vmax.f32 %v3029, 0.0
    %v3038 = vmax.f32 %v3030, 0.0
    %v3039 = vmax.f32 %v3031, 0.0
    %v3040 = vmax.f32 %v3032, 0.0
    %v3041 = vmax.f32 %v3033, 0.0
    %v3042 = vmax.f32 %v3034, 0.0
    %v3043 = vmax.f32 %v3035, 0.0
    %v3044 = vmax.f32 %v3036, 0.0
    %v3045 = vmul.f32 %v2048, %v2954
    %v3046 = vmul.f32 %v2185, %v2954
    %v3047 = vmul.f32 %v2322, %v2954
    %v3048 = vmul.f32 %v2459, %v2954
    %v3049 = vmul.f32 %v2596, %v2954
    %v3050 = vmul.f32 %v2733, %v2954
    %3057 = vrot.lane.b32.xlu0 %v3045, 112
    %v3058 = vpop.permute.xlu0 %3057
    %3059 = vrot.lane.b32.xlu0 %v3046, 112
    %v3060 = vpop.permute.xlu0 %3059
    %3061 = vrot.lane.b32.xlu0 %v3047, 112
    %v3062 = vpop.permute.xlu0 %3061
    %3063 = vrot.lane.b32.xlu0 %v3048, 112
    %v3064 = vpop.permute.xlu0 %3063
    %3065 = vrot.lane.b32.xlu0 %v3049, 112
    %v3066 = vpop.permute.xlu0 %3065
    %3067 = vrot.lane.b32.xlu0 %v3050, 112
    %v3068 = vpop.permute.xlu0 %3067
    %v3075 = vsel %vm1909, %v3058, 0.0
    %3076 = vadd.xlane.f32.xlu0 %v3075
    %v3077 = vpop.xlane.xlu0 %3076
    %v3078 = vsel %vm1909, %v3060, 0.0
    %3079 = vadd.xlane.f32.xlu0 %v3078
    %v3080 = vpop.xlane.xlu0 %3079
    %v3081 = vsel %vm1909, %v3062, 0.0
    %3082 = vadd.xlane.f32.xlu0 %v3081
    %v3083 = vpop.xlane.xlu0 %3082
    %v3084 = vsel %vm1909, %v3064, 0.0
    %3085 = vadd.xlane.f32.xlu0 %v3084
    %v3086 = vpop.xlane.xlu0 %3085
    %v3087 = vsel %vm1909, %v3066, 0.0
    %3088 = vadd.xlane.f32.xlu0 %v3087
    %v3089 = vpop.xlane.xlu0 %3088
    %v3090 = vsel %vm1909, %v3068, 0.0
    %3091 = vadd.xlane.f32.xlu0 %v3090
    %v3092 = vpop.xlane.xlu0 %3091
    %v3093 = vadd.f32 %v3077, %v3027
    %v3094 = vadd.f32 %v3080, %v3027
    %v3095 = vadd.f32 %v3083, %v3027
    %v3096 = vadd.f32 %v3086, %v3027
    %v3097 = vadd.f32 %v3089, %v3027
    %v3098 = vadd.f32 %v3092, %v3027
    %v3099 = vmax.f32 %v3093, 0.0
    %v3100 = vmax.f32 %v3094, 0.0
    %v3101 = vmax.f32 %v3095, 0.0
    %v3102 = vmax.f32 %v3096, 0.0
    %v3103 = vmax.f32 %v3097, 0.0
    %v3104 = vmax.f32 %v3098, 0.0
    %v3105 = vld [vmem:[%s24] sm:$0x1f]
    %v3114 = vlaneseq
    %v3115 = vand.u32 %v3114, 127
    %v3116 = vlaneseq
    %v3117 = vshrl.u32 %v3116, 7
    %v3118 = vsub.s32 %v3115, %v3117
    %v3119 = vrot.slane %v3037, %v3118
    %v3120 = vlaneseq
    %v3121 = vshrl.u32 %v3120, 7
    %v3122 = vsub.s32 %v3115, %v3121
    %v3123 = vrot.slane %v3038, %v3122
    %v3124 = vlaneseq
    %v3125 = vshrl.u32 %v3124, 7
    %v3126 = vsub.s32 %v3115, %v3125
    %v3127 = vrot.slane %v3039, %v3126
    %v3128 = vlaneseq
    %v3129 = vshrl.u32 %v3128, 7
    %v3130 = vsub.s32 %v3115, %v3129
    %v3131 = vrot.slane %v3040, %v3130
    %v3132 = vlaneseq
    %v3133 = vshrl.u32 %v3132, 7
    %v3134 = vsub.s32 %v3115, %v3133
    %v3135 = vrot.slane %v3041, %v3134
    %v3136 = vlaneseq
    %v3137 = vshrl.u32 %v3136, 7
    %v3138 = vsub.s32 %v3115, %v3137
    %v3139 = vrot.slane %v3042, %v3138
    %v3140 = vlaneseq
    %v3141 = vshrl.u32 %v3140, 7
    %v3142 = vsub.s32 %v3115, %v3141
    %v3143 = vrot.slane %v3043, %v3142
    %v3144 = vlaneseq
    %v3145 = vshrl.u32 %v3144, 7
    %v3146 = vsub.s32 %v3115, %v3145
    %v3147 = vrot.slane %v3044, %v3146
    %vm3148 = vcmask 1041409
    %v3149 = vsel %vm3148, %v3123, %v3119
    %vm3150 = vcmask 1042434
    %v3151 = vsel %vm3150, %v3127, %v3149
    %vm3152 = vcmask 1043459
    %v3153 = vsel %vm3152, %v3131, %v3151
    %vm3154 = vcmask 1044484
    %v3155 = vsel %vm3154, %v3135, %v3153
    %vm3156 = vcmask 1045509
    %v3157 = vsel %vm3156, %v3139, %v3155
    %vm3158 = vcmask 1046534
    %v3159 = vsel %vm3158, %v3143, %v3157
    %vm3160 = vcmask 1047559
    %v3161 = vsel %vm3160, %v3147, %v3159
    %v3162 = vld [vmem:[%s18] sm:$0xff]
    %v3163 = vld [vmem:[%s19] sm:$0x1]
    %v3165 = vlaneseq
    %v3166 = vshrl.u32 %v3165, 7
    %v3167 = vsub.s32 0, %v3166
    %v3168 = vrot.slane %v3163, %v3167
    %v3170 = vsel %vm202, %v3161, 0
    %v3173 = vsel %vm202, %v3105, 0
    %3175 = vmatprep.subr.mxu0 0.0
    %3176 = vmatpush1.msra.mxu0 %v3162
    %3177 = vmatprep.subr.mxu0 0.0
    %3178 = vmatpush1.msra.mxu0 0.0
    %3179 = vmatprep.subr.mxu0 0.0
    %3180 = vmatpush1.msra.mxu0 0.0
    %3181 = vmatprep.subr.mxu0 0.0
    %3182 = vmatpush1.msra.mxu0 0.0
    %3183 = vmatprep.subr.mxu0 0.0
    %3184 = vmatpush1.msra.mxu0 0.0
    %3185 = vmatprep.subr.mxu0 0.0
    %3186 = vmatpush1.msra.mxu0 0.0
    %3187 = vmatprep.subr.mxu0 0.0
    %3188 = vmatpush1.msra.mxu0 0.0
    %3189 = vmatprep.subr.mxu0 0.0
    %3190 = vmatpush1.msra.mxu0 0.0
    %3191 = vmatprep.subr.mxu0 0.0
    %3192 = vmatpush1.msra.mxu0 0.0
    %3193 = vmatprep.subr.mxu0 0.0
    %3194 = vmatpush1.msra.mxu0 0.0
    %3195 = vmatprep.subr.mxu0 0.0
    %3196 = vmatpush1.msra.mxu0 0.0
    %3197 = vmatprep.subr.mxu0 0.0
    %3198 = vmatpush1.msra.mxu0 0.0
    %3199 = vmatprep.subr.mxu0 0.0
    %3200 = vmatpush1.msra.mxu0 0.0
    %3201 = vmatprep.subr.mxu0 0.0
    %3202 = vmatpush1.msra.mxu0 0.0
    %3203 = vmatprep.subr.mxu0 0.0
    %3204 = vmatpush1.msra.mxu0 0.0
    %3205 = vmatprep.subr.mxu0 0.0
    %3206 = vmatpush1.msra.mxu0 0.0
    %3207 = vmatprep.subr.mxu0 0.0
    %3208 = vmatpush1.msra.mxu0 0.0
    %3209 = vmatprep.subr.mxu0 0.0
    %3210 = vmatpush1.msra.mxu0 0.0
    %3211 = vmatprep.subr.mxu0 0.0
    %3212 = vmatpush1.msra.mxu0 0.0
    %3213 = vmatprep.subr.mxu0 0.0
    %3214 = vmatpush1.msra.mxu0 0.0
    %3215 = vmatprep.subr.mxu0 0.0
    %3216 = vmatpush1.msra.mxu0 0.0
    %3217 = vmatprep.subr.mxu0 0.0
    %3218 = vmatpush1.msra.mxu0 0.0
    %3219 = vmatprep.subr.mxu0 0.0
    %3220 = vmatpush1.msra.mxu0 0.0
    %3221 = vmatprep.subr.mxu0 0.0
    %3222 = vmatpush1.msra.mxu0 0.0
    %3223 = vmatprep.subr.mxu0 0.0
    %3224 = vmatpush1.msra.mxu0 0.0
    %3225 = vmatprep.subr.mxu0 0.0
    %3226 = vmatpush1.msra.mxu0 0.0
    %3227 = vmatprep.subr.mxu0 0.0
    %3228 = vmatpush1.msra.mxu0 0.0
    %3229 = vmatprep.subr.mxu0 0.0
    %3230 = vmatpush1.msra.mxu0 0.0
    %3231 = vmatprep.subr.mxu0 0.0
    %3232 = vmatpush1.msra.mxu0 0.0
    %3233 = vmatprep.subr.mxu0 0.0
    %3234 = vmatpush1.msra.mxu0 0.0
    %3235 = vmatprep.subr.mxu0 0.0
    %3236 = vmatpush1.msra.mxu0 0.0
    %3237 = vmatprep.subr.mxu0 0.0
    %3238 = vmatpush1.msra.mxu0 0.0
    %3239 = vmatprep.mubr.f32.mxu0 0.0
    %3240 = vmatmul.mubr.f32.gmra.mrb[0].mxu0 %v3170
    %v3241 = vpop.f32.mrb[0].mxu0
    %v3242 = vadd.f32 %v3168, %v3241
    %v3243 = vpop.f32.mrb[0].mxu0
    %3244 = vmatprep.mubr.f32.mxu0 0.0
    %3245 = vmatmul.mubr.f32.gmra.mrb[0].mxu0 %v3173
    %v3246 = vpop.f32.mrb[0].mxu0
    %v3247 = vadd.f32 %v3168, %v3246
    %v3248 = vpop.f32.mrb[0].mxu0
    %3249 = vdwg.mxu0
    %v3250 = vmax.f32 %v3242, 0.0
    %v3251 = vmax.f32 %v3247, 0.0
    %v3252 = vld [vmem:[%s20] sm:$0xf]
    %v3253 = vld [vmem:[%s21] sm:$0x1]
    %v3255 = vlaneseq
    %v3256 = vshrl.u32 %v3255, 7
    %v3257 = vsub.s32 0, %v3256
    %v3258 = vrot.slane %v3253, %v3257
    %vm3260 = vcmask 31744
    %v3262 = vsel %vm3260, %v3250, 0
    %v3265 = vsel %vm3260, %v3251, 0
    %vm3267 = vcmask 1043456
    %v3269 = vsel %vm3267, %v3252, 0
    %3271 = vmatprep.subr.mxu0 0.0
    %3272 = vmatpush1.msra.mxu0 %v3269
    %3273 = vmatprep.subr.mxu0 0.0
    %3274 = vmatpush1.msra.mxu0 0.0
    %3275 = vmatprep.subr.mxu0 0.0
    %3276 = vmatpush1.msra.mxu0 0.0
    %3277 = vmatprep.subr.mxu0 0.0
    %3278 = vmatpush1.msra.mxu0 0.0
    %3279 = vmatprep.subr.mxu0 0.0
    %3280 = vmatpush1.msra.mxu0 0.0
    %3281 = vmatprep.subr.mxu0 0.0
    %3282 = vmatpush1.msra.mxu0 0.0
    %3283 = vmatprep.subr.mxu0 0.0
    %3284 = vmatpush1.msra.mxu0 0.0
    %3285 = vmatprep.subr.mxu0 0.0
    %3286 = vmatpush1.msra.mxu0 0.0
    %3287 = vmatprep.subr.mxu0 0.0
    %3288 = vmatpush1.msra.mxu0 0.0
    %3289 = vmatprep.subr.mxu0 0.0
    %3290 = vmatpush1.msra.mxu0 0.0
    %3291 = vmatprep.subr.mxu0 0.0
    %3292 = vmatpush1.msra.mxu0 0.0
    %3293 = vmatprep.subr.mxu0 0.0
    %3294 = vmatpush1.msra.mxu0 0.0
    %3295 = vmatprep.subr.mxu0 0.0
    %3296 = vmatpush1.msra.mxu0 0.0
    %3297 = vmatprep.subr.mxu0 0.0
    %3298 = vmatpush1.msra.mxu0 0.0
    %3299 = vmatprep.subr.mxu0 0.0
    %3300 = vmatpush1.msra.mxu0 0.0
    %3301 = vmatprep.subr.mxu0 0.0
    %3302 = vmatpush1.msra.mxu0 0.0
    %3303 = vmatprep.subr.mxu0 0.0
    %3304 = vmatpush1.msra.mxu0 0.0
    %3305 = vmatprep.subr.mxu0 0.0
    %3306 = vmatpush1.msra.mxu0 0.0
    %3307 = vmatprep.subr.mxu0 0.0
    %3308 = vmatpush1.msra.mxu0 0.0
    %3309 = vmatprep.subr.mxu0 0.0
    %3310 = vmatpush1.msra.mxu0 0.0
    %3311 = vmatprep.subr.mxu0 0.0
    %3312 = vmatpush1.msra.mxu0 0.0
    %3313 = vmatprep.subr.mxu0 0.0
    %3314 = vmatpush1.msra.mxu0 0.0
    %3315 = vmatprep.subr.mxu0 0.0
    %3316 = vmatpush1.msra.mxu0 0.0
    %3317 = vmatprep.subr.mxu0 0.0
    %3318 = vmatpush1.msra.mxu0 0.0
    %3319 = vmatprep.subr.mxu0 0.0
    %3320 = vmatpush1.msra.mxu0 0.0
    %3321 = vmatprep.subr.mxu0 0.0
    %3322 = vmatpush1.msra.mxu0 0.0
    %3323 = vmatprep.subr.mxu0 0.0
    %3324 = vmatpush1.msra.mxu0 0.0
    %3325 = vmatprep.subr.mxu0 0.0
    %3326 = vmatpush1.msra.mxu0 0.0
    %3327 = vmatprep.subr.mxu0 0.0
    %3328 = vmatpush1.msra.mxu0 0.0
    %3329 = vmatprep.subr.mxu0 0.0
    %3330 = vmatpush1.msra.mxu0 0.0
    %3331 = vmatprep.subr.mxu0 0.0
    %3332 = vmatpush1.msra.mxu0 0.0
    %3333 = vmatprep.subr.mxu0 0.0
    %3334 = vmatpush1.msra.mxu0 0.0
    %3335 = vmatprep.mubr.f32.mxu0 0.0
    %3336 = vmatmul.mubr.f32.gmra.mrb[0].mxu0 %v3262
    %v3337 = vpop.f32.mrb[0].mxu0
    %v3338 = vadd.f32 %v3258, %v3337
    %v3339 = vpop.f32.mrb[0].mxu0
    %3340 = vmatprep.mubr.f32.mxu0 0.0
    %3341 = vmatmul.mubr.f32.gmra.mrb[0].mxu0 %v3265
    %v3342 = vpop.f32.mrb[0].mxu0
    %v3343 = vadd.f32 %v3258, %v3342
    %v3344 = vpop.f32.mrb[0].mxu0
    %3345 = vdwg.mxu0
    %v3346 = vmax.f32 %v3338, 0.0
    %v3347 = vmax.f32 %v3343, 0.0
    %vm3348 = vcmask 61440
    %v3349 = vsel %vm3348, %v3347, 0.0
    %v3350 = vrot.slane %v3349, 4
    %v3351 = vadd.f32 %v3349, %v3350
    %v3352 = vrot.slane %v3351, 2
    %v3353 = vadd.f32 %v3351, %v3352
    %v3354 = vrot.slane %v3353, 1
    %v3355 = vadd.f32 %v3353, %v3354
    %v3356 = vrcp.pop 5.0
    %v3357 = vmul.f32 %v3355, %v3356
    %v3358 = vmul.f32 %v3346, %v3357
    %v3359 = vsel %vm202, %v3358, 0.0
    %3360 = vadd.xlane.f32.xlu0 %v3359
    %v3361 = vpop.xlane.xlu0 %3360
    %v3362 = vtanh.pop %v3361
    %v3363 = vand.u32 2147483647, %v3362
    %v3364 = vmax.f32 %v3363, 1e-12
    %v3365 = vrcp.pop %v3364
    %v3366 = vmul.f32 %v3362, %v3365
    %v3367 = vld [vmem:[%s25] sm:$0x7f]
    %v3374 = vlaneseq
    %v3375 = vshrl.u32 %v3374, 7
    %v3376 = vsub.s32 %v3115, %v3375
    %v3377 = vrot.slane %v3099, %v3376
    %v3378 = vlaneseq
    %v3379 = vshrl.u32 %v3378, 7
    %v3380 = vsub.s32 %v3115, %v3379
    %v3381 = vrot.slane %v3100, %v3380
    %v3382 = vlaneseq
    %v3383 = vshrl.u32 %v3382, 7
    %v3384 = vsub.s32 %v3115, %v3383
    %v3385 = vrot.slane %v3101, %v3384
    %v3386 = vlaneseq
    %v3387 = vshrl.u32 %v3386, 7
    %v3388 = vsub.s32 %v3115, %v3387
    %v3389 = vrot.slane %v3102, %v3388
    %v3390 = vlaneseq
    %v3391 = vshrl.u32 %v3390, 7
    %v3392 = vsub.s32 %v3115, %v3391
    %v3393 = vrot.slane %v3103, %v3392
    %v3394 = vlaneseq
    %v3395 = vshrl.u32 %v3394, 7
    %v3396 = vsub.s32 %v3115, %v3395
    %v3397 = vrot.slane %v3104, %v3396
    %v3398 = vsel %vm3148, %v3381, %v3377
    %v3399 = vsel %vm3150, %v3385, %v3398
    %v3400 = vsel %vm3152, %v3389, %v3399
    %v3401 = vsel %vm3154, %v3393, %v3400
    %v3402 = vsel %vm3156, %v3397, %v3401
    %v3405 = vrot.slane %v3367, 2
    %vm3407 = vcmask 1045504
    %v3408 = vsel %vm3407, %v3402, %v3405
    %v3410 = vsel %vm202, %v3408, 0
    %v3412 = vsel %vm202, %v3405, 0
    %3414 = vmatprep.subr.mxu0 0.0
    %3415 = vmatpush1.msra.mxu0 %v3162
    %3416 = vmatprep.subr.mxu0 0.0
    %3417 = vmatpush1.msra.mxu0 0.0
    %3418 = vmatprep.subr.mxu0 0.0
    %3419 = vmatpush1.msra.mxu0 0.0
    %3420 = vmatprep.subr.mxu0 0.0
    %3421 = vmatpush1.msra.mxu0 0.0
    %3422 = vmatprep.subr.mxu0 0.0
    %3423 = vmatpush1.msra.mxu0 0.0
    %3424 = vmatprep.subr.mxu0 0.0
    %3425 = vmatpush1.msra.mxu0 0.0
    %3426 = vmatprep.subr.mxu0 0.0
    %3427 = vmatpush1.msra.mxu0 0.0
    %3428 = vmatprep.subr.mxu0 0.0
    %3429 = vmatpush1.msra.mxu0 0.0
    %3430 = vmatprep.subr.mxu0 0.0
    %3431 = vmatpush1.msra.mxu0 0.0
    %3432 = vmatprep.subr.mxu0 0.0
    %3433 = vmatpush1.msra.mxu0 0.0
    %3434 = vmatprep.subr.mxu0 0.0
    %3435 = vmatpush1.msra.mxu0 0.0
    %3436 = vmatprep.subr.mxu0 0.0
    %3437 = vmatpush1.msra.mxu0 0.0
    %3438 = vmatprep.subr.mxu0 0.0
    %3439 = vmatpush1.msra.mxu0 0.0
    %3440 = vmatprep.subr.mxu0 0.0
    %3441 = vmatpush1.msra.mxu0 0.0
    %3442 = vmatprep.subr.mxu0 0.0
    %3443 = vmatpush1.msra.mxu0 0.0
    %3444 = vmatprep.subr.mxu0 0.0
    %3445 = vmatpush1.msra.mxu0 0.0
    %3446 = vmatprep.subr.mxu0 0.0
    %3447 = vmatpush1.msra.mxu0 0.0
    %3448 = vmatprep.subr.mxu0 0.0
    %3449 = vmatpush1.msra.mxu0 0.0
    %3450 = vmatprep.subr.mxu0 0.0
    %3451 = vmatpush1.msra.mxu0 0.0
    %3452 = vmatprep.subr.mxu0 0.0
    %3453 = vmatpush1.msra.mxu0 0.0
    %3454 = vmatprep.subr.mxu0 0.0
    %3455 = vmatpush1.msra.mxu0 0.0
    %3456 = vmatprep.subr.mxu0 0.0
    %3457 = vmatpush1.msra.mxu0 0.0
    %3458 = vmatprep.subr.mxu0 0.0
    %3459 = vmatpush1.msra.mxu0 0.0
    %3460 = vmatprep.subr.mxu0 0.0
    %3461 = vmatpush1.msra.mxu0 0.0
    %3462 = vmatprep.subr.mxu0 0.0
    %3463 = vmatpush1.msra.mxu0 0.0
    %3464 = vmatprep.subr.mxu0 0.0
    %3465 = vmatpush1.msra.mxu0 0.0
    %3466 = vmatprep.subr.mxu0 0.0
    %3467 = vmatpush1.msra.mxu0 0.0
    %3468 = vmatprep.subr.mxu0 0.0
    %3469 = vmatpush1.msra.mxu0 0.0
    %3470 = vmatprep.subr.mxu0 0.0
    %3471 = vmatpush1.msra.mxu0 0.0
    %3472 = vmatprep.subr.mxu0 0.0
    %3473 = vmatpush1.msra.mxu0 0.0
    %3474 = vmatprep.subr.mxu0 0.0
    %3475 = vmatpush1.msra.mxu0 0.0
    %3476 = vmatprep.subr.mxu0 0.0
    %3477 = vmatpush1.msra.mxu0 0.0
    %3478 = vmatprep.mubr.f32.mxu0 0.0
    %3479 = vmatmul.mubr.f32.gmra.mrb[0].mxu0 %v3410
    %v3480 = vpop.f32.mrb[0].mxu0
    %v3481 = vadd.f32 %v3168, %v3480
    %v3482 = vpop.f32.mrb[0].mxu0
    %3483 = vmatprep.mubr.f32.mxu0 0.0
    %3484 = vmatmul.mubr.f32.gmra.mrb[0].mxu0 %v3412
    %v3485 = vpop.f32.mrb[0].mxu0
    %v3486 = vadd.f32 %v3168, %v3485
    %v3487 = vpop.f32.mrb[0].mxu0
    %3488 = vdwg.mxu0
    %v3489 = vmax.f32 %v3481, 0.0
    %v3490 = vmax.f32 %v3486, 0.0
    %v3492 = vsel %vm3260, %v3489, 0
    %v3495 = vsel %vm3260, %v3490, 0
    %3497 = vmatprep.subr.mxu0 0.0
    %3498 = vmatpush1.msra.mxu0 %v3269
    %3499 = vmatprep.subr.mxu0 0.0
    %3500 = vmatpush1.msra.mxu0 0.0
    %3501 = vmatprep.subr.mxu0 0.0
    %3502 = vmatpush1.msra.mxu0 0.0
    %3503 = vmatprep.subr.mxu0 0.0
    %3504 = vmatpush1.msra.mxu0 0.0
    %3505 = vmatprep.subr.mxu0 0.0
    %3506 = vmatpush1.msra.mxu0 0.0
    %3507 = vmatprep.subr.mxu0 0.0
    %3508 = vmatpush1.msra.mxu0 0.0
    %3509 = vmatprep.subr.mxu0 0.0
    %3510 = vmatpush1.msra.mxu0 0.0
    %3511 = vmatprep.subr.mxu0 0.0
    %3512 = vmatpush1.msra.mxu0 0.0
    %3513 = vmatprep.subr.mxu0 0.0
    %3514 = vmatpush1.msra.mxu0 0.0
    %3515 = vmatprep.subr.mxu0 0.0
    %3516 = vmatpush1.msra.mxu0 0.0
    %3517 = vmatprep.subr.mxu0 0.0
    %3518 = vmatpush1.msra.mxu0 0.0
    %3519 = vmatprep.subr.mxu0 0.0
    %3520 = vmatpush1.msra.mxu0 0.0
    %3521 = vmatprep.subr.mxu0 0.0
    %3522 = vmatpush1.msra.mxu0 0.0
    %3523 = vmatprep.subr.mxu0 0.0
    %3524 = vmatpush1.msra.mxu0 0.0
    %3525 = vmatprep.subr.mxu0 0.0
    %3526 = vmatpush1.msra.mxu0 0.0
    %3527 = vmatprep.subr.mxu0 0.0
    %3528 = vmatpush1.msra.mxu0 0.0
    %3529 = vmatprep.subr.mxu0 0.0
    %3530 = vmatpush1.msra.mxu0 0.0
    %3531 = vmatprep.subr.mxu0 0.0
    %3532 = vmatpush1.msra.mxu0 0.0
    %3533 = vmatprep.subr.mxu0 0.0
    %3534 = vmatpush1.msra.mxu0 0.0
    %3535 = vmatprep.subr.mxu0 0.0
    %3536 = vmatpush1.msra.mxu0 0.0
    %3537 = vmatprep.subr.mxu0 0.0
    %3538 = vmatpush1.msra.mxu0 0.0
    %3539 = vmatprep.subr.mxu0 0.0
    %3540 = vmatpush1.msra.mxu0 0.0
    %3541 = vmatprep.subr.mxu0 0.0
    %3542 = vmatpush1.msra.mxu0 0.0
    %3543 = vmatprep.subr.mxu0 0.0
    %3544 = vmatpush1.msra.mxu0 0.0
    %3545 = vmatprep.subr.mxu0 0.0
    %3546 = vmatpush1.msra.mxu0 0.0
    %3547 = vmatprep.subr.mxu0 0.0
    %3548 = vmatpush1.msra.mxu0 0.0
    %3549 = vmatprep.subr.mxu0 0.0
    %3550 = vmatpush1.msra.mxu0 0.0
    %3551 = vmatprep.subr.mxu0 0.0
    %3552 = vmatpush1.msra.mxu0 0.0
    %3553 = vmatprep.subr.mxu0 0.0
    %3554 = vmatpush1.msra.mxu0 0.0
    %3555 = vmatprep.subr.mxu0 0.0
    %3556 = vmatpush1.msra.mxu0 0.0
    %3557 = vmatprep.subr.mxu0 0.0
    %3558 = vmatpush1.msra.mxu0 0.0
    %3559 = vmatprep.subr.mxu0 0.0
    %3560 = vmatpush1.msra.mxu0 0.0
    %3561 = vmatprep.mubr.f32.mxu0 0.0
    %3562 = vmatmul.mubr.f32.gmra.mrb[0].mxu0 %v3492
    %v3563 = vpop.f32.mrb[0].mxu0
    %v3564 = vadd.f32 %v3258, %v3563
    %v3565 = vpop.f32.mrb[0].mxu0
    %3566 = vmatprep.mubr.f32.mxu0 0.0
    %3567 = vmatmul.mubr.f32.gmra.mrb[0].mxu0 %v3495
    %v3568 = vpop.f32.mrb[0].mxu0
    %v3569 = vadd.f32 %v3258, %v3568
    %v3570 = vpop.f32.mrb[0].mxu0
    %3571 = vdwg.mxu0
    %v3572 = vmax.f32 %v3564, 0.0
    %v3573 = vmax.f32 %v3569, 0.0
    %vm3576 = vcmask 1041408
    %v3577 = vrot.slane %v3572, 6
    %v3578 = vrot.slane %v3573, 6
    %v3579 = vsel %vm3576, %v3577, %v3578
    %vm3581 = vcmask 63488
    %v3582 = vsel %vm3581, %v3579, 0.0
    %v3583 = vrot.slane %v3582, 4
    %v3584 = vadd.f32 %v3582, %v3583
    %v3585 = vrot.slane %v3584, 2
    %v3586 = vadd.f32 %v3584, %v3585
    %v3587 = vrot.slane %v3586, 1
    %v3588 = vadd.f32 %v3586, %v3587
    %v3589 = vrcp.pop 7.0
    %v3590 = vmul.f32 %v3588, %v3589
    %v3591 = vmul.f32 %v3572, %v3590
    %vm3592 = vcmask 62464
    %v3593 = vsel %vm3592, %v3591, 0.0
    %3594 = vadd.xlane.f32.xlu0 %v3593
    %v3595 = vpop.xlane.xlu0 %3594
    %v3596 = vtanh.pop %v3595
    %v3597 = vand.u32 2147483647, %v3596
    %v3598 = vmax.f32 %v3597, 1e-12
    %v3599 = vrcp.pop %v3598
    %v3600 = vmul.f32 %v3596, %v3599
    %v3601 = vld [vmem:[%s22] sm:$0xff]
    %v3602 = vld [vmem:[%s22 + $0x8] sm:$0x1]
    %v3603 = vld [vmem:[%s23] sm:$0x1]
    %v3604 = vlaneseq
    %v3605 = vshrl.u32 %v3604, 7
    %v3606 = vsub.s32 0, %v3605
    %v3607 = vrot.slane %v3602, %v3606
    %v3608 = vmul.f32 %v3366, %v3607
    %3609 = vmatprep.subr.mxu0 0.0
    %3610 = vmatpush1.msra.mxu0 %v3601
    %3611 = vmatprep.subr.mxu0 0.0
    %3612 = vmatpush1.msra.mxu0 0.0
    %3613 = vmatprep.subr.mxu0 0.0
    %3614 = vmatpush1.msra.mxu0 0.0
    %3615 = vmatprep.subr.mxu0 0.0
    %3616 = vmatpush1.msra.mxu0 0.0
    %3617 = vmatprep.subr.mxu0 0.0
    %3618 = vmatpush1.msra.mxu0 0.0
    %3619 = vmatprep.subr.mxu0 0.0
    %3620 = vmatpush1.msra.mxu0 0.0
    %3621 = vmatprep.subr.mxu0 0.0
    %3622 = vmatpush1.msra.mxu0 0.0
    %3623 = vmatprep.subr.mxu0 0.0
    %3624 = vmatpush1.msra.mxu0 0.0
    %3625 = vmatprep.subr.mxu0 0.0
    %3626 = vmatpush1.msra.mxu0 0.0
    %3627 = vmatprep.subr.mxu0 0.0
    %3628 = vmatpush1.msra.mxu0 0.0
    %3629 = vmatprep.subr.mxu0 0.0
    %3630 = vmatpush1.msra.mxu0 0.0
    %3631 = vmatprep.subr.mxu0 0.0
    %3632 = vmatpush1.msra.mxu0 0.0
    %3633 = vmatprep.subr.mxu0 0.0
    %3634 = vmatpush1.msra.mxu0 0.0
    %3635 = vmatprep.subr.mxu0 0.0
    %3636 = vmatpush1.msra.mxu0 0.0
    %3637 = vmatprep.subr.mxu0 0.0
    %3638 = vmatpush1.msra.mxu0 0.0
    %3639 = vmatprep.subr.mxu0 0.0
    %3640 = vmatpush1.msra.mxu0 0.0
    %3641 = vmatprep.subr.mxu0 0.0
    %3642 = vmatpush1.msra.mxu0 0.0
    %3643 = vmatprep.subr.mxu0 0.0
    %3644 = vmatpush1.msra.mxu0 0.0
    %3645 = vmatprep.subr.mxu0 0.0
    %3646 = vmatpush1.msra.mxu0 0.0
    %3647 = vmatprep.subr.mxu0 0.0
    %3648 = vmatpush1.msra.mxu0 0.0
    %3649 = vmatprep.subr.mxu0 0.0
    %3650 = vmatpush1.msra.mxu0 0.0
    %3651 = vmatprep.subr.mxu0 0.0
    %3652 = vmatpush1.msra.mxu0 0.0
    %3653 = vmatprep.subr.mxu0 0.0
    %3654 = vmatpush1.msra.mxu0 0.0
    %3655 = vmatprep.subr.mxu0 0.0
    %3656 = vmatpush1.msra.mxu0 0.0
    %3657 = vmatprep.subr.mxu0 0.0
    %3658 = vmatpush1.msra.mxu0 0.0
    %3659 = vmatprep.subr.mxu0 0.0
    %3660 = vmatpush1.msra.mxu0 0.0
    %3661 = vmatprep.subr.mxu0 0.0
    %3662 = vmatpush1.msra.mxu0 0.0
    %3663 = vmatprep.subr.mxu0 0.0
    %3664 = vmatpush1.msra.mxu0 0.0
    %3665 = vmatprep.subr.mxu0 0.0
    %3666 = vmatpush1.msra.mxu0 0.0
    %3667 = vmatprep.subr.mxu0 0.0
    %3668 = vmatpush1.msra.mxu0 0.0
    %3669 = vmatprep.subr.mxu0 0.0
    %3670 = vmatpush1.msra.mxu0 0.0
    %3671 = vmatprep.subr.mxu0 0.0
    %3672 = vmatpush1.msra.mxu0 0.0
    %3673 = vmatprep.mubr.f32.mxu0 0.0
    %3674 = vmatmul.mubr.f32.gmra.mrb[0].mxu0 %v3170
    %v3675 = vpop.f32.mrb[0].mxu0
    %v3676 = vadd.f32 %v3608, %v3675
    %v3677 = vpop.f32.mrb[0].mxu0
    %3678 = vdwg.mxu0
    %v3680 = vlaneseq
    %v3681 = vshrl.u32 %v3680, 7
    %v3682 = vsub.s32 0, %v3681
    %v3683 = vrot.slane %v3603, %v3682
    %v3685 = vadd.f32 %v3676, %v3683
    %v3686 = vmax.f32 %v3685, 0.0
    %v3687 = vmul.f32 %v3600, %v3607
    %v3688 = vsel %vm202, %v3402, 0
    %3690 = vmatprep.subr.mxu0 0.0
    %3691 = vmatpush1.msra.mxu0 %v3601
    %3692 = vmatprep.subr.mxu0 0.0
    %3693 = vmatpush1.msra.mxu0 0.0
    %3694 = vmatprep.subr.mxu0 0.0
    %3695 = vmatpush1.msra.mxu0 0.0
    %3696 = vmatprep.subr.mxu0 0.0
    %3697 = vmatpush1.msra.mxu0 0.0
    %3698 = vmatprep.subr.mxu0 0.0
    %3699 = vmatpush1.msra.mxu0 0.0
    %3700 = vmatprep.subr.mxu0 0.0
    %3701 = vmatpush1.msra.mxu0 0.0
    %3702 = vmatprep.subr.mxu0 0.0
    %3703 = vmatpush1.msra.mxu0 0.0
    %3704 = vmatprep.subr.mxu0 0.0
    %3705 = vmatpush1.msra.mxu0 0.0
    %3706 = vmatprep.subr.mxu0 0.0
    %3707 = vmatpush1.msra.mxu0 0.0
    %3708 = vmatprep.subr.mxu0 0.0
    %3709 = vmatpush1.msra.mxu0 0.0
    %3710 = vmatprep.subr.mxu0 0.0
    %3711 = vmatpush1.msra.mxu0 0.0
    %3712 = vmatprep.subr.mxu0 0.0
    %3713 = vmatpush1.msra.mxu0 0.0
    %3714 = vmatprep.subr.mxu0 0.0
    %3715 = vmatpush1.msra.mxu0 0.0
    %3716 = vmatprep.subr.mxu0 0.0
    %3717 = vmatpush1.msra.mxu0 0.0
    %3718 = vmatprep.subr.mxu0 0.0
    %3719 = vmatpush1.msra.mxu0 0.0
    %3720 = vmatprep.subr.mxu0 0.0
    %3721 = vmatpush1.msra.mxu0 0.0
    %3722 = vmatprep.subr.mxu0 0.0
    %3723 = vmatpush1.msra.mxu0 0.0
    %3724 = vmatprep.subr.mxu0 0.0
    %3725 = vmatpush1.msra.mxu0 0.0
    %3726 = vmatprep.subr.mxu0 0.0
    %3727 = vmatpush1.msra.mxu0 0.0
    %3728 = vmatprep.subr.mxu0 0.0
    %3729 = vmatpush1.msra.mxu0 0.0
    %3730 = vmatprep.subr.mxu0 0.0
    %3731 = vmatpush1.msra.mxu0 0.0
    %3732 = vmatprep.subr.mxu0 0.0
    %3733 = vmatpush1.msra.mxu0 0.0
    %3734 = vmatprep.subr.mxu0 0.0
    %3735 = vmatpush1.msra.mxu0 0.0
    %3736 = vmatprep.subr.mxu0 0.0
    %3737 = vmatpush1.msra.mxu0 0.0
    %3738 = vmatprep.subr.mxu0 0.0
    %3739 = vmatpush1.msra.mxu0 0.0
    %3740 = vmatprep.subr.mxu0 0.0
    %3741 = vmatpush1.msra.mxu0 0.0
    %3742 = vmatprep.subr.mxu0 0.0
    %3743 = vmatpush1.msra.mxu0 0.0
    %3744 = vmatprep.subr.mxu0 0.0
    %3745 = vmatpush1.msra.mxu0 0.0
    %3746 = vmatprep.subr.mxu0 0.0
    %3747 = vmatpush1.msra.mxu0 0.0
    %3748 = vmatprep.subr.mxu0 0.0
    %3749 = vmatpush1.msra.mxu0 0.0
    %3750 = vmatprep.subr.mxu0 0.0
    %3751 = vmatpush1.msra.mxu0 0.0
    %3752 = vmatprep.subr.mxu0 0.0
    %3753 = vmatpush1.msra.mxu0 0.0
    %3754 = vmatprep.mubr.f32.mxu0 0.0
    %3755 = vmatmul.mubr.f32.gmra.mrb[0].mxu0 %v3688
    %v3756 = vpop.f32.mrb[0].mxu0
    %v3757 = vadd.f32 %v3687, %v3756
    %v3758 = vpop.f32.mrb[0].mxu0
    %3759 = vdwg.mxu0
    %v3760 = vadd.f32 %v3757, %v3683
    %v3761 = vmax.f32 %v3760, 0.0
    %vm3762 = vcmask 523264
    %v3763 = vsel %vm3762, %v3686, 0.0
    %v3764 = vrot.slane %v3763, 4
    %v3765 = vadd.f32 %v3763, %v3764
    %v3766 = vrot.slane %v3765, 2
    %v3767 = vadd.f32 %v3765, %v3766
    %v3768 = vrot.slane %v3767, 1
    %v3769 = vadd.f32 %v3767, %v3768
    %v3770 = vrcp.pop 8.0
    %v3771 = vmul.f32 %v3769, %v3770
    %v3773 = vsel %vm3762, %v3771, 0
    %v3776 = vsel %vm3762, %v3761, 0
    %3778 = vmatprep.subr.mxu0 0.0
    %3779 = vmatpush1.xpose.msra.mxu0 %v3776
    %3780 = vmatprep.subr.mxu0 0.0
    %3781 = vmatpush1.xpose.msra.mxu0 0.0
    %3782 = vmatprep.subr.mxu0 0.0
    %3783 = vmatpush1.xpose.msra.mxu0 0.0
    %3784 = vmatprep.subr.mxu0 0.0
    %3785 = vmatpush1.xpose.msra.mxu0 0.0
    %3786 = vmatprep.subr.mxu0 0.0
    %3787 = vmatpush1.xpose.msra.mxu0 0.0
    %3788 = vmatprep.subr.mxu0 0.0
    %3789 = vmatpush1.xpose.msra.mxu0 0.0
    %3790 = vmatprep.subr.mxu0 0.0
    %3791 = vmatpush1.xpose.msra.mxu0 0.0
    %3792 = vmatprep.subr.mxu0 0.0
    %3793 = vmatpush1.xpose.msra.mxu0 0.0
    %3794 = vmatprep.subr.mxu0 0.0
    %3795 = vmatpush1.xpose.msra.mxu0 0.0
    %3796 = vmatprep.subr.mxu0 0.0
    %3797 = vmatpush1.xpose.msra.mxu0 0.0
    %3798 = vmatprep.subr.mxu0 0.0
    %3799 = vmatpush1.xpose.msra.mxu0 0.0
    %3800 = vmatprep.subr.mxu0 0.0
    %3801 = vmatpush1.xpose.msra.mxu0 0.0
    %3802 = vmatprep.subr.mxu0 0.0
    %3803 = vmatpush1.xpose.msra.mxu0 0.0
    %3804 = vmatprep.subr.mxu0 0.0
    %3805 = vmatpush1.xpose.msra.mxu0 0.0
    %3806 = vmatprep.subr.mxu0 0.0
    %3807 = vmatpush1.xpose.msra.mxu0 0.0
    %3808 = vmatprep.subr.mxu0 0.0
    %3809 = vmatpush1.xpose.msra.mxu0 0.0
    %3810 = vmatprep.subr.mxu0 0.0
    %3811 = vmatpush1.xpose.msra.mxu0 0.0
    %3812 = vmatprep.subr.mxu0 0.0
    %3813 = vmatpush1.xpose.msra.mxu0 0.0
    %3814 = vmatprep.subr.mxu0 0.0
    %3815 = vmatpush1.xpose.msra.mxu0 0.0
    %3816 = vmatprep.subr.mxu0 0.0
    %3817 = vmatpush1.xpose.msra.mxu0 0.0
    %3818 = vmatprep.subr.mxu0 0.0
    %3819 = vmatpush1.xpose.msra.mxu0 0.0
    %3820 = vmatprep.subr.mxu0 0.0
    %3821 = vmatpush1.xpose.msra.mxu0 0.0
    %3822 = vmatprep.subr.mxu0 0.0
    %3823 = vmatpush1.xpose.msra.mxu0 0.0
    %3824 = vmatprep.subr.mxu0 0.0
    %3825 = vmatpush1.xpose.msra.mxu0 0.0
    %3826 = vmatprep.subr.mxu0 0.0
    %3827 = vmatpush1.xpose.msra.mxu0 0.0
    %3828 = vmatprep.subr.mxu0 0.0
    %3829 = vmatpush1.xpose.msra.mxu0 0.0
    %3830 = vmatprep.subr.mxu0 0.0
    %3831 = vmatpush1.xpose.msra.mxu0 0.0
    %3832 = vmatprep.subr.mxu0 0.0
    %3833 = vmatpush1.xpose.msra.mxu0 0.0
    %3834 = vmatprep.subr.mxu0 0.0
    %3835 = vmatpush1.xpose.msra.mxu0 0.0
    %3836 = vmatprep.subr.mxu0 0.0
    %3837 = vmatpush1.xpose.msra.mxu0 0.0
    %3838 = vmatprep.subr.mxu0 0.0
    %3839 = vmatpush1.xpose.msra.mxu0 0.0
    %3840 = vmatprep.subr.mxu0 0.0
    %3841 = vmatpush1.xpose.msra.mxu0 0.0
    %3842 = vmatprep.mubr.f32.mxu0 0.0
    %3843 = vmatmul.mubr.f32.gmra.mrb[0].mxu0 %v3773
    %v3844 = vpop.f32.mrb[0].mxu0
    %v3845 = vadd.f32 0.0, %v3844
    %v3846 = vpop.f32.mrb[0].mxu0
    %3847 = vdwg.mxu0
    %vm3848 = vcmask 40960
    %3849 = vst.msk [vmem:[#allocation14] sm:$0x1] %vm3848, %v3845
    // Predicated region
    $region130: #{tpu_custom_call.1} parent=1 // pred_check
      _
    $region131: #{tpu_custom_call.1} parent=1 // pred_check_branch
      %3851 = sbr.rel (0) target = $region133
    $region132: #{tpu_custom_call.1} parent=1 // pred_region
      %s3853 = ssub.s32 16, 16
      %3854 = vsyncadd [#allocation5], %s3853
      %s3856 = sshll.u32 [#allocation14], 4
      %s3857 = int_to_ptr.vmem [resolvable:$true] %s3856
      %3859 = dma.vmem_to_hbm [thread:$0]  %s3857, 16, %s26, [#allocation5]
    $region133: #{tpu_custom_call.1} parent=1 // pred_fallthru
      _
    // Predicated region
    $region134: #{tpu_custom_call.1} parent=1 // pred_check
      _
    $region135: #{tpu_custom_call.1} parent=1 // pred_check_branch
      %3861 = sbr.rel (0) target = $region137
    $region136: #{tpu_custom_call.1} parent=1 // pred_region
      %s3863 = ssub.s32 128, 128
      %3864 = vsyncadd [#allocation16], %s3863
      %s3866 = sshll.u32 [#allocation15], 4
      %s3867 = int_to_ptr.vmem [resolvable:$true] %s3866
      %3869 = dma.vmem_to_hbm [thread:$0]  %s3867, 128, %s27, [#allocation16]
    $region137: #{tpu_custom_call.1} parent=1 // pred_fallthru
      _
    // Predicated region
    $region138: #{tpu_custom_call.1} parent=1 // pred_check
      _
    $region139: #{tpu_custom_call.1} parent=1 // pred_check_branch
      %3871 = sbr.rel (0) target = $region141
    $region140: #{tpu_custom_call.1} parent=1 // pred_region
      %s3873 = ssub.s32 128, 128
      %3874 = vsyncadd [#allocation16], %s3873
      %s3876 = sshll.u32 [#allocation17], 4
      %s3877 = int_to_ptr.vmem [resolvable:$true] %s3876
      %3879 = dma.vmem_to_hbm [thread:$0]  %s3877, 128, %s28, [#allocation16]
    $region141: #{tpu_custom_call.1} parent=1 // pred_fallthru
      _
    // Predicated region
    $region142: #{tpu_custom_call.1} parent=1 // pred_check
      _
    $region143: #{tpu_custom_call.1} parent=1 // pred_check_branch
      %3881 = sbr.rel (0) target = $region145
    $region144: #{tpu_custom_call.1} parent=1 // pred_region
      %3882 = dma.done [#allocation5], 16
    $region145: #{tpu_custom_call.1} parent=1 // pred_fallthru
      _
    // Predicated region
    $region146: #{tpu_custom_call.1} parent=1 // pred_check
      _
    $region147: #{tpu_custom_call.1} parent=1 // pred_check_branch
      %3884 = sbr.rel (0) target = $region149
    $region148: #{tpu_custom_call.1} parent=1 // pred_region
      %3885 = dma.done [#allocation16], 128
    $region149: #{tpu_custom_call.1} parent=1 // pred_fallthru
      _
    // Predicated region
    $region150: #{tpu_custom_call.1} parent=1 // pred_check
      _
    $region151: #{tpu_custom_call.1} parent=1 // pred_check_branch
      %3887 = sbr.rel (0) target = $region153
    $region152: #{tpu_custom_call.1} parent=1 // pred_region
      %3888 = dma.done [#allocation16], 128
    $region153: #{tpu_custom_call.1} parent=1 // pred_fallthru
      _
    %3889 = vsyncpa [#allocation4], 1
    %3890 = vsyncpa [#allocation7], 1
    %3891 = vsyncpa [#allocation10], 1
    %3892 = vsyncpa [#allocation13], 1
    %3893 = vsyncpa [#allocation5], 1
    %3894 = vsyncpa [#allocation16], 1

</llo_original>
